<compile_context>
chip_gen: v6e
topology: v6e:2x2x1
jax: 0.10.0
libtpu: 0.0.40
codegen_flags: <defaults>
</compile_context>

<pallas_src>
import functools

import numpy as np
import jax
import jax.numpy as jnp
from jax import lax
from jax.experimental import pallas as pl
from jax.experimental.pallas import tpu as pltpu

_HAS_BUFFERED = hasattr(pl, "Buffered")


# ----------------------------------------------------------------------------
# In-kernel helpers
# ----------------------------------------------------------------------------
def _recip(x):
    # EUP approx reciprocal + one Newton-Raphson refinement: ~exact accuracy at
    # EUP (not VALU-divide) cost.
    r = pl.reciprocal(x, approx=True)
    return r * (2.0 - x * r)


def _erf(x):
    # Abramowitz & Stegun 7.1.26 rational approximation of erf (|err| < 1.5e-7).
    # TODO(synk): replace with a native erf primitive if/when Mosaic exposes one.
    a1, a2, a3, a4, a5 = 0.254829592, -0.284496736, 1.421413741, -1.453152027, 1.061405429
    p = 0.3275911
    sgn = jnp.where(x >= 0.0, 1.0, -1.0)
    ax = jnp.abs(x)
    t = _recip(1.0 + p * ax)
    poly = ((((a5 * t + a4) * t + a3) * t + a2) * t + a1) * t
    return sgn * (1.0 - poly * jnp.exp(-ax * ax))


def _gelu_exact(x):
    # matches torch.nn.GELU() (approximate='none'):  0.5*x*(1+erf(x/sqrt(2)))
    return 0.5 * x * (1.0 + _erf(x * 0.7071067811865476))


def _layer_norm(h, w, b, eps=1e-5):
    mu = jnp.mean(h, axis=-1, keepdims=True)
    var = jnp.mean((h - mu) ** 2, axis=-1, keepdims=True)
    return (h - mu) * lax.rsqrt(var + eps) * w + b


# ----------------------------------------------------------------------------
# Pallas kernel: one ResidualAttentionBlock on one batch element
# ----------------------------------------------------------------------------
def _resblock_kernel(*refs, n_head, causal, has_mask):
    o_ref = refs[-1]
    if has_mask:
        x_ref, mask_ref = refs[0], refs[1]
        w = refs[2:-1]
    else:
        x_ref, mask_ref = refs[0], None
        w = refs[1:-1]
    (ln1w_ref, ln1b_ref,
     wq_ref, bq_ref, wk_ref, bk_ref, wv_ref, bv_ref,
     wo_ref, bo_ref,
     ln2w_ref, ln2b_ref,
     wfc_ref, bfc_ref, wpr_ref, bpr_ref) = w

    f32 = jnp.float32
    x = x_ref[...].astype(f32)                           # (L, D)  (batch dim squeezed)
    L, D = x.shape
    dh = D // n_head
    cdt = wq_ref.dtype                                   # matmul-input dtype (bf16)

    # additive attention bias, built once and reused by every head
    if causal:
        row = lax.broadcasted_iota(jnp.int32, (L, L), 0)
        col = lax.broadcasted_iota(jnp.int32, (L, L), 1)
        bias = jnp.where(col <= row, 0.0, float("-inf")).astype(f32)
    elif has_mask:
        bias = mask_ref[...].astype(f32)
    else:
        bias = None

    # ---- attention branch -------------------------------------------------
    h = _layer_norm(x, ln1w_ref[...], ln1b_ref[...])     # fp32 (L, D)
    hc = h.astype(cdt)

    # lane-dense, full-K projections (scale already folded into Wq/bq)
    q2 = jnp.dot(hc, wq_ref[...], preferred_element_type=f32) + bq_ref[...]
    k2 = jnp.dot(hc, wk_ref[...], preferred_element_type=f32) + bk_ref[...]
    v2 = jnp.dot(hc, wv_ref[...], preferred_element_type=f32) + bv_ref[...]

    # per-head attention (static unroll): live fp32 score slab is (L, L)
    o_heads = []
    for hd in range(n_head):
        lo, hi = hd * dh, (hd + 1) * dh
        qh = q2[:, lo:hi].astype(cdt)
        kh = k2[:, lo:hi].astype(cdt)
        vh = v2[:, lo:hi].astype(cdt)
        s = lax.dot_general(qh, kh, (((1,), (1,)), ((), ())),
                            preferred_element_type=f32)          # (L, L)
        if bias is not None:
            s = s + bias
        s = s - jnp.max(s, axis=-1, keepdims=True)
        p = jnp.exp(s)
        denom = jnp.sum(p, axis=-1, keepdims=True)
        oh = jnp.dot(p.astype(cdt), vh, preferred_element_type=f32)  # (L, dh)
        o_heads.append(oh * _recip(denom))

    # single full-K output projection on the lane-dense concat of head outputs
    o2 = jnp.concatenate(o_heads, axis=-1).astype(cdt)              # (L, D)
    attn = jnp.dot(o2, wo_ref[...], preferred_element_type=f32) + bo_ref[...]
    x = x + attn

    # ---- MLP branch --------------------------------------------------------
    h2 = _layer_norm(x, ln2w_ref[...], ln2b_ref[...])
    u = jnp.dot(h2.astype(cdt), wfc_ref[...], preferred_element_type=f32) + bfc_ref[...]
    u = _gelu_exact(u)
    y = jnp.dot(u.astype(cdt), wpr_ref[...], preferred_element_type=f32) + bpr_ref[...]
    x = x + y

    o_ref[...] = x.astype(o_ref.dtype)


# ----------------------------------------------------------------------------
# Wrapper: one pallas_call per residual block, grid over batch
# ----------------------------------------------------------------------------
def _whole_spec(a, single_buffer):
    nd = a.ndim
    idx_map = lambda n, _nd=nd: (0,) * _nd
    if single_buffer and _HAS_BUFFERED:
        # Constant index map over the grid -> fetched once; single-buffer it so
        # the weights are not allocated twice in VMEM.
        return pl.BlockSpec(a.shape, idx_map, pipeline_mode=pl.Buffered(1))
    return pl.BlockSpec(a.shape, idx_map)


def _vmem_limit_bytes(headroom=16 << 20):
    """Generation-aware scoped-VMEM limit: physical capacity minus headroom."""
    cap = 64 << 20
    try:
        cap = int(pltpu.get_tpu_info().vmem_capacity_bytes)
    except Exception:
        pass
    return int(max(32 << 20, min(cap - headroom, 112 << 20)))


def _residual_block_apply(x_nld, attn_mask, p, n_head, causal, vmem_limit):
    N, L, D = x_nld.shape
    has_mask = (attn_mask is not None) and (not causal)
    kernel = functools.partial(_resblock_kernel, n_head=n_head,
                               causal=causal, has_mask=has_mask)

    weights = (p['ln1_w'], p['ln1_b'],
               p['wq'], p['bq'], p['wk'], p['bk'], p['wv'], p['bv'],
               p['wo'], p['bo'],
               p['ln2_w'], p['ln2_b'],
               p['wfc'], p['bfc'], p['wpr'], p['bpr'])
    operands = (x_nld,) + ((attn_mask,) if has_mask else ()) + weights

    def build(single_buffer):
        in_specs = [pl.BlockSpec((None, L, D), lambda n: (n, 0, 0))]   # x, batch squeezed
        in_specs += [_whole_spec(a, single_buffer) for a in operands[1:]]
        return pl.pallas_call(
            kernel,
            out_shape=jax.ShapeDtypeStruct((N, L, D), x_nld.dtype),
            grid=(N,),
            in_specs=in_specs,
            out_specs=pl.BlockSpec((None, L, D), lambda n: (n, 0, 0)),
            compiler_params=pltpu.CompilerParams(
                dimension_semantics=("parallel",),
                vmem_limit_bytes=vmem_limit),
        )

    try:
        return build(_HAS_BUFFERED)(*operands)
    except Exception:
        if not _HAS_BUFFERED:
            raise
        # pl.Buffered(1) not supported by this Pallas build -> default buffering.
        return build(False)(*operands)


def transformer_forward(x_lnd, packed_params, n_head, attn_mask=None, causal=False):
    """x_lnd: (L, N, D) — PyTorch MultiheadAttention (seq-first) layout.

    If causal=True the additive causal mask is generated in-kernel (no mask
    operand is DMA'd); otherwise attn_mask (or None) matches the torch module.
    """
    x = jnp.transpose(x_lnd, (1, 0, 2))          # (N, L, D)
    vmem_limit = _vmem_limit_bytes()
    for p in packed_params:
        x = _residual_block_apply(x, attn_mask, p, n_head, causal, vmem_limit)
    return jnp.transpose(x, (1, 0, 2))           # back to (L, N, D)


# ----------------------------------------------------------------------------
# Parameter init (torch-like raw shapes) + packing for the kernel
# ----------------------------------------------------------------------------
def init_params(key, width, layers):
    D, H4 = width, 4 * width
    params = []
    for _ in range(layers):
        key, *ks = jax.random.split(key, 13)
        params.append(dict(
            in_proj_w=0.02 * jax.random.normal(ks[0], (3 * D, D), jnp.float32),
            in_proj_b=0.02 * jax.random.normal(ks[1], (3 * D,), jnp.float32),
            out_w=0.02 * jax.random.normal(ks[2], (D, D), jnp.float32),
            out_b=0.02 * jax.random.normal(ks[3], (D,), jnp.float32),
            fc_w=0.02 * jax.random.normal(ks[4], (H4, D), jnp.float32),
            fc_b=0.02 * jax.random.normal(ks[5], (H4,), jnp.float32),
            pr_w=0.02 * jax.random.normal(ks[6], (D, H4), jnp.float32),
            pr_b=0.02 * jax.random.normal(ks[7], (D,), jnp.float32),
            ln1_w=1.0 + 0.01 * jax.random.normal(ks[8], (D,), jnp.float32),
            ln1_b=0.01 * jax.random.normal(ks[9], (D,), jnp.float32),
            ln2_w=1.0 + 0.01 * jax.random.normal(ks[10], (D,), jnp.float32),
            ln2_b=0.01 * jax.random.normal(ks[11], (D,), jnp.float32),
        ))
    return params


def pack_params(raw_params, n_head, wdtype=jnp.bfloat16):
    """Host-side packing: separate q/k/v/o (D,D) weights (lane-dense, full-K
    matmuls in-kernel), attention scale folded into Wq/bq, bf16 weights,
    fp32 biases / LN params."""
    packed = []
    for p in raw_params:
        D = p['ln1_w'].shape[0]
        dh = D // n_head
        scale = float(dh) ** -0.5
        in_w, in_b = p['in_proj_w'], p['in_proj_b']
        packed.append(dict(
            ln1_w=p['ln1_w'].reshape(1, D), ln1_b=p['ln1_b'].reshape(1, D),
            wq=(in_w[:D] * scale).T.astype(wdtype),
            bq=(in_b[:D] * scale).reshape(1, D).astype(jnp.float32),
            wk=in_w[D:2 * D].T.astype(wdtype),
            bk=in_b[D:2 * D].reshape(1, D).astype(jnp.float32),
            wv=in_w[2 * D:].T.astype(wdtype),
            bv=in_b[2 * D:].reshape(1, D).astype(jnp.float32),
            wo=p['out_w'].T.astype(wdtype),
            bo=p['out_b'].reshape(1, D).astype(jnp.float32),
            ln2_w=p['ln2_w'].reshape(1, D), ln2_b=p['ln2_b'].reshape(1, D),
            wfc=p['fc_w'].T.astype(wdtype),
            bfc=p['fc_b'].reshape(1, 4 * D).astype(jnp.float32),
            wpr=p['pr_w'].T.astype(wdtype),
            bpr=p['pr_b'].reshape(1, D).astype(jnp.float32),
        ))
    return packed


# ----------------------------------------------------------------------------
# Pure-JAX fp32 reference (same math, exact erf GELU) for verification
# ----------------------------------------------------------------------------
def ref_forward(x_lnd, raw_params, mask, n_head):
    L, N, D = x_lnd.shape
    dh = D // n_head
    scale = float(dh) ** -0.5

    def ln(h, w, b):
        mu = jnp.mean(h, -1, keepdims=True)
        var = jnp.mean((h - mu) ** 2, -1, keepdims=True)
        return (h - mu) / jnp.sqrt(var + 1e-5) * w + b

    x = x_lnd
    for p in raw_params:
        h = ln(x, p['ln1_w'], p['ln1_b'])
        qkv = h @ p['in_proj_w'].T + p['in_proj_b']
        q = (qkv[..., :D]).reshape(L, N, n_head, dh) * scale
        k = (qkv[..., D:2 * D]).reshape(L, N, n_head, dh)
        v = (qkv[..., 2 * D:]).reshape(L, N, n_head, dh)
        s = jnp.einsum('lnhd,mnhd->nhlm', q, k)
        if mask is not None:
            s = s + mask
        a = jax.nn.softmax(s, axis=-1)
        o = jnp.einsum('nhlm,mnhd->lnhd', a, v).reshape(L, N, D)
        x = x + (o @ p['out_w'].T + p['out_b'])
        h2 = ln(x, p['ln2_w'], p['ln2_b'])
        u = jax.nn.gelu(h2 @ p['fc_w'].T + p['fc_b'], approximate=False)
        x = x + (u @ p['pr_w'].T + p['pr_b'])
    return x


if __name__ == "__main__":
    width, layers, heads = 32, 2, 4
    L, N = 8, 2

    key = jax.random.PRNGKey(0)
    kx, kp = jax.random.split(key)
    x = jax.random.normal(kx, (L, N, width), jnp.float32)      # (seq, batch, width)
    raw = init_params(kp, width, layers)
    packed = pack_params(raw, heads)

    # CLIP-style causal additive float mask (-inf above the diagonal).
    idx = jnp.arange(L)
    attn_mask = jnp.where(idx[None, :] <= idx[:, None], 0.0, -jnp.inf).astype(jnp.float32)

    ref = ref_forward(x, raw, attn_mask, heads)

    # Path 1: causal mask generated inside the kernel (no mask DMA).
    out_causal = jax.block_until_ready(
        transformer_forward(x, packed, heads, causal=True))
    err1 = float(np.max(np.abs(np.asarray(out_causal) - np.asarray(ref))))
    assert err1 < 3e-3, f"causal path mismatch vs fp32 reference: max abs err = {err1}"

    # Path 2: explicit additive attention mask operand.
    out_mask = jax.block_until_ready(
        transformer_forward(x, packed, heads, attn_mask=attn_mask))
    err2 = float(np.max(np.abs(np.asarray(out_mask) - np.asarray(ref))))
    assert err2 < 3e-3, f"mask path mismatch vs fp32 reference: max abs err = {err2}"

    print("KERNEL_OK")
</pallas_src>

<mosaic_0001>
module attributes {stable_mosaic.version = 11 : i64} {
  func.func @_resblock_kernel(%arg0: i32, %arg1: memref<1x8x32xf32, #tpu.memory_space<vmem>>, %arg2: memref<1x32xf32, #tpu.memory_space<vmem>>, %arg3: memref<1x32xf32, #tpu.memory_space<vmem>>, %arg4: memref<32x32xbf16, #tpu.memory_space<vmem>>, %arg5: memref<1x32xf32, #tpu.memory_space<vmem>>, %arg6: memref<32x32xbf16, #tpu.memory_space<vmem>>, %arg7: memref<1x32xf32, #tpu.memory_space<vmem>>, %arg8: memref<32x32xbf16, #tpu.memory_space<vmem>>, %arg9: memref<1x32xf32, #tpu.memory_space<vmem>>, %arg10: memref<32x32xbf16, #tpu.memory_space<vmem>>, %arg11: memref<1x32xf32, #tpu.memory_space<vmem>>, %arg12: memref<1x32xf32, #tpu.memory_space<vmem>>, %arg13: memref<1x32xf32, #tpu.memory_space<vmem>>, %arg14: memref<32x128xbf16, #tpu.memory_space<vmem>>, %arg15: memref<1x128xf32, #tpu.memory_space<vmem>>, %arg16: memref<128x32xbf16, #tpu.memory_space<vmem>>, %arg17: memref<1x32xf32, #tpu.memory_space<vmem>>, %arg18: memref<1x8x32xf32, #tpu.memory_space<vmem>>) attributes {dimension_semantics = [#tpu.dimension_semantics<parallel>], iteration_bounds = array<i64: 2>, scalar_prefetch = 0 : i64, scratch_operands = 0 : i64, tpu.core_type = #tpu.core_type<tc>, window_params = [{transform_indices = @transform_0, window_bounds = array<i64: 1, 8, 32>}, {pipeline_mode = #tpu.pipeline_mode<synchronous>, transform_indices = @transform_1, window_bounds = array<i64: 1, 32>}, {pipeline_mode = #tpu.pipeline_mode<synchronous>, transform_indices = @transform_2, window_bounds = array<i64: 1, 32>}, {pipeline_mode = #tpu.pipeline_mode<synchronous>, transform_indices = @transform_3, window_bounds = array<i64: 32, 32>}, {pipeline_mode = #tpu.pipeline_mode<synchronous>, transform_indices = @transform_4, window_bounds = array<i64: 1, 32>}, {pipeline_mode = #tpu.pipeline_mode<synchronous>, transform_indices = @transform_5, window_bounds = array<i64: 32, 32>}, {pipeline_mode = #tpu.pipeline_mode<synchronous>, transform_indices = @transform_6, window_bounds = array<i64: 1, 32>}, {pipeline_mode = #tpu.pipeline_mode<synchronous>, transform_indices = @transform_7, window_bounds = array<i64: 32, 32>}, {pipeline_mode = #tpu.pipeline_mode<synchronous>, transform_indices = @transform_8, window_bounds = array<i64: 1, 32>}, {pipeline_mode = #tpu.pipeline_mode<synchronous>, transform_indices = @transform_9, window_bounds = array<i64: 32, 32>}, {pipeline_mode = #tpu.pipeline_mode<synchronous>, transform_indices = @transform_10, window_bounds = array<i64: 1, 32>}, {pipeline_mode = #tpu.pipeline_mode<synchronous>, transform_indices = @transform_11, window_bounds = array<i64: 1, 32>}, {pipeline_mode = #tpu.pipeline_mode<synchronous>, transform_indices = @transform_12, window_bounds = array<i64: 1, 32>}, {pipeline_mode = #tpu.pipeline_mode<synchronous>, transform_indices = @transform_13, window_bounds = array<i64: 32, 128>}, {pipeline_mode = #tpu.pipeline_mode<synchronous>, transform_indices = @transform_14, window_bounds = array<i64: 1, 128>}, {pipeline_mode = #tpu.pipeline_mode<synchronous>, transform_indices = @transform_15, window_bounds = array<i64: 128, 32>}, {pipeline_mode = #tpu.pipeline_mode<synchronous>, transform_indices = @transform_16, window_bounds = array<i64: 1, 32>}, {transform_indices = @transform_17, window_bounds = array<i64: 1, 8, 32>}]} {
    %c0 = arith.constant 0 : index
    %c0_0 = arith.constant 0 : index
    %c0_1 = arith.constant 0 : index
    %0 = vector.load %arg1[%c0, %c0_0, %c0_1] : memref<1x8x32xf32, #tpu.memory_space<vmem>>, vector<1x8x32xf32>
    %1 = vector.shape_cast %0 : vector<1x8x32xf32> to vector<8x32xf32>
    %2 = tpu.iota {dimensions = array<i32: 0>} : vector<8x8xi32>
    %3 = tpu.iota {dimensions = array<i32: 1>} : vector<8x8xi32>
    %4 = arith.cmpi sle, %3, %2 : vector<8x8xi32>
    %cst = arith.constant 0.000000e+00 : f32
    %cst_2 = arith.constant 0xFF800000 : f32
    %5 = vector.broadcast %cst : f32 to vector<8x8xf32>
    %6 = vector.broadcast %cst_2 : f32 to vector<8x8xf32>
    %7 = arith.select %4, %5, %6 : vector<8x8xi1>, vector<8x8xf32>
    %c0_3 = arith.constant 0 : index
    %c0_4 = arith.constant 0 : index
    %8 = vector.load %arg2[%c0_3, %c0_4] : memref<1x32xf32, #tpu.memory_space<vmem>>, vector<1x32xf32>
    %c0_5 = arith.constant 0 : index
    %c0_6 = arith.constant 0 : index
    %9 = vector.load %arg3[%c0_5, %c0_6] : memref<1x32xf32, #tpu.memory_space<vmem>>, vector<1x32xf32>
    %cst_7 = arith.constant dense<0.000000e+00> : vector<8xf32>
    %10 = vector.multi_reduction <add>, %1, %cst_7 [1] : vector<8x32xf32> to vector<8xf32>
    %11 = vector.shape_cast %10 : vector<8xf32> to vector<8x1xf32>
    %cst_8 = arith.constant 3.200000e+01 : f32
    %12 = vector.broadcast %cst_8 : f32 to vector<8x1xf32>
    %13 = arith.divf %11, %12 : vector<8x1xf32>
    %14 = vector.broadcast %13 : vector<8x1xf32> to vector<8x32xf32>
    %15 = arith.subf %1, %14 : vector<8x32xf32>
    %16 = arith.mulf %15, %15 : vector<8x32xf32>
    %cst_9 = arith.constant dense<0.000000e+00> : vector<8xf32>
    %17 = vector.multi_reduction <add>, %16, %cst_9 [1] : vector<8x32xf32> to vector<8xf32>
    %18 = vector.shape_cast %17 : vector<8xf32> to vector<8x1xf32>
    %cst_10 = arith.constant 3.200000e+01 : f32
    %19 = vector.broadcast %cst_10 : f32 to vector<8x1xf32>
    %20 = arith.divf %18, %19 : vector<8x1xf32>
    %21 = vector.broadcast %13 : vector<8x1xf32> to vector<8x32xf32>
    %22 = arith.subf %1, %21 : vector<8x32xf32>
    %cst_11 = arith.constant 9.99999974E-6 : f32
    %23 = vector.broadcast %cst_11 : f32 to vector<8x1xf32>
    %24 = arith.addf %20, %23 : vector<8x1xf32>
    %25 = math.rsqrt %24 : vector<8x1xf32>
    %26 = vector.broadcast %25 : vector<8x1xf32> to vector<8x32xf32>
    %27 = arith.mulf %22, %26 : vector<8x32xf32>
    %28 = vector.broadcast %8 : vector<1x32xf32> to vector<8x32xf32>
    %29 = arith.mulf %27, %28 : vector<8x32xf32>
    %30 = vector.broadcast %9 : vector<1x32xf32> to vector<8x32xf32>
    %31 = arith.addf %29, %30 : vector<8x32xf32>
    %32 = arith.truncf %31 : vector<8x32xf32> to vector<8x32xbf16>
    %c0_12 = arith.constant 0 : index
    %c0_13 = arith.constant 0 : index
    %33 = vector.load %arg4[%c0_12, %c0_13] : memref<32x32xbf16, #tpu.memory_space<vmem>>, vector<32x32xbf16>
    %cst_14 = arith.constant dense<0.000000e+00> : vector<8x32xf32>
    %34 = tpu.matmul %32, %33, %cst_14 {dimension_numbers = #tpu.dot_dimension_numbers<[1], [0], [0], [1], [0, 0, 1, 1], [], []>} : vector<8x32xbf16>, vector<32x32xbf16>, vector<8x32xf32> -> vector<8x32xf32>
    %c0_15 = arith.constant 0 : index
    %c0_16 = arith.constant 0 : index
    %35 = vector.load %arg5[%c0_15, %c0_16] : memref<1x32xf32, #tpu.memory_space<vmem>>, vector<1x32xf32>
    %36 = vector.broadcast %35 : vector<1x32xf32> to vector<8x32xf32>
    %37 = arith.addf %34, %36 : vector<8x32xf32>
    %c0_17 = arith.constant 0 : index
    %c0_18 = arith.constant 0 : index
    %38 = vector.load %arg6[%c0_17, %c0_18] : memref<32x32xbf16, #tpu.memory_space<vmem>>, vector<32x32xbf16>
    %cst_19 = arith.constant dense<0.000000e+00> : vector<8x32xf32>
    %39 = tpu.matmul %32, %38, %cst_19 {dimension_numbers = #tpu.dot_dimension_numbers<[1], [0], [0], [1], [0, 0, 1, 1], [], []>} : vector<8x32xbf16>, vector<32x32xbf16>, vector<8x32xf32> -> vector<8x32xf32>
    %c0_20 = arith.constant 0 : index
    %c0_21 = arith.constant 0 : index
    %40 = vector.load %arg7[%c0_20, %c0_21] : memref<1x32xf32, #tpu.memory_space<vmem>>, vector<1x32xf32>
    %41 = vector.broadcast %40 : vector<1x32xf32> to vector<8x32xf32>
    %42 = arith.addf %39, %41 : vector<8x32xf32>
    %c0_22 = arith.constant 0 : index
    %c0_23 = arith.constant 0 : index
    %43 = vector.load %arg8[%c0_22, %c0_23] : memref<32x32xbf16, #tpu.memory_space<vmem>>, vector<32x32xbf16>
    %cst_24 = arith.constant dense<0.000000e+00> : vector<8x32xf32>
    %44 = tpu.matmul %32, %43, %cst_24 {dimension_numbers = #tpu.dot_dimension_numbers<[1], [0], [0], [1], [0, 0, 1, 1], [], []>} : vector<8x32xbf16>, vector<32x32xbf16>, vector<8x32xf32> -> vector<8x32xf32>
    %c0_25 = arith.constant 0 : index
    %c0_26 = arith.constant 0 : index
    %45 = vector.load %arg9[%c0_25, %c0_26] : memref<1x32xf32, #tpu.memory_space<vmem>>, vector<1x32xf32>
    %46 = vector.broadcast %45 : vector<1x32xf32> to vector<8x32xf32>
    %47 = arith.addf %44, %46 : vector<8x32xf32>
    %48 = vector.extract_strided_slice %37 {offsets = [0, 0], sizes = [8, 8], strides = [1, 1]} : vector<8x32xf32> to vector<8x8xf32>
    %49 = arith.truncf %48 : vector<8x8xf32> to vector<8x8xbf16>
    %50 = vector.extract_strided_slice %42 {offsets = [0, 0], sizes = [8, 8], strides = [1, 1]} : vector<8x32xf32> to vector<8x8xf32>
    %51 = arith.truncf %50 : vector<8x8xf32> to vector<8x8xbf16>
    %52 = vector.extract_strided_slice %47 {offsets = [0, 0], sizes = [8, 8], strides = [1, 1]} : vector<8x32xf32> to vector<8x8xf32>
    %53 = arith.truncf %52 : vector<8x8xf32> to vector<8x8xbf16>
    %cst_27 = arith.constant dense<0.000000e+00> : vector<8x8xf32>
    %54 = tpu.matmul %49, %51, %cst_27 {dimension_numbers = #tpu.dot_dimension_numbers<[1], [1], [0], [0], [0, 0, 1, 0], [], []>} : vector<8x8xbf16>, vector<8x8xbf16>, vector<8x8xf32> -> vector<8x8xf32>
    %55 = arith.addf %54, %7 : vector<8x8xf32>
    %cst_28 = arith.constant dense<0xFF800000> : vector<8xf32>
    %56 = vector.multi_reduction <maximumf>, %55, %cst_28 [1] : vector<8x8xf32> to vector<8xf32>
    %57 = vector.shape_cast %56 : vector<8xf32> to vector<8x1xf32>
    %58 = vector.broadcast %57 : vector<8x1xf32> to vector<8x8xf32>
    %59 = arith.subf %55, %58 : vector<8x8xf32>
    %60 = math.exp %59 : vector<8x8xf32>
    %cst_29 = arith.constant dense<0.000000e+00> : vector<8xf32>
    %61 = vector.multi_reduction <add>, %60, %cst_29 [1] : vector<8x8xf32> to vector<8xf32>
    %62 = vector.shape_cast %61 : vector<8xf32> to vector<8x1xf32>
    %63 = arith.truncf %60 : vector<8x8xf32> to vector<8x8xbf16>
    %cst_30 = arith.constant dense<0.000000e+00> : vector<8x8xf32>
    %64 = tpu.matmul %63, %53, %cst_30 {dimension_numbers = #tpu.dot_dimension_numbers<[1], [0], [0], [1], [0, 0, 1, 1], [], []>} : vector<8x8xbf16>, vector<8x8xbf16>, vector<8x8xf32> -> vector<8x8xf32>
    %65 = tpu.reciprocal %62 {approx = true} : vector<8x1xf32> -> vector<8x1xf32>
    %66 = arith.mulf %62, %65 : vector<8x1xf32>
    %cst_31 = arith.constant 2.000000e+00 : f32
    %67 = vector.broadcast %cst_31 : f32 to vector<8x1xf32>
    %68 = arith.subf %67, %66 : vector<8x1xf32>
    %69 = arith.mulf %65, %68 : vector<8x1xf32>
    %70 = vector.broadcast %69 : vector<8x1xf32> to vector<8x8xf32>
    %71 = arith.mulf %64, %70 : vector<8x8xf32>
    %72 = vector.extract_strided_slice %37 {offsets = [0, 8], sizes = [8, 8], strides = [1, 1]} : vector<8x32xf32> to vector<8x8xf32>
    %73 = arith.truncf %72 : vector<8x8xf32> to vector<8x8xbf16>
    %74 = vector.extract_strided_slice %42 {offsets = [0, 8], sizes = [8, 8], strides = [1, 1]} : vector<8x32xf32> to vector<8x8xf32>
    %75 = arith.truncf %74 : vector<8x8xf32> to vector<8x8xbf16>
    %76 = vector.extract_strided_slice %47 {offsets = [0, 8], sizes = [8, 8], strides = [1, 1]} : vector<8x32xf32> to vector<8x8xf32>
    %77 = arith.truncf %76 : vector<8x8xf32> to vector<8x8xbf16>
    %cst_32 = arith.constant dense<0.000000e+00> : vector<8x8xf32>
    %78 = tpu.matmul %73, %75, %cst_32 {dimension_numbers = #tpu.dot_dimension_numbers<[1], [1], [0], [0], [0, 0, 1, 0], [], []>} : vector<8x8xbf16>, vector<8x8xbf16>, vector<8x8xf32> -> vector<8x8xf32>
    %79 = arith.addf %78, %7 : vector<8x8xf32>
    %cst_33 = arith.constant dense<0xFF800000> : vector<8xf32>
    %80 = vector.multi_reduction <maximumf>, %79, %cst_33 [1] : vector<8x8xf32> to vector<8xf32>
    %81 = vector.shape_cast %80 : vector<8xf32> to vector<8x1xf32>
    %82 = vector.broadcast %81 : vector<8x1xf32> to vector<8x8xf32>
    %83 = arith.subf %79, %82 : vector<8x8xf32>
    %84 = math.exp %83 : vector<8x8xf32>
    %cst_34 = arith.constant dense<0.000000e+00> : vector<8xf32>
    %85 = vector.multi_reduction <add>, %84, %cst_34 [1] : vector<8x8xf32> to vector<8xf32>
    %86 = vector.shape_cast %85 : vector<8xf32> to vector<8x1xf32>
    %87 = arith.truncf %84 : vector<8x8xf32> to vector<8x8xbf16>
    %cst_35 = arith.constant dense<0.000000e+00> : vector<8x8xf32>
    %88 = tpu.matmul %87, %77, %cst_35 {dimension_numbers = #tpu.dot_dimension_numbers<[1], [0], [0], [1], [0, 0, 1, 1], [], []>} : vector<8x8xbf16>, vector<8x8xbf16>, vector<8x8xf32> -> vector<8x8xf32>
    %89 = tpu.reciprocal %86 {approx = true} : vector<8x1xf32> -> vector<8x1xf32>
    %90 = arith.mulf %86, %89 : vector<8x1xf32>
    %cst_36 = arith.constant 2.000000e+00 : f32
    %91 = vector.broadcast %cst_36 : f32 to vector<8x1xf32>
    %92 = arith.subf %91, %90 : vector<8x1xf32>
    %93 = arith.mulf %89, %92 : vector<8x1xf32>
    %94 = vector.broadcast %93 : vector<8x1xf32> to vector<8x8xf32>
    %95 = arith.mulf %88, %94 : vector<8x8xf32>
    %96 = vector.extract_strided_slice %37 {offsets = [0, 16], sizes = [8, 8], strides = [1, 1]} : vector<8x32xf32> to vector<8x8xf32>
    %97 = arith.truncf %96 : vector<8x8xf32> to vector<8x8xbf16>
    %98 = vector.extract_strided_slice %42 {offsets = [0, 16], sizes = [8, 8], strides = [1, 1]} : vector<8x32xf32> to vector<8x8xf32>
    %99 = arith.truncf %98 : vector<8x8xf32> to vector<8x8xbf16>
    %100 = vector.extract_strided_slice %47 {offsets = [0, 16], sizes = [8, 8], strides = [1, 1]} : vector<8x32xf32> to vector<8x8xf32>
    %101 = arith.truncf %100 : vector<8x8xf32> to vector<8x8xbf16>
    %cst_37 = arith.constant dense<0.000000e+00> : vector<8x8xf32>
    %102 = tpu.matmul %97, %99, %cst_37 {dimension_numbers = #tpu.dot_dimension_numbers<[1], [1], [0], [0], [0, 0, 1, 0], [], []>} : vector<8x8xbf16>, vector<8x8xbf16>, vector<8x8xf32> -> vector<8x8xf32>
    %103 = arith.addf %102, %7 : vector<8x8xf32>
    %cst_38 = arith.constant dense<0xFF800000> : vector<8xf32>
    %104 = vector.multi_reduction <maximumf>, %103, %cst_38 [1] : vector<8x8xf32> to vector<8xf32>
    %105 = vector.shape_cast %104 : vector<8xf32> to vector<8x1xf32>
    %106 = vector.broadcast %105 : vector<8x1xf32> to vector<8x8xf32>
    %107 = arith.subf %103, %106 : vector<8x8xf32>
    %108 = math.exp %107 : vector<8x8xf32>
    %cst_39 = arith.constant dense<0.000000e+00> : vector<8xf32>
    %109 = vector.multi_reduction <add>, %108, %cst_39 [1] : vector<8x8xf32> to vector<8xf32>
    %110 = vector.shape_cast %109 : vector<8xf32> to vector<8x1xf32>
    %111 = arith.truncf %108 : vector<8x8xf32> to vector<8x8xbf16>
    %cst_40 = arith.constant dense<0.000000e+00> : vector<8x8xf32>
    %112 = tpu.matmul %111, %101, %cst_40 {dimension_numbers = #tpu.dot_dimension_numbers<[1], [0], [0], [1], [0, 0, 1, 1], [], []>} : vector<8x8xbf16>, vector<8x8xbf16>, vector<8x8xf32> -> vector<8x8xf32>
    %113 = tpu.reciprocal %110 {approx = true} : vector<8x1xf32> -> vector<8x1xf32>
    %114 = arith.mulf %110, %113 : vector<8x1xf32>
    %cst_41 = arith.constant 2.000000e+00 : f32
    %115 = vector.broadcast %cst_41 : f32 to vector<8x1xf32>
    %116 = arith.subf %115, %114 : vector<8x1xf32>
    %117 = arith.mulf %113, %116 : vector<8x1xf32>
    %118 = vector.broadcast %117 : vector<8x1xf32> to vector<8x8xf32>
    %119 = arith.mulf %112, %118 : vector<8x8xf32>
    %120 = vector.extract_strided_slice %37 {offsets = [0, 24], sizes = [8, 8], strides = [1, 1]} : vector<8x32xf32> to vector<8x8xf32>
    %121 = arith.truncf %120 : vector<8x8xf32> to vector<8x8xbf16>
    %122 = vector.extract_strided_slice %42 {offsets = [0, 24], sizes = [8, 8], strides = [1, 1]} : vector<8x32xf32> to vector<8x8xf32>
    %123 = arith.truncf %122 : vector<8x8xf32> to vector<8x8xbf16>
    %124 = vector.extract_strided_slice %47 {offsets = [0, 24], sizes = [8, 8], strides = [1, 1]} : vector<8x32xf32> to vector<8x8xf32>
    %125 = arith.truncf %124 : vector<8x8xf32> to vector<8x8xbf16>
    %cst_42 = arith.constant dense<0.000000e+00> : vector<8x8xf32>
    %126 = tpu.matmul %121, %123, %cst_42 {dimension_numbers = #tpu.dot_dimension_numbers<[1], [1], [0], [0], [0, 0, 1, 0], [], []>} : vector<8x8xbf16>, vector<8x8xbf16>, vector<8x8xf32> -> vector<8x8xf32>
    %127 = arith.addf %126, %7 : vector<8x8xf32>
    %cst_43 = arith.constant dense<0xFF800000> : vector<8xf32>
    %128 = vector.multi_reduction <maximumf>, %127, %cst_43 [1] : vector<8x8xf32> to vector<8xf32>
    %129 = vector.shape_cast %128 : vector<8xf32> to vector<8x1xf32>
    %130 = vector.broadcast %129 : vector<8x1xf32> to vector<8x8xf32>
    %131 = arith.subf %127, %130 : vector<8x8xf32>
    %132 = math.exp %131 : vector<8x8xf32>
    %cst_44 = arith.constant dense<0.000000e+00> : vector<8xf32>
    %133 = vector.multi_reduction <add>, %132, %cst_44 [1] : vector<8x8xf32> to vector<8xf32>
    %134 = vector.shape_cast %133 : vector<8xf32> to vector<8x1xf32>
    %135 = arith.truncf %132 : vector<8x8xf32> to vector<8x8xbf16>
    %cst_45 = arith.constant dense<0.000000e+00> : vector<8x8xf32>
    %136 = tpu.matmul %135, %125, %cst_45 {dimension_numbers = #tpu.dot_dimension_numbers<[1], [0], [0], [1], [0, 0, 1, 1], [], []>} : vector<8x8xbf16>, vector<8x8xbf16>, vector<8x8xf32> -> vector<8x8xf32>
    %137 = tpu.reciprocal %134 {approx = true} : vector<8x1xf32> -> vector<8x1xf32>
    %138 = arith.mulf %134, %137 : vector<8x1xf32>
    %cst_46 = arith.constant 2.000000e+00 : f32
    %139 = vector.broadcast %cst_46 : f32 to vector<8x1xf32>
    %140 = arith.subf %139, %138 : vector<8x1xf32>
    %141 = arith.mulf %137, %140 : vector<8x1xf32>
    %142 = vector.broadcast %141 : vector<8x1xf32> to vector<8x8xf32>
    %143 = arith.mulf %136, %142 : vector<8x8xf32>
    %144 = tpu.concatenate %71, %95, %119, %143 in 1 : vector<8x8xf32>, vector<8x8xf32>, vector<8x8xf32>, vector<8x8xf32> -> vector<8x32xf32>
    %145 = arith.truncf %144 : vector<8x32xf32> to vector<8x32xbf16>
    %c0_47 = arith.constant 0 : index
    %c0_48 = arith.constant 0 : index
    %146 = vector.load %arg10[%c0_47, %c0_48] : memref<32x32xbf16, #tpu.memory_space<vmem>>, vector<32x32xbf16>
    %cst_49 = arith.constant dense<0.000000e+00> : vector<8x32xf32>
    %147 = tpu.matmul %145, %146, %cst_49 {dimension_numbers = #tpu.dot_dimension_numbers<[1], [0], [0], [1], [0, 0, 1, 1], [], []>} : vector<8x32xbf16>, vector<32x32xbf16>, vector<8x32xf32> -> vector<8x32xf32>
    %c0_50 = arith.constant 0 : index
    %c0_51 = arith.constant 0 : index
    %148 = vector.load %arg11[%c0_50, %c0_51] : memref<1x32xf32, #tpu.memory_space<vmem>>, vector<1x32xf32>
    %149 = vector.broadcast %148 : vector<1x32xf32> to vector<8x32xf32>
    %150 = arith.addf %147, %149 : vector<8x32xf32>
    %151 = arith.addf %1, %150 : vector<8x32xf32>
    %c0_52 = arith.constant 0 : index
    %c0_53 = arith.constant 0 : index
    %152 = vector.load %arg12[%c0_52, %c0_53] : memref<1x32xf32, #tpu.memory_space<vmem>>, vector<1x32xf32>
    %c0_54 = arith.constant 0 : index
    %c0_55 = arith.constant 0 : index
    %153 = vector.load %arg13[%c0_54, %c0_55] : memref<1x32xf32, #tpu.memory_space<vmem>>, vector<1x32xf32>
    %cst_56 = arith.constant dense<0.000000e+00> : vector<8xf32>
    %154 = vector.multi_reduction <add>, %151, %cst_56 [1] : vector<8x32xf32> to vector<8xf32>
    %155 = vector.shape_cast %154 : vector<8xf32> to vector<8x1xf32>
    %cst_57 = arith.constant 3.200000e+01 : f32
    %156 = vector.broadcast %cst_57 : f32 to vector<8x1xf32>
    %157 = arith.divf %155, %156 : vector<8x1xf32>
    %158 = vector.broadcast %157 : vector<8x1xf32> to vector<8x32xf32>
    %159 = arith.subf %151, %158 : vector<8x32xf32>
    %160 = arith.mulf %159, %159 : vector<8x32xf32>
    %cst_58 = arith.constant dense<0.000000e+00> : vector<8xf32>
    %161 = vector.multi_reduction <add>, %160, %cst_58 [1] : vector<8x32xf32> to vector<8xf32>
    %162 = vector.shape_cast %161 : vector<8xf32> to vector<8x1xf32>
    %cst_59 = arith.constant 3.200000e+01 : f32
    %163 = vector.broadcast %cst_59 : f32 to vector<8x1xf32>
    %164 = arith.divf %162, %163 : vector<8x1xf32>
    %165 = vector.broadcast %157 : vector<8x1xf32> to vector<8x32xf32>
    %166 = arith.subf %151, %165 : vector<8x32xf32>
    %cst_60 = arith.constant 9.99999974E-6 : f32
    %167 = vector.broadcast %cst_60 : f32 to vector<8x1xf32>
    %168 = arith.addf %164, %167 : vector<8x1xf32>
    %169 = math.rsqrt %168 : vector<8x1xf32>
    %170 = vector.broadcast %169 : vector<8x1xf32> to vector<8x32xf32>
    %171 = arith.mulf %166, %170 : vector<8x32xf32>
    %172 = vector.broadcast %152 : vector<1x32xf32> to vector<8x32xf32>
    %173 = arith.mulf %171, %172 : vector<8x32xf32>
    %174 = vector.broadcast %153 : vector<1x32xf32> to vector<8x32xf32>
    %175 = arith.addf %173, %174 : vector<8x32xf32>
    %176 = arith.truncf %175 : vector<8x32xf32> to vector<8x32xbf16>
    %c0_61 = arith.constant 0 : index
    %c0_62 = arith.constant 0 : index
    %177 = vector.load %arg14[%c0_61, %c0_62] : memref<32x128xbf16, #tpu.memory_space<vmem>>, vector<32x128xbf16>
    %cst_63 = arith.constant dense<0.000000e+00> : vector<8x128xf32>
    %178 = tpu.matmul %176, %177, %cst_63 {dimension_numbers = #tpu.dot_dimension_numbers<[1], [0], [0], [1], [0, 0, 1, 1], [], []>} : vector<8x32xbf16>, vector<32x128xbf16>, vector<8x128xf32> -> vector<8x128xf32>
    %c0_64 = arith.constant 0 : index
    %c0_65 = arith.constant 0 : index
    %179 = vector.load %arg15[%c0_64, %c0_65] : memref<1x128xf32, #tpu.memory_space<vmem>>, vector<1x128xf32>
    %180 = vector.broadcast %179 : vector<1x128xf32> to vector<8x128xf32>
    %181 = arith.addf %178, %180 : vector<8x128xf32>
    %cst_66 = arith.constant 5.000000e-01 : f32
    %182 = vector.broadcast %cst_66 : f32 to vector<8x128xf32>
    %183 = arith.mulf %182, %181 : vector<8x128xf32>
    %cst_67 = arith.constant 0.707106769 : f32
    %184 = vector.broadcast %cst_67 : f32 to vector<8x128xf32>
    %185 = arith.mulf %181, %184 : vector<8x128xf32>
    %cst_68 = arith.constant 0.000000e+00 : f32
    %186 = vector.broadcast %cst_68 : f32 to vector<8x128xf32>
    %187 = arith.cmpf oge, %185, %186 : vector<8x128xf32>
    %cst_69 = arith.constant 1.000000e+00 : f32
    %cst_70 = arith.constant -1.000000e+00 : f32
    %188 = vector.broadcast %cst_69 : f32 to vector<8x128xf32>
    %189 = vector.broadcast %cst_70 : f32 to vector<8x128xf32>
    %190 = arith.select %187, %188, %189 : vector<8x128xi1>, vector<8x128xf32>
    %191 = math.absf %185 : vector<8x128xf32>
    %cst_71 = arith.constant 0.327591091 : f32
    %192 = vector.broadcast %cst_71 : f32 to vector<8x128xf32>
    %193 = arith.mulf %192, %191 : vector<8x128xf32>
    %cst_72 = arith.constant 1.000000e+00 : f32
    %194 = vector.broadcast %cst_72 : f32 to vector<8x128xf32>
    %195 = arith.addf %194, %193 : vector<8x128xf32>
    %196 = tpu.reciprocal %195 {approx = true} : vector<8x128xf32> -> vector<8x128xf32>
    %197 = arith.mulf %195, %196 : vector<8x128xf32>
    %cst_73 = arith.constant 2.000000e+00 : f32
    %198 = vector.broadcast %cst_73 : f32 to vector<8x128xf32>
    %199 = arith.subf %198, %197 : vector<8x128xf32>
    %200 = arith.mulf %196, %199 : vector<8x128xf32>
    %cst_74 = arith.constant 1.06140542 : f32
    %201 = vector.broadcast %cst_74 : f32 to vector<8x128xf32>
    %202 = arith.mulf %201, %200 : vector<8x128xf32>
    %cst_75 = arith.constant -1.45315206 : f32
    %203 = vector.broadcast %cst_75 : f32 to vector<8x128xf32>
    %204 = arith.addf %202, %203 : vector<8x128xf32>
    %205 = arith.mulf %204, %200 : vector<8x128xf32>
    %cst_76 = arith.constant 1.42141378 : f32
    %206 = vector.broadcast %cst_76 : f32 to vector<8x128xf32>
    %207 = arith.addf %205, %206 : vector<8x128xf32>
    %208 = arith.mulf %207, %200 : vector<8x128xf32>
    %cst_77 = arith.constant -0.284496725 : f32
    %209 = vector.broadcast %cst_77 : f32 to vector<8x128xf32>
    %210 = arith.addf %208, %209 : vector<8x128xf32>
    %211 = arith.mulf %210, %200 : vector<8x128xf32>
    %cst_78 = arith.constant 0.254829586 : f32
    %212 = vector.broadcast %cst_78 : f32 to vector<8x128xf32>
    %213 = arith.addf %211, %212 : vector<8x128xf32>
    %214 = arith.mulf %213, %200 : vector<8x128xf32>
    %cst_79 = arith.constant 0.000000e+00 : f32
    %215 = vector.broadcast %cst_79 : f32 to vector<8x128xf32>
    %216 = arith.subf %215, %191 : vector<8x128xf32>
    %217 = arith.mulf %216, %191 : vector<8x128xf32>
    %218 = math.exp %217 : vector<8x128xf32>
    %219 = arith.mulf %214, %218 : vector<8x128xf32>
    %cst_80 = arith.constant 1.000000e+00 : f32
    %220 = vector.broadcast %cst_80 : f32 to vector<8x128xf32>
    %221 = arith.subf %220, %219 : vector<8x128xf32>
    %222 = arith.mulf %190, %221 : vector<8x128xf32>
    %cst_81 = arith.constant 1.000000e+00 : f32
    %223 = vector.broadcast %cst_81 : f32 to vector<8x128xf32>
    %224 = arith.addf %223, %222 : vector<8x128xf32>
    %225 = arith.mulf %183, %224 : vector<8x128xf32>
    %226 = arith.truncf %225 : vector<8x128xf32> to vector<8x128xbf16>
    %c0_82 = arith.constant 0 : index
    %c0_83 = arith.constant 0 : index
    %227 = vector.load %arg16[%c0_82, %c0_83] : memref<128x32xbf16, #tpu.memory_space<vmem>>, vector<128x32xbf16>
    %cst_84 = arith.constant dense<0.000000e+00> : vector<8x32xf32>
    %228 = tpu.matmul %226, %227, %cst_84 {dimension_numbers = #tpu.dot_dimension_numbers<[1], [0], [0], [1], [0, 0, 1, 1], [], []>} : vector<8x128xbf16>, vector<128x32xbf16>, vector<8x32xf32> -> vector<8x32xf32>
    %c0_85 = arith.constant 0 : index
    %c0_86 = arith.constant 0 : index
    %229 = vector.load %arg17[%c0_85, %c0_86] : memref<1x32xf32, #tpu.memory_space<vmem>>, vector<1x32xf32>
    %230 = vector.broadcast %229 : vector<1x32xf32> to vector<8x32xf32>
    %231 = arith.addf %228, %230 : vector<8x32xf32>
    %232 = arith.addf %151, %231 : vector<8x32xf32>
    %c0_87 = arith.constant 0 : index
    %c0_88 = arith.constant 0 : index
    %c0_89 = arith.constant 0 : index
    %233 = vector.load %arg18[%c0_87, %c0_88, %c0_89] : memref<1x8x32xf32, #tpu.memory_space<vmem>>, vector<1x8x32xf32>
    %234 = vector.shape_cast %233 : vector<1x8x32xf32> to vector<8x32xf32>
    %235 = vector.shape_cast %232 : vector<8x32xf32> to vector<1x8x32xf32>
    tpu.vector_store %arg18[%c0_87, %c0_88, %c0_89], %235 {strides = array<i32>} : memref<1x8x32xf32, #tpu.memory_space<vmem>>, vector<1x8x32xf32>,
    return
  }
  func.func @transform_0(%arg0: i32) -> (i32, i32, i32) {
    %c0_i32 = arith.constant 0 : i32
    %c0_i32_0 = arith.constant 0 : i32
    %c0_i32_1 = arith.constant 0 : i32
    return %arg0, %c0_i32, %c0_i32_0 : i32, i32, i32
  }
  func.func @transform_1(%arg0: i32) -> (i32, i32) {
    %c0_i32 = arith.constant 0 : i32
    %c0_i32_0 = arith.constant 0 : i32
    %c0_i32_1 = arith.constant 0 : i32
    return %c0_i32, %c0_i32_0 : i32, i32
  }
  func.func @transform_2(%arg0: i32) -> (i32, i32) {
    %c0_i32 = arith.constant 0 : i32
    %c0_i32_0 = arith.constant 0 : i32
    %c0_i32_1 = arith.constant 0 : i32
    return %c0_i32, %c0_i32_0 : i32, i32
  }
  func.func @transform_3(%arg0: i32) -> (i32, i32) {
    %c0_i32 = arith.constant 0 : i32
    %c0_i32_0 = arith.constant 0 : i32
    %c0_i32_1 = arith.constant 0 : i32
    return %c0_i32, %c0_i32_0 : i32, i32
  }
  func.func @transform_4(%arg0: i32) -> (i32, i32) {
    %c0_i32 = arith.constant 0 : i32
    %c0_i32_0 = arith.constant 0 : i32
    %c0_i32_1 = arith.constant 0 : i32
    return %c0_i32, %c0_i32_0 : i32, i32
  }
  func.func @transform_5(%arg0: i32) -> (i32, i32) {
    %c0_i32 = arith.constant 0 : i32
    %c0_i32_0 = arith.constant 0 : i32
    %c0_i32_1 = arith.constant 0 : i32
    return %c0_i32, %c0_i32_0 : i32, i32
  }
  func.func @transform_6(%arg0: i32) -> (i32, i32) {
    %c0_i32 = arith.constant 0 : i32
    %c0_i32_0 = arith.constant 0 : i32
    %c0_i32_1 = arith.constant 0 : i32
    return %c0_i32, %c0_i32_0 : i32, i32
  }
  func.func @transform_7(%arg0: i32) -> (i32, i32) {
    %c0_i32 = arith.constant 0 : i32
    %c0_i32_0 = arith.constant 0 : i32
    %c0_i32_1 = arith.constant 0 : i32
    return %c0_i32, %c0_i32_0 : i32, i32
  }
  func.func @transform_8(%arg0: i32) -> (i32, i32) {
    %c0_i32 = arith.constant 0 : i32
    %c0_i32_0 = arith.constant 0 : i32
    %c0_i32_1 = arith.constant 0 : i32
    return %c0_i32, %c0_i32_0 : i32, i32
  }
  func.func @transform_9(%arg0: i32) -> (i32, i32) {
    %c0_i32 = arith.constant 0 : i32
    %c0_i32_0 = arith.constant 0 : i32
    %c0_i32_1 = arith.constant 0 : i32
    return %c0_i32, %c0_i32_0 : i32, i32
  }
  func.func @transform_10(%arg0: i32) -> (i32, i32) {
    %c0_i32 = arith.constant 0 : i32
    %c0_i32_0 = arith.constant 0 : i32
    %c0_i32_1 = arith.constant 0 : i32
    return %c0_i32, %c0_i32_0 : i32, i32
  }
  func.func @transform_11(%arg0: i32) -> (i32, i32) {
    %c0_i32 = arith.constant 0 : i32
    %c0_i32_0 = arith.constant 0 : i32
    %c0_i32_1 = arith.constant 0 : i32
    return %c0_i32, %c0_i32_0 : i32, i32
  }
  func.func @transform_12(%arg0: i32) -> (i32, i32) {
    %c0_i32 = arith.constant 0 : i32
    %c0_i32_0 = arith.constant 0 : i32
    %c0_i32_1 = arith.constant 0 : i32
    return %c0_i32, %c0_i32_0 : i32, i32
  }
  func.func @transform_13(%arg0: i32) -> (i32, i32) {
    %c0_i32 = arith.constant 0 : i32
    %c0_i32_0 = arith.constant 0 : i32
    %c0_i32_1 = arith.constant 0 : i32
    return %c0_i32, %c0_i32_0 : i32, i32
  }
  func.func @transform_14(%arg0: i32) -> (i32, i32) {
    %c0_i32 = arith.constant 0 : i32
    %c0_i32_0 = arith.constant 0 : i32
    %c0_i32_1 = arith.constant 0 : i32
    return %c0_i32, %c0_i32_0 : i32, i32
  }
  func.func @transform_15(%arg0: i32) -> (i32, i32) {
    %c0_i32 = arith.constant 0 : i32
    %c0_i32_0 = arith.constant 0 : i32
    %c0_i32_1 = arith.constant 0 : i32
    return %c0_i32, %c0_i32_0 : i32, i32
  }
  func.func @transform_16(%arg0: i32) -> (i32, i32) {
    %c0_i32 = arith.constant 0 : i32
    %c0_i32_0 = arith.constant 0 : i32
    %c0_i32_1 = arith.constant 0 : i32
    return %c0_i32, %c0_i32_0 : i32, i32
  }
  func.func @transform_17(%arg0: i32) -> (i32, i32, i32) {
    %c0_i32 = arith.constant 0 : i32
    %c0_i32_0 = arith.constant 0 : i32
    %c0_i32_1 = arith.constant 0 : i32
    return %arg0, %c0_i32, %c0_i32_0 : i32, i32, i32
  }
}

module attributes {stable_mosaic.version = 11 : i64} {
  func.func @_resblock_kernel(%arg0: i32, %arg1: memref<1x8x32xf32, #tpu.memory_space<vmem>>, %arg2: memref<1x32xf32, #tpu.memory_space<vmem>>, %arg3: memref<1x32xf32, #tpu.memory_space<vmem>>, %arg4: memref<32x32xbf16, #tpu.memory_space<vmem>>, %arg5: memref<1x32xf32, #tpu.memory_space<vmem>>, %arg6: memref<32x32xbf16, #tpu.memory_space<vmem>>, %arg7: memref<1x32xf32, #tpu.memory_space<vmem>>, %arg8: memref<32x32xbf16, #tpu.memory_space<vmem>>, %arg9: memref<1x32xf32, #tpu.memory_space<vmem>>, %arg10: memref<32x32xbf16, #tpu.memory_space<vmem>>, %arg11: memref<1x32xf32, #tpu.memory_space<vmem>>, %arg12: memref<1x32xf32, #tpu.memory_space<vmem>>, %arg13: memref<1x32xf32, #tpu.memory_space<vmem>>, %arg14: memref<32x128xbf16, #tpu.memory_space<vmem>>, %arg15: memref<1x128xf32, #tpu.memory_space<vmem>>, %arg16: memref<128x32xbf16, #tpu.memory_space<vmem>>, %arg17: memref<1x32xf32, #tpu.memory_space<vmem>>, %arg18: memref<1x8x32xf32, #tpu.memory_space<vmem>>) attributes {dimension_semantics = [#tpu.dimension_semantics<parallel>], iteration_bounds = array<i64: 2>, scalar_prefetch = 0 : i64, scratch_operands = 0 : i64, tpu.core_type = #tpu.core_type<tc>, window_params = [{transform_indices = @transform_0, window_bounds = array<i64: 1, 8, 32>}, {pipeline_mode = #tpu.pipeline_mode<synchronous>, transform_indices = @transform_1, window_bounds = array<i64: 1, 32>}, {pipeline_mode = #tpu.pipeline_mode<synchronous>, transform_indices = @transform_2, window_bounds = array<i64: 1, 32>}, {pipeline_mode = #tpu.pipeline_mode<synchronous>, transform_indices = @transform_3, window_bounds = array<i64: 32, 32>}, {pipeline_mode = #tpu.pipeline_mode<synchronous>, transform_indices = @transform_4, window_bounds = array<i64: 1, 32>}, {pipeline_mode = #tpu.pipeline_mode<synchronous>, transform_indices = @transform_5, window_bounds = array<i64: 32, 32>}, {pipeline_mode = #tpu.pipeline_mode<synchronous>, transform_indices = @transform_6, window_bounds = array<i64: 1, 32>}, {pipeline_mode = #tpu.pipeline_mode<synchronous>, transform_indices = @transform_7, window_bounds = array<i64: 32, 32>}, {pipeline_mode = #tpu.pipeline_mode<synchronous>, transform_indices = @transform_8, window_bounds = array<i64: 1, 32>}, {pipeline_mode = #tpu.pipeline_mode<synchronous>, transform_indices = @transform_9, window_bounds = array<i64: 32, 32>}, {pipeline_mode = #tpu.pipeline_mode<synchronous>, transform_indices = @transform_10, window_bounds = array<i64: 1, 32>}, {pipeline_mode = #tpu.pipeline_mode<synchronous>, transform_indices = @transform_11, window_bounds = array<i64: 1, 32>}, {pipeline_mode = #tpu.pipeline_mode<synchronous>, transform_indices = @transform_12, window_bounds = array<i64: 1, 32>}, {pipeline_mode = #tpu.pipeline_mode<synchronous>, transform_indices = @transform_13, window_bounds = array<i64: 32, 128>}, {pipeline_mode = #tpu.pipeline_mode<synchronous>, transform_indices = @transform_14, window_bounds = array<i64: 1, 128>}, {pipeline_mode = #tpu.pipeline_mode<synchronous>, transform_indices = @transform_15, window_bounds = array<i64: 128, 32>}, {pipeline_mode = #tpu.pipeline_mode<synchronous>, transform_indices = @transform_16, window_bounds = array<i64: 1, 32>}, {transform_indices = @transform_17, window_bounds = array<i64: 1, 8, 32>}]} {
    %c0 = arith.constant 0 : index
    %c0_0 = arith.constant 0 : index
    %c0_1 = arith.constant 0 : index
    %0 = vector.load %arg1[%c0, %c0_0, %c0_1] : memref<1x8x32xf32, #tpu.memory_space<vmem>>, vector<1x8x32xf32>
    %1 = vector.shape_cast %0 : vector<1x8x32xf32> to vector<8x32xf32>
    %2 = tpu.iota {dimensions = array<i32: 0>} : vector<8x8xi32>
    %3 = tpu.iota {dimensions = array<i32: 1>} : vector<8x8xi32>
    %4 = arith.cmpi sle, %3, %2 : vector<8x8xi32>
    %cst = arith.constant 0.000000e+00 : f32
    %cst_2 = arith.constant 0xFF800000 : f32
    %5 = vector.broadcast %cst : f32 to vector<8x8xf32>
    %6 = vector.broadcast %cst_2 : f32 to vector<8x8xf32>
    %7 = arith.select %4, %5, %6 : vector<8x8xi1>, vector<8x8xf32>
    %c0_3 = arith.constant 0 : index
    %c0_4 = arith.constant 0 : index
    %8 = vector.load %arg2[%c0_3, %c0_4] : memref<1x32xf32, #tpu.memory_space<vmem>>, vector<1x32xf32>
    %c0_5 = arith.constant 0 : index
    %c0_6 = arith.constant 0 : index
    %9 = vector.load %arg3[%c0_5, %c0_6] : memref<1x32xf32, #tpu.memory_space<vmem>>, vector<1x32xf32>
    %cst_7 = arith.constant dense<0.000000e+00> : vector<8xf32>
    %10 = vector.multi_reduction <add>, %1, %cst_7 [1] : vector<8x32xf32> to vector<8xf32>
    %11 = vector.shape_cast %10 : vector<8xf32> to vector<8x1xf32>
    %cst_8 = arith.constant 3.200000e+01 : f32
    %12 = vector.broadcast %cst_8 : f32 to vector<8x1xf32>
    %13 = arith.divf %11, %12 : vector<8x1xf32>
    %14 = vector.broadcast %13 : vector<8x1xf32> to vector<8x32xf32>
    %15 = arith.subf %1, %14 : vector<8x32xf32>
    %16 = arith.mulf %15, %15 : vector<8x32xf32>
    %cst_9 = arith.constant dense<0.000000e+00> : vector<8xf32>
    %17 = vector.multi_reduction <add>, %16, %cst_9 [1] : vector<8x32xf32> to vector<8xf32>
    %18 = vector.shape_cast %17 : vector<8xf32> to vector<8x1xf32>
    %cst_10 = arith.constant 3.200000e+01 : f32
    %19 = vector.broadcast %cst_10 : f32 to vector<8x1xf32>
    %20 = arith.divf %18, %19 : vector<8x1xf32>
    %21 = vector.broadcast %13 : vector<8x1xf32> to vector<8x32xf32>
    %22 = arith.subf %1, %21 : vector<8x32xf32>
    %cst_11 = arith.constant 9.99999974E-6 : f32
    %23 = vector.broadcast %cst_11 : f32 to vector<8x1xf32>
    %24 = arith.addf %20, %23 : vector<8x1xf32>
    %25 = math.rsqrt %24 : vector<8x1xf32>
    %26 = vector.broadcast %25 : vector<8x1xf32> to vector<8x32xf32>
    %27 = arith.mulf %22, %26 : vector<8x32xf32>
    %28 = vector.broadcast %8 : vector<1x32xf32> to vector<8x32xf32>
    %29 = arith.mulf %27, %28 : vector<8x32xf32>
    %30 = vector.broadcast %9 : vector<1x32xf32> to vector<8x32xf32>
    %31 = arith.addf %29, %30 : vector<8x32xf32>
    %32 = arith.truncf %31 : vector<8x32xf32> to vector<8x32xbf16>
    %c0_12 = arith.constant 0 : index
    %c0_13 = arith.constant 0 : index
    %33 = vector.load %arg4[%c0_12, %c0_13] : memref<32x32xbf16, #tpu.memory_space<vmem>>, vector<32x32xbf16>
    %cst_14 = arith.constant dense<0.000000e+00> : vector<8x32xf32>
    %34 = tpu.matmul %32, %33, %cst_14 {dimension_numbers = #tpu.dot_dimension_numbers<[1], [0], [0], [1], [0, 0, 1, 1], [], []>} : vector<8x32xbf16>, vector<32x32xbf16>, vector<8x32xf32> -> vector<8x32xf32>
    %c0_15 = arith.constant 0 : index
    %c0_16 = arith.constant 0 : index
    %35 = vector.load %arg5[%c0_15, %c0_16] : memref<1x32xf32, #tpu.memory_space<vmem>>, vector<1x32xf32>
    %36 = vector.broadcast %35 : vector<1x32xf32> to vector<8x32xf32>
    %37 = arith.addf %34, %36 : vector<8x32xf32>
    %c0_17 = arith.constant 0 : index
    %c0_18 = arith.constant 0 : index
    %38 = vector.load %arg6[%c0_17, %c0_18] : memref<32x32xbf16, #tpu.memory_space<vmem>>, vector<32x32xbf16>
    %cst_19 = arith.constant dense<0.000000e+00> : vector<8x32xf32>
    %39 = tpu.matmul %32, %38, %cst_19 {dimension_numbers = #tpu.dot_dimension_numbers<[1], [0], [0], [1], [0, 0, 1, 1], [], []>} : vector<8x32xbf16>, vector<32x32xbf16>, vector<8x32xf32> -> vector<8x32xf32>
    %c0_20 = arith.constant 0 : index
    %c0_21 = arith.constant 0 : index
    %40 = vector.load %arg7[%c0_20, %c0_21] : memref<1x32xf32, #tpu.memory_space<vmem>>, vector<1x32xf32>
    %41 = vector.broadcast %40 : vector<1x32xf32> to vector<8x32xf32>
    %42 = arith.addf %39, %41 : vector<8x32xf32>
    %c0_22 = arith.constant 0 : index
    %c0_23 = arith.constant 0 : index
    %43 = vector.load %arg8[%c0_22, %c0_23] : memref<32x32xbf16, #tpu.memory_space<vmem>>, vector<32x32xbf16>
    %cst_24 = arith.constant dense<0.000000e+00> : vector<8x32xf32>
    %44 = tpu.matmul %32, %43, %cst_24 {dimension_numbers = #tpu.dot_dimension_numbers<[1], [0], [0], [1], [0, 0, 1, 1], [], []>} : vector<8x32xbf16>, vector<32x32xbf16>, vector<8x32xf32> -> vector<8x32xf32>
    %c0_25 = arith.constant 0 : index
    %c0_26 = arith.constant 0 : index
    %45 = vector.load %arg9[%c0_25, %c0_26] : memref<1x32xf32, #tpu.memory_space<vmem>>, vector<1x32xf32>
    %46 = vector.broadcast %45 : vector<1x32xf32> to vector<8x32xf32>
    %47 = arith.addf %44, %46 : vector<8x32xf32>
    %48 = vector.extract_strided_slice %37 {offsets = [0, 0], sizes = [8, 8], strides = [1, 1]} : vector<8x32xf32> to vector<8x8xf32>
    %49 = arith.truncf %48 : vector<8x8xf32> to vector<8x8xbf16>
    %50 = vector.extract_strided_slice %42 {offsets = [0, 0], sizes = [8, 8], strides = [1, 1]} : vector<8x32xf32> to vector<8x8xf32>
    %51 = arith.truncf %50 : vector<8x8xf32> to vector<8x8xbf16>
    %52 = vector.extract_strided_slice %47 {offsets = [0, 0], sizes = [8, 8], strides = [1, 1]} : vector<8x32xf32> to vector<8x8xf32>
    %53 = arith.truncf %52 : vector<8x8xf32> to vector<8x8xbf16>
    %cst_27 = arith.constant dense<0.000000e+00> : vector<8x8xf32>
    %54 = tpu.matmul %49, %51, %cst_27 {dimension_numbers = #tpu.dot_dimension_numbers<[1], [1], [0], [0], [0, 0, 1, 0], [], []>} : vector<8x8xbf16>, vector<8x8xbf16>, vector<8x8xf32> -> vector<8x8xf32>
    %55 = arith.addf %54, %7 : vector<8x8xf32>
    %cst_28 = arith.constant dense<0xFF800000> : vector<8xf32>
    %56 = vector.multi_reduction <maximumf>, %55, %cst_28 [1] : vector<8x8xf32> to vector<8xf32>
    %57 = vector.shape_cast %56 : vector<8xf32> to vector<8x1xf32>
    %58 = vector.broadcast %57 : vector<8x1xf32> to vector<8x8xf32>
    %59 = arith.subf %55, %58 : vector<8x8xf32>
    %60 = math.exp %59 : vector<8x8xf32>
    %cst_29 = arith.constant dense<0.000000e+00> : vector<8xf32>
    %61 = vector.multi_reduction <add>, %60, %cst_29 [1] : vector<8x8xf32> to vector<8xf32>
    %62 = vector.shape_cast %61 : vector<8xf32> to vector<8x1xf32>
    %63 = arith.truncf %60 : vector<8x8xf32> to vector<8x8xbf16>
    %cst_30 = arith.constant dense<0.000000e+00> : vector<8x8xf32>
    %64 = tpu.matmul %63, %53, %cst_30 {dimension_numbers = #tpu.dot_dimension_numbers<[1], [0], [0], [1], [0, 0, 1, 1], [], []>} : vector<8x8xbf16>, vector<8x8xbf16>, vector<8x8xf32> -> vector<8x8xf32>
    %65 = tpu.reciprocal %62 {approx = true} : vector<8x1xf32> -> vector<8x1xf32>
    %66 = arith.mulf %62, %65 : vector<8x1xf32>
    %cst_31 = arith.constant 2.000000e+00 : f32
    %67 = vector.broadcast %cst_31 : f32 to vector<8x1xf32>
    %68 = arith.subf %67, %66 : vector<8x1xf32>
    %69 = arith.mulf %65, %68 : vector<8x1xf32>
    %70 = vector.broadcast %69 : vector<8x1xf32> to vector<8x8xf32>
    %71 = arith.mulf %64, %70 : vector<8x8xf32>
    %72 = vector.extract_strided_slice %37 {offsets = [0, 8], sizes = [8, 8], strides = [1, 1]} : vector<8x32xf32> to vector<8x8xf32>
    %73 = arith.truncf %72 : vector<8x8xf32> to vector<8x8xbf16>
    %74 = vector.extract_strided_slice %42 {offsets = [0, 8], sizes = [8, 8], strides = [1, 1]} : vector<8x32xf32> to vector<8x8xf32>
    %75 = arith.truncf %74 : vector<8x8xf32> to vector<8x8xbf16>
    %76 = vector.extract_strided_slice %47 {offsets = [0, 8], sizes = [8, 8], strides = [1, 1]} : vector<8x32xf32> to vector<8x8xf32>
    %77 = arith.truncf %76 : vector<8x8xf32> to vector<8x8xbf16>
    %cst_32 = arith.constant dense<0.000000e+00> : vector<8x8xf32>
    %78 = tpu.matmul %73, %75, %cst_32 {dimension_numbers = #tpu.dot_dimension_numbers<[1], [1], [0], [0], [0, 0, 1, 0], [], []>} : vector<8x8xbf16>, vector<8x8xbf16>, vector<8x8xf32> -> vector<8x8xf32>
    %79 = arith.addf %78, %7 : vector<8x8xf32>
    %cst_33 = arith.constant dense<0xFF800000> : vector<8xf32>
    %80 = vector.multi_reduction <maximumf>, %79, %cst_33 [1] : vector<8x8xf32> to vector<8xf32>
    %81 = vector.shape_cast %80 : vector<8xf32> to vector<8x1xf32>
    %82 = vector.broadcast %81 : vector<8x1xf32> to vector<8x8xf32>
    %83 = arith.subf %79, %82 : vector<8x8xf32>
    %84 = math.exp %83 : vector<8x8xf32>
    %cst_34 = arith.constant dense<0.000000e+00> : vector<8xf32>
    %85 = vector.multi_reduction <add>, %84, %cst_34 [1] : vector<8x8xf32> to vector<8xf32>
    %86 = vector.shape_cast %85 : vector<8xf32> to vector<8x1xf32>
    %87 = arith.truncf %84 : vector<8x8xf32> to vector<8x8xbf16>
    %cst_35 = arith.constant dense<0.000000e+00> : vector<8x8xf32>
    %88 = tpu.matmul %87, %77, %cst_35 {dimension_numbers = #tpu.dot_dimension_numbers<[1], [0], [0], [1], [0, 0, 1, 1], [], []>} : vector<8x8xbf16>, vector<8x8xbf16>, vector<8x8xf32> -> vector<8x8xf32>
    %89 = tpu.reciprocal %86 {approx = true} : vector<8x1xf32> -> vector<8x1xf32>
    %90 = arith.mulf %86, %89 : vector<8x1xf32>
    %cst_36 = arith.constant 2.000000e+00 : f32
    %91 = vector.broadcast %cst_36 : f32 to vector<8x1xf32>
    %92 = arith.subf %91, %90 : vector<8x1xf32>
    %93 = arith.mulf %89, %92 : vector<8x1xf32>
    %94 = vector.broadcast %93 : vector<8x1xf32> to vector<8x8xf32>
    %95 = arith.mulf %88, %94 : vector<8x8xf32>
    %96 = vector.extract_strided_slice %37 {offsets = [0, 16], sizes = [8, 8], strides = [1, 1]} : vector<8x32xf32> to vector<8x8xf32>
    %97 = arith.truncf %96 : vector<8x8xf32> to vector<8x8xbf16>
    %98 = vector.extract_strided_slice %42 {offsets = [0, 16], sizes = [8, 8], strides = [1, 1]} : vector<8x32xf32> to vector<8x8xf32>
    %99 = arith.truncf %98 : vector<8x8xf32> to vector<8x8xbf16>
    %100 = vector.extract_strided_slice %47 {offsets = [0, 16], sizes = [8, 8], strides = [1, 1]} : vector<8x32xf32> to vector<8x8xf32>
    %101 = arith.truncf %100 : vector<8x8xf32> to vector<8x8xbf16>
    %cst_37 = arith.constant dense<0.000000e+00> : vector<8x8xf32>
    %102 = tpu.matmul %97, %99, %cst_37 {dimension_numbers = #tpu.dot_dimension_numbers<[1], [1], [0], [0], [0, 0, 1, 0], [], []>} : vector<8x8xbf16>, vector<8x8xbf16>, vector<8x8xf32> -> vector<8x8xf32>
    %103 = arith.addf %102, %7 : vector<8x8xf32>
    %cst_38 = arith.constant dense<0xFF800000> : vector<8xf32>
    %104 = vector.multi_reduction <maximumf>, %103, %cst_38 [1] : vector<8x8xf32> to vector<8xf32>
    %105 = vector.shape_cast %104 : vector<8xf32> to vector<8x1xf32>
    %106 = vector.broadcast %105 : vector<8x1xf32> to vector<8x8xf32>
    %107 = arith.subf %103, %106 : vector<8x8xf32>
    %108 = math.exp %107 : vector<8x8xf32>
    %cst_39 = arith.constant dense<0.000000e+00> : vector<8xf32>
    %109 = vector.multi_reduction <add>, %108, %cst_39 [1] : vector<8x8xf32> to vector<8xf32>
    %110 = vector.shape_cast %109 : vector<8xf32> to vector<8x1xf32>
    %111 = arith.truncf %108 : vector<8x8xf32> to vector<8x8xbf16>
    %cst_40 = arith.constant dense<0.000000e+00> : vector<8x8xf32>
    %112 = tpu.matmul %111, %101, %cst_40 {dimension_numbers = #tpu.dot_dimension_numbers<[1], [0], [0], [1], [0, 0, 1, 1], [], []>} : vector<8x8xbf16>, vector<8x8xbf16>, vector<8x8xf32> -> vector<8x8xf32>
    %113 = tpu.reciprocal %110 {approx = true} : vector<8x1xf32> -> vector<8x1xf32>
    %114 = arith.mulf %110, %113 : vector<8x1xf32>
    %cst_41 = arith.constant 2.000000e+00 : f32
    %115 = vector.broadcast %cst_41 : f32 to vector<8x1xf32>
    %116 = arith.subf %115, %114 : vector<8x1xf32>
    %117 = arith.mulf %113, %116 : vector<8x1xf32>
    %118 = vector.broadcast %117 : vector<8x1xf32> to vector<8x8xf32>
    %119 = arith.mulf %112, %118 : vector<8x8xf32>
    %120 = vector.extract_strided_slice %37 {offsets = [0, 24], sizes = [8, 8], strides = [1, 1]} : vector<8x32xf32> to vector<8x8xf32>
    %121 = arith.truncf %120 : vector<8x8xf32> to vector<8x8xbf16>
    %122 = vector.extract_strided_slice %42 {offsets = [0, 24], sizes = [8, 8], strides = [1, 1]} : vector<8x32xf32> to vector<8x8xf32>
    %123 = arith.truncf %122 : vector<8x8xf32> to vector<8x8xbf16>
    %124 = vector.extract_strided_slice %47 {offsets = [0, 24], sizes = [8, 8], strides = [1, 1]} : vector<8x32xf32> to vector<8x8xf32>
    %125 = arith.truncf %124 : vector<8x8xf32> to vector<8x8xbf16>
    %cst_42 = arith.constant dense<0.000000e+00> : vector<8x8xf32>
    %126 = tpu.matmul %121, %123, %cst_42 {dimension_numbers = #tpu.dot_dimension_numbers<[1], [1], [0], [0], [0, 0, 1, 0], [], []>} : vector<8x8xbf16>, vector<8x8xbf16>, vector<8x8xf32> -> vector<8x8xf32>
    %127 = arith.addf %126, %7 : vector<8x8xf32>
    %cst_43 = arith.constant dense<0xFF800000> : vector<8xf32>
    %128 = vector.multi_reduction <maximumf>, %127, %cst_43 [1] : vector<8x8xf32> to vector<8xf32>
    %129 = vector.shape_cast %128 : vector<8xf32> to vector<8x1xf32>
    %130 = vector.broadcast %129 : vector<8x1xf32> to vector<8x8xf32>
    %131 = arith.subf %127, %130 : vector<8x8xf32>
    %132 = math.exp %131 : vector<8x8xf32>
    %cst_44 = arith.constant dense<0.000000e+00> : vector<8xf32>
    %133 = vector.multi_reduction <add>, %132, %cst_44 [1] : vector<8x8xf32> to vector<8xf32>
    %134 = vector.shape_cast %133 : vector<8xf32> to vector<8x1xf32>
    %135 = arith.truncf %132 : vector<8x8xf32> to vector<8x8xbf16>
    %cst_45 = arith.constant dense<0.000000e+00> : vector<8x8xf32>
    %136 = tpu.matmul %135, %125, %cst_45 {dimension_numbers = #tpu.dot_dimension_numbers<[1], [0], [0], [1], [0, 0, 1, 1], [], []>} : vector<8x8xbf16>, vector<8x8xbf16>, vector<8x8xf32> -> vector<8x8xf32>
    %137 = tpu.reciprocal %134 {approx = true} : vector<8x1xf32> -> vector<8x1xf32>
    %138 = arith.mulf %134, %137 : vector<8x1xf32>
    %cst_46 = arith.constant 2.000000e+00 : f32
    %139 = vector.broadcast %cst_46 : f32 to vector<8x1xf32>
    %140 = arith.subf %139, %138 : vector<8x1xf32>
    %141 = arith.mulf %137, %140 : vector<8x1xf32>
    %142 = vector.broadcast %141 : vector<8x1xf32> to vector<8x8xf32>
    %143 = arith.mulf %136, %142 : vector<8x8xf32>
    %144 = tpu.concatenate %71, %95, %119, %143 in 1 : vector<8x8xf32>, vector<8x8xf32>, vector<8x8xf32>, vector<8x8xf32> -> vector<8x32xf32>
    %145 = arith.truncf %144 : vector<8x32xf32> to vector<8x32xbf16>
    %c0_47 = arith.constant 0 : index
    %c0_48 = arith.constant 0 : index
    %146 = vector.load %arg10[%c0_47, %c0_48] : memref<32x32xbf16, #tpu.memory_space<vmem>>, vector<32x32xbf16>
    %cst_49 = arith.constant dense<0.000000e+00> : vector<8x32xf32>
    %147 = tpu.matmul %145, %146, %cst_49 {dimension_numbers = #tpu.dot_dimension_numbers<[1], [0], [0], [1], [0, 0, 1, 1], [], []>} : vector<8x32xbf16>, vector<32x32xbf16>, vector<8x32xf32> -> vector<8x32xf32>
    %c0_50 = arith.constant 0 : index
    %c0_51 = arith.constant 0 : index
    %148 = vector.load %arg11[%c0_50, %c0_51] : memref<1x32xf32, #tpu.memory_space<vmem>>, vector<1x32xf32>
    %149 = vector.broadcast %148 : vector<1x32xf32> to vector<8x32xf32>
    %150 = arith.addf %147, %149 : vector<8x32xf32>
    %151 = arith.addf %1, %150 : vector<8x32xf32>
    %c0_52 = arith.constant 0 : index
    %c0_53 = arith.constant 0 : index
    %152 = vector.load %arg12[%c0_52, %c0_53] : memref<1x32xf32, #tpu.memory_space<vmem>>, vector<1x32xf32>
    %c0_54 = arith.constant 0 : index
    %c0_55 = arith.constant 0 : index
    %153 = vector.load %arg13[%c0_54, %c0_55] : memref<1x32xf32, #tpu.memory_space<vmem>>, vector<1x32xf32>
    %cst_56 = arith.constant dense<0.000000e+00> : vector<8xf32>
    %154 = vector.multi_reduction <add>, %151, %cst_56 [1] : vector<8x32xf32> to vector<8xf32>
    %155 = vector.shape_cast %154 : vector<8xf32> to vector<8x1xf32>
    %cst_57 = arith.constant 3.200000e+01 : f32
    %156 = vector.broadcast %cst_57 : f32 to vector<8x1xf32>
    %157 = arith.divf %155, %156 : vector<8x1xf32>
    %158 = vector.broadcast %157 : vector<8x1xf32> to vector<8x32xf32>
    %159 = arith.subf %151, %158 : vector<8x32xf32>
    %160 = arith.mulf %159, %159 : vector<8x32xf32>
    %cst_58 = arith.constant dense<0.000000e+00> : vector<8xf32>
    %161 = vector.multi_reduction <add>, %160, %cst_58 [1] : vector<8x32xf32> to vector<8xf32>
    %162 = vector.shape_cast %161 : vector<8xf32> to vector<8x1xf32>
    %cst_59 = arith.constant 3.200000e+01 : f32
    %163 = vector.broadcast %cst_59 : f32 to vector<8x1xf32>
    %164 = arith.divf %162, %163 : vector<8x1xf32>
    %165 = vector.broadcast %157 : vector<8x1xf32> to vector<8x32xf32>
    %166 = arith.subf %151, %165 : vector<8x32xf32>
    %cst_60 = arith.constant 9.99999974E-6 : f32
    %167 = vector.broadcast %cst_60 : f32 to vector<8x1xf32>
    %168 = arith.addf %164, %167 : vector<8x1xf32>
    %169 = math.rsqrt %168 : vector<8x1xf32>
    %170 = vector.broadcast %169 : vector<8x1xf32> to vector<8x32xf32>
    %171 = arith.mulf %166, %170 : vector<8x32xf32>
    %172 = vector.broadcast %152 : vector<1x32xf32> to vector<8x32xf32>
    %173 = arith.mulf %171, %172 : vector<8x32xf32>
    %174 = vector.broadcast %153 : vector<1x32xf32> to vector<8x32xf32>
    %175 = arith.addf %173, %174 : vector<8x32xf32>
    %176 = arith.truncf %175 : vector<8x32xf32> to vector<8x32xbf16>
    %c0_61 = arith.constant 0 : index
    %c0_62 = arith.constant 0 : index
    %177 = vector.load %arg14[%c0_61, %c0_62] : memref<32x128xbf16, #tpu.memory_space<vmem>>, vector<32x128xbf16>
    %cst_63 = arith.constant dense<0.000000e+00> : vector<8x128xf32>
    %178 = tpu.matmul %176, %177, %cst_63 {dimension_numbers = #tpu.dot_dimension_numbers<[1], [0], [0], [1], [0, 0, 1, 1], [], []>} : vector<8x32xbf16>, vector<32x128xbf16>, vector<8x128xf32> -> vector<8x128xf32>
    %c0_64 = arith.constant 0 : index
    %c0_65 = arith.constant 0 : index
    %179 = vector.load %arg15[%c0_64, %c0_65] : memref<1x128xf32, #tpu.memory_space<vmem>>, vector<1x128xf32>
    %180 = vector.broadcast %179 : vector<1x128xf32> to vector<8x128xf32>
    %181 = arith.addf %178, %180 : vector<8x128xf32>
    %cst_66 = arith.constant 5.000000e-01 : f32
    %182 = vector.broadcast %cst_66 : f32 to vector<8x128xf32>
    %183 = arith.mulf %182, %181 : vector<8x128xf32>
    %cst_67 = arith.constant 0.707106769 : f32
    %184 = vector.broadcast %cst_67 : f32 to vector<8x128xf32>
    %185 = arith.mulf %181, %184 : vector<8x128xf32>
    %cst_68 = arith.constant 0.000000e+00 : f32
    %186 = vector.broadcast %cst_68 : f32 to vector<8x128xf32>
    %187 = arith.cmpf oge, %185, %186 : vector<8x128xf32>
    %cst_69 = arith.constant 1.000000e+00 : f32
    %cst_70 = arith.constant -1.000000e+00 : f32
    %188 = vector.broadcast %cst_69 : f32 to vector<8x128xf32>
    %189 = vector.broadcast %cst_70 : f32 to vector<8x128xf32>
    %190 = arith.select %187, %188, %189 : vector<8x128xi1>, vector<8x128xf32>
    %191 = math.absf %185 : vector<8x128xf32>
    %cst_71 = arith.constant 0.327591091 : f32
    %192 = vector.broadcast %cst_71 : f32 to vector<8x128xf32>
    %193 = arith.mulf %192, %191 : vector<8x128xf32>
    %cst_72 = arith.constant 1.000000e+00 : f32
    %194 = vector.broadcast %cst_72 : f32 to vector<8x128xf32>
    %195 = arith.addf %194, %193 : vector<8x128xf32>
    %196 = tpu.reciprocal %195 {approx = true} : vector<8x128xf32> -> vector<8x128xf32>
    %197 = arith.mulf %195, %196 : vector<8x128xf32>
    %cst_73 = arith.constant 2.000000e+00 : f32
    %198 = vector.broadcast %cst_73 : f32 to vector<8x128xf32>
    %199 = arith.subf %198, %197 : vector<8x128xf32>
    %200 = arith.mulf %196, %199 : vector<8x128xf32>
    %cst_74 = arith.constant 1.06140542 : f32
    %201 = vector.broadcast %cst_74 : f32 to vector<8x128xf32>
    %202 = arith.mulf %201, %200 : vector<8x128xf32>
    %cst_75 = arith.constant -1.45315206 : f32
    %203 = vector.broadcast %cst_75 : f32 to vector<8x128xf32>
    %204 = arith.addf %202, %203 : vector<8x128xf32>
    %205 = arith.mulf %204, %200 : vector<8x128xf32>
    %cst_76 = arith.constant 1.42141378 : f32
    %206 = vector.broadcast %cst_76 : f32 to vector<8x128xf32>
    %207 = arith.addf %205, %206 : vector<8x128xf32>
    %208 = arith.mulf %207, %200 : vector<8x128xf32>
    %cst_77 = arith.constant -0.284496725 : f32
    %209 = vector.broadcast %cst_77 : f32 to vector<8x128xf32>
    %210 = arith.addf %208, %209 : vector<8x128xf32>
    %211 = arith.mulf %210, %200 : vector<8x128xf32>
    %cst_78 = arith.constant 0.254829586 : f32
    %212 = vector.broadcast %cst_78 : f32 to vector<8x128xf32>
    %213 = arith.addf %211, %212 : vector<8x128xf32>
    %214 = arith.mulf %213, %200 : vector<8x128xf32>
    %cst_79 = arith.constant 0.000000e+00 : f32
    %215 = vector.broadcast %cst_79 : f32 to vector<8x128xf32>
    %216 = arith.subf %215, %191 : vector<8x128xf32>
    %217 = arith.mulf %216, %191 : vector<8x128xf32>
    %218 = math.exp %217 : vector<8x128xf32>
    %219 = arith.mulf %214, %218 : vector<8x128xf32>
    %cst_80 = arith.constant 1.000000e+00 : f32
    %220 = vector.broadcast %cst_80 : f32 to vector<8x128xf32>
    %221 = arith.subf %220, %219 : vector<8x128xf32>
    %222 = arith.mulf %190, %221 : vector<8x128xf32>
    %cst_81 = arith.constant 1.000000e+00 : f32
    %223 = vector.broadcast %cst_81 : f32 to vector<8x128xf32>
    %224 = arith.addf %223, %222 : vector<8x128xf32>
    %225 = arith.mulf %183, %224 : vector<8x128xf32>
    %226 = arith.truncf %225 : vector<8x128xf32> to vector<8x128xbf16>
    %c0_82 = arith.constant 0 : index
    %c0_83 = arith.constant 0 : index
    %227 = vector.load %arg16[%c0_82, %c0_83] : memref<128x32xbf16, #tpu.memory_space<vmem>>, vector<128x32xbf16>
    %cst_84 = arith.constant dense<0.000000e+00> : vector<8x32xf32>
    %228 = tpu.matmul %226, %227, %cst_84 {dimension_numbers = #tpu.dot_dimension_numbers<[1], [0], [0], [1], [0, 0, 1, 1], [], []>} : vector<8x128xbf16>, vector<128x32xbf16>, vector<8x32xf32> -> vector<8x32xf32>
    %c0_85 = arith.constant 0 : index
    %c0_86 = arith.constant 0 : index
    %229 = vector.load %arg17[%c0_85, %c0_86] : memref<1x32xf32, #tpu.memory_space<vmem>>, vector<1x32xf32>
    %230 = vector.broadcast %229 : vector<1x32xf32> to vector<8x32xf32>
    %231 = arith.addf %228, %230 : vector<8x32xf32>
    %232 = arith.addf %151, %231 : vector<8x32xf32>
    %c0_87 = arith.constant 0 : index
    %c0_88 = arith.constant 0 : index
    %c0_89 = arith.constant 0 : index
    %233 = vector.load %arg18[%c0_87, %c0_88, %c0_89] : memref<1x8x32xf32, #tpu.memory_space<vmem>>, vector<1x8x32xf32>
    %234 = vector.shape_cast %233 : vector<1x8x32xf32> to vector<8x32xf32>
    %235 = vector.shape_cast %232 : vector<8x32xf32> to vector<1x8x32xf32>
    tpu.vector_store %arg18[%c0_87, %c0_88, %c0_89], %235 {strides = array<i32>} : memref<1x8x32xf32, #tpu.memory_space<vmem>>, vector<1x8x32xf32>,
    return
  }
  func.func @transform_0(%arg0: i32) -> (i32, i32, i32) {
    %c0_i32 = arith.constant 0 : i32
    %c0_i32_0 = arith.constant 0 : i32
    %c0_i32_1 = arith.constant 0 : i32
    return %arg0, %c0_i32, %c0_i32_0 : i32, i32, i32
  }
  func.func @transform_1(%arg0: i32) -> (i32, i32) {
    %c0_i32 = arith.constant 0 : i32
    %c0_i32_0 = arith.constant 0 : i32
    %c0_i32_1 = arith.constant 0 : i32
    return %c0_i32, %c0_i32_0 : i32, i32
  }
  func.func @transform_2(%arg0: i32) -> (i32, i32) {
    %c0_i32 = arith.constant 0 : i32
    %c0_i32_0 = arith.constant 0 : i32
    %c0_i32_1 = arith.constant 0 : i32
    return %c0_i32, %c0_i32_0 : i32, i32
  }
  func.func @transform_3(%arg0: i32) -> (i32, i32) {
    %c0_i32 = arith.constant 0 : i32
    %c0_i32_0 = arith.constant 0 : i32
    %c0_i32_1 = arith.constant 0 : i32
    return %c0_i32, %c0_i32_0 : i32, i32
  }
  func.func @transform_4(%arg0: i32) -> (i32, i32) {
    %c0_i32 = arith.constant 0 : i32
    %c0_i32_0 = arith.constant 0 : i32
    %c0_i32_1 = arith.constant 0 : i32
    return %c0_i32, %c0_i32_0 : i32, i32
  }
  func.func @transform_5(%arg0: i32) -> (i32, i32) {
    %c0_i32 = arith.constant 0 : i32
    %c0_i32_0 = arith.constant 0 : i32
    %c0_i32_1 = arith.constant 0 : i32
    return %c0_i32, %c0_i32_0 : i32, i32
  }
  func.func @transform_6(%arg0: i32) -> (i32, i32) {
    %c0_i32 = arith.constant 0 : i32
    %c0_i32_0 = arith.constant 0 : i32
    %c0_i32_1 = arith.constant 0 : i32
    return %c0_i32, %c0_i32_0 : i32, i32
  }
  func.func @transform_7(%arg0: i32) -> (i32, i32) {
    %c0_i32 = arith.constant 0 : i32
    %c0_i32_0 = arith.constant 0 : i32
    %c0_i32_1 = arith.constant 0 : i32
    return %c0_i32, %c0_i32_0 : i32, i32
  }
  func.func @transform_8(%arg0: i32) -> (i32, i32) {
    %c0_i32 = arith.constant 0 : i32
    %c0_i32_0 = arith.constant 0 : i32
    %c0_i32_1 = arith.constant 0 : i32
    return %c0_i32, %c0_i32_0 : i32, i32
  }
  func.func @transform_9(%arg0: i32) -> (i32, i32) {
    %c0_i32 = arith.constant 0 : i32
    %c0_i32_0 = arith.constant 0 : i32
    %c0_i32_1 = arith.constant 0 : i32
    return %c0_i32, %c0_i32_0 : i32, i32
  }
  func.func @transform_10(%arg0: i32) -> (i32, i32) {
    %c0_i32 = arith.constant 0 : i32
    %c0_i32_0 = arith.constant 0 : i32
    %c0_i32_1 = arith.constant 0 : i32
    return %c0_i32, %c0_i32_0 : i32, i32
  }
  func.func @transform_11(%arg0: i32) -> (i32, i32) {
    %c0_i32 = arith.constant 0 : i32
    %c0_i32_0 = arith.constant 0 : i32
    %c0_i32_1 = arith.constant 0 : i32
    return %c0_i32, %c0_i32_0 : i32, i32
  }
  func.func @transform_12(%arg0: i32) -> (i32, i32) {
    %c0_i32 = arith.constant 0 : i32
    %c0_i32_0 = arith.constant 0 : i32
    %c0_i32_1 = arith.constant 0 : i32
    return %c0_i32, %c0_i32_0 : i32, i32
  }
  func.func @transform_13(%arg0: i32) -> (i32, i32) {
    %c0_i32 = arith.constant 0 : i32
    %c0_i32_0 = arith.constant 0 : i32
    %c0_i32_1 = arith.constant 0 : i32
    return %c0_i32, %c0_i32_0 : i32, i32
  }
  func.func @transform_14(%arg0: i32) -> (i32, i32) {
    %c0_i32 = arith.constant 0 : i32
    %c0_i32_0 = arith.constant 0 : i32
    %c0_i32_1 = arith.constant 0 : i32
    return %c0_i32, %c0_i32_0 : i32, i32
  }
  func.func @transform_15(%arg0: i32) -> (i32, i32) {
    %c0_i32 = arith.constant 0 : i32
    %c0_i32_0 = arith.constant 0 : i32
    %c0_i32_1 = arith.constant 0 : i32
    return %c0_i32, %c0_i32_0 : i32, i32
  }
  func.func @transform_16(%arg0: i32) -> (i32, i32) {
    %c0_i32 = arith.constant 0 : i32
    %c0_i32_0 = arith.constant 0 : i32
    %c0_i32_1 = arith.constant 0 : i32
    return %c0_i32, %c0_i32_0 : i32, i32
  }
  func.func @transform_17(%arg0: i32) -> (i32, i32, i32) {
    %c0_i32 = arith.constant 0 : i32
    %c0_i32_0 = arith.constant 0 : i32
    %c0_i32_1 = arith.constant 0 : i32
    return %arg0, %c0_i32, %c0_i32_0 : i32, i32, i32
  }
}

</mosaic_0001>

<llo_original>
// kernel: tpu_custom_call.1
$region0: #{tpu_custom_call.1}
  #allocation0 [shape = 'u32[]', space=smem, size = 0x4, offset = 0x4, fixed_abs, tag = 'smem constant byte address 0x4 - core index']
  #allocation1 [shape = 'u32[144,128]{1,0:T(1,128)}', space=vmem, size = 0x12000, scoped, tag = 'internal scratch']
  %s0 = inlined_call_operand.vmem [shape: f32[2,8,32], index: 0, kind: input, shape index: {}]
  %s1 = inlined_call_operand.vmem [shape: f32[1,32], index: 1, kind: input, shape index: {}]
  %s2 = inlined_call_operand.vmem [shape: f32[1,32], index: 2, kind: input, shape index: {}]
  %s3 = inlined_call_operand.vmem [shape: bf16[32,32], index: 3, kind: input, shape index: {}]
  %s4 = inlined_call_operand.vmem [shape: f32[1,32], index: 4, kind: input, shape index: {}]
  %s5 = inlined_call_operand.vmem [shape: bf16[32,32], index: 5, kind: input, shape index: {}]
  %s6 = inlined_call_operand.vmem [shape: f32[1,32], index: 6, kind: input, shape index: {}]
  %s7 = inlined_call_operand.vmem [shape: bf16[32,32], index: 7, kind: input, shape index: {}]
  %s8 = inlined_call_operand.vmem [shape: f32[1,32], index: 8, kind: input, shape index: {}]
  %s9 = inlined_call_operand.vmem [shape: bf16[32,32], index: 9, kind: input, shape index: {}]
  %s10 = inlined_call_operand.vmem [shape: f32[1,32], index: 10, kind: input, shape index: {}]
  %s11 = inlined_call_operand.vmem [shape: f32[1,32], index: 11, kind: input, shape index: {}]
  %s12 = inlined_call_operand.vmem [shape: f32[1,32], index: 12, kind: input, shape index: {}]
  %s13 = inlined_call_operand.hbm [shape: bf16[32,128], index: 13, kind: input, shape index: {}]
  %s14 = inlined_call_operand.vmem [shape: f32[1,128], index: 14, kind: input, shape index: {}]
  %s15 = inlined_call_operand.vmem [shape: bf16[128,32], index: 15, kind: input, shape index: {}]
  %s16 = inlined_call_operand.vmem [shape: f32[1,32], index: 16, kind: input, shape index: {}]
  %s17 = inlined_call_operand.hbm [shape: f32[2,8,32], index: 17, kind: output, shape index: {}]
  %s18 = sld [smem:[#allocation0]]
  $region105: #{tpu_custom_call.1} parent=0
    _
  %s20 = ssub.s32 1, %s18
  %s21 = scalar_select 0, %s20, %s18
  $region1: #{tpu_custom_call.1} parent=0
    #allocation2 [shape = 'u8[8192]{0}', space=vmem, size = 0x2000, scoped, tag = 'input window, operand 13, single buffered']
    #allocation3 [shape = 's32[2]{0}', space=sflag, size = 0x8, scoped, tag = 'scoped memory for tpu_custom_call.1']
    #allocation4 [shape = 's32[2]{0}', space=sflag, size = 0x8, scoped, tag = 'scoped memory for tpu_custom_call.1']
    #allocation5 [shape = 'u8[8192]{0}', space=vmem, size = 0x2000, scoped, tag = 'output window, operand 0']
    %22 = vsyncpa [#allocation3], 0
    %23 = vsyncpa [#allocation4], 0
    %s24 = scalar_lea.sflag [#allocation4], 1
    %25 = vsyncpa %s24, 0
    loop: start=0, step=1, limit=4
    $region2: #{tpu_custom_call.1} parent=1 // loop_pre_header
      _
    $region3: #{tpu_custom_call.1} parent=1 // loop_header
      %s27 = sphi 0, %s31
      %p28 = scmp.ge.s32.totalorder %s27, 4
      %s37 = sphi 0, %s39
      %s40 = sphi 0, %s37
      %s41 = sphi 0, %s40
      %s57 = sphi 0, %s41
      %s61 = sphi 0, %s61
      %s63 = sphi 0, %s61
      %s64 = sphi 0, %s63
      %s78 = sphi 0, %s64
      %s82 = sphi 0, %s82
      %s84 = sphi 0, %s82
      %s85 = sphi 0, %s84
      %s99 = sphi 0, %s85
      %s103 = sphi 0, %s103
      %s105 = sphi 0, %s103
      %s106 = sphi 0, %s105
      %s120 = sphi 0, %s106
      %s124 = sphi 0, %s124
      %s126 = sphi 0, %s124
      %s127 = sphi 0, %s126
      %s141 = sphi 0, %s127
      %s145 = sphi 0, %s145
      %s147 = sphi 0, %s145
      %s148 = sphi 0, %s147
      %s162 = sphi 0, %s148
      %s166 = sphi 0, %s166
      %s168 = sphi 0, %s166
      %s169 = sphi 0, %s168
      %s183 = sphi 0, %s169
      %s187 = sphi 0, %s187
      %s189 = sphi 0, %s187
      %s190 = sphi 0, %s189
      %s204 = sphi 0, %s190
      %s208 = sphi 0, %s208
      %s210 = sphi 0, %s208
      %s211 = sphi 0, %s210
      %s225 = sphi 0, %s211
      %s229 = sphi 0, %s229
      %s231 = sphi 0, %s229
      %s232 = sphi 0, %s231
      %s246 = sphi 0, %s232
      %s250 = sphi 0, %s250
      %s252 = sphi 0, %s250
      %s253 = sphi 0, %s252
      %s267 = sphi 0, %s253
      %s271 = sphi 0, %s271
      %s273 = sphi 0, %s271
      %s274 = sphi 0, %s273
      %s288 = sphi 0, %s274
      %s292 = sphi 0, %s292
      %s294 = sphi 0, %s292
      %s295 = sphi 0, %s294
      %s309 = sphi 0, %s295
      %s313 = sphi 0, %s313
      %s315 = sphi 0, %s313
      %s316 = sphi 0, %s315
      %s330 = sphi 0, %s316
      %s334 = sphi 0, %s334
      %s336 = sphi 0, %s334
      %s337 = sphi 0, %s336
      %s351 = sphi 0, %s337
      %s355 = sphi 0, %s355
      %s357 = sphi 0, %s355
      %s358 = sphi 0, %s357
      %s372 = sphi 0, %s358
      %s376 = sphi 0, %s376
      %s378 = sphi 0, %s376
      %s379 = sphi 0, %s378
      %s393 = sphi 0, %s379
      %s399 = sphi 0, %s401
      %s402 = sphi 0, %s399
      %s403 = sphi 0, %s402
      %s419 = sphi 0, %s403
    $region4: #{tpu_custom_call.1} parent=1 // loop_header_branch
      %30 = sbr.rel (%p28) target = $region8
    $region5: #{tpu_custom_call.1} parent=1 // loop_body
      %s32 = ssub.s32 %s27, 1
      %s33 = ssub.s32 %s27, 2
      %s34 = sadd.s32 %s27, 1
      %s35 = ssub.s32 %s27, %s34
      %p36 = scmp.eq.s32.totalorder %s35, 0
      %s38 = sadd.s32 %s37, 1
      %s39 = scalar_select %p36, %s37, %s38
      %p42 = pneg %p36
      %p43 = scmp.eq.s32.totalorder %s27, 1
      %p44 = por %p42, %p43
      %p45 = scmp.ne.s32.totalorder %s37, %s40
      %p46 = scmp.eq.s32.totalorder %s27, 0
      %p47 = por %p45, %p46
      %p48 = scmp.ne.s32.totalorder %s37, %s40
      %p49 = scmp.eq.s32.totalorder %s32, 1
      %p50 = por %p48, %p49
      %p51 = scmp.ne.s32.totalorder %s40, %s41
      %p52 = scmp.eq.s32.totalorder %s32, 0
      %p53 = por %p51, %p52
      %p54 = scmp.ne.s32.totalorder %s40, %s41
      %p55 = scmp.eq.s32.totalorder %s33, 1
      %p56 = por %p54, %p55
      %p58 = scmp.ne.s32.totalorder %s41, %s57
      %p59 = scmp.eq.s32.totalorder %s33, 0
      %p60 = por %p58, %p59
      %s62 = sadd.s32 %s61, 1
      %p65 = scmp.eq.s32.totalorder %s27, 1
      %p66 = scmp.ne.s32.totalorder %s61, %s63
      %p67 = scmp.eq.s32.totalorder %s27, 0
      %p68 = por %p66, %p67
      %p69 = scmp.ne.s32.totalorder %s61, %s63
      %p70 = scmp.eq.s32.totalorder %s32, 1
      %p71 = por %p69, %p70
      %p72 = scmp.ne.s32.totalorder %s63, %s64
      %p73 = scmp.eq.s32.totalorder %s32, 0
      %p74 = por %p72, %p73
      %p75 = scmp.ne.s32.totalorder %s63, %s64
      %p76 = scmp.eq.s32.totalorder %s33, 1
      %p77 = por %p75, %p76
      %p79 = scmp.ne.s32.totalorder %s64, %s78
      %p80 = scmp.eq.s32.totalorder %s33, 0
      %p81 = por %p79, %p80
      %s83 = sadd.s32 %s82, 1
      %p86 = scmp.eq.s32.totalorder %s27, 1
      %p87 = scmp.ne.s32.totalorder %s82, %s84
      %p88 = scmp.eq.s32.totalorder %s27, 0
      %p89 = por %p87, %p88
      %p90 = scmp.ne.s32.totalorder %s82, %s84
      %p91 = scmp.eq.s32.totalorder %s32, 1
      %p92 = por %p90, %p91
      %p93 = scmp.ne.s32.totalorder %s84, %s85
      %p94 = scmp.eq.s32.totalorder %s32, 0
      %p95 = por %p93, %p94
      %p96 = scmp.ne.s32.totalorder %s84, %s85
      %p97 = scmp.eq.s32.totalorder %s33, 1
      %p98 = por %p96, %p97
      %p100 = scmp.ne.s32.totalorder %s85, %s99
      %p101 = scmp.eq.s32.totalorder %s33, 0
      %p102 = por %p100, %p101
      %s104 = sadd.s32 %s103, 1
      %p107 = scmp.eq.s32.totalorder %s27, 1
      %p108 = scmp.ne.s32.totalorder %s103, %s105
      %p109 = scmp.eq.s32.totalorder %s27, 0
      %p110 = por %p108, %p109
      %p111 = scmp.ne.s32.totalorder %s103, %s105
      %p112 = scmp.eq.s32.totalorder %s32, 1
      %p113 = por %p111, %p112
      %p114 = scmp.ne.s32.totalorder %s105, %s106
      %p115 = scmp.eq.s32.totalorder %s32, 0
      %p116 = por %p114, %p115
      %p117 = scmp.ne.s32.totalorder %s105, %s106
      %p118 = scmp.eq.s32.totalorder %s33, 1
      %p119 = por %p117, %p118
      %p121 = scmp.ne.s32.totalorder %s106, %s120
      %p122 = scmp.eq.s32.totalorder %s33, 0
      %p123 = por %p121, %p122
      %s125 = sadd.s32 %s124, 1
      %p128 = scmp.eq.s32.totalorder %s27, 1
      %p129 = scmp.ne.s32.totalorder %s124, %s126
      %p130 = scmp.eq.s32.totalorder %s27, 0
      %p131 = por %p129, %p130
      %p132 = scmp.ne.s32.totalorder %s124, %s126
      %p133 = scmp.eq.s32.totalorder %s32, 1
      %p134 = por %p132, %p133
      %p135 = scmp.ne.s32.totalorder %s126, %s127
      %p136 = scmp.eq.s32.totalorder %s32, 0
      %p137 = por %p135, %p136
      %p138 = scmp.ne.s32.totalorder %s126, %s127
      %p139 = scmp.eq.s32.totalorder %s33, 1
      %p140 = por %p138, %p139
      %p142 = scmp.ne.s32.totalorder %s127, %s141
      %p143 = scmp.eq.s32.totalorder %s33, 0
      %p144 = por %p142, %p143
      %s146 = sadd.s32 %s145, 1
      %p149 = scmp.eq.s32.totalorder %s27, 1
      %p150 = scmp.ne.s32.totalorder %s145, %s147
      %p151 = scmp.eq.s32.totalorder %s27, 0
      %p152 = por %p150, %p151
      %p153 = scmp.ne.s32.totalorder %s145, %s147
      %p154 = scmp.eq.s32.totalorder %s32, 1
      %p155 = por %p153, %p154
      %p156 = scmp.ne.s32.totalorder %s147, %s148
      %p157 = scmp.eq.s32.totalorder %s32, 0
      %p158 = por %p156, %p157
      %p159 = scmp.ne.s32.totalorder %s147, %s148
      %p160 = scmp.eq.s32.totalorder %s33, 1
      %p161 = por %p159, %p160
      %p163 = scmp.ne.s32.totalorder %s148, %s162
      %p164 = scmp.eq.s32.totalorder %s33, 0
      %p165 = por %p163, %p164
      %s167 = sadd.s32 %s166, 1
      %p170 = scmp.eq.s32.totalorder %s27, 1
      %p171 = scmp.ne.s32.totalorder %s166, %s168
      %p172 = scmp.eq.s32.totalorder %s27, 0
      %p173 = por %p171, %p172
      %p174 = scmp.ne.s32.totalorder %s166, %s168
      %p175 = scmp.eq.s32.totalorder %s32, 1
      %p176 = por %p174, %p175
      %p177 = scmp.ne.s32.totalorder %s168, %s169
      %p178 = scmp.eq.s32.totalorder %s32, 0
      %p179 = por %p177, %p178
      %p180 = scmp.ne.s32.totalorder %s168, %s169
      %p181 = scmp.eq.s32.totalorder %s33, 1
      %p182 = por %p180, %p181
      %p184 = scmp.ne.s32.totalorder %s169, %s183
      %p185 = scmp.eq.s32.totalorder %s33, 0
      %p186 = por %p184, %p185
      %s188 = sadd.s32 %s187, 1
      %p191 = scmp.eq.s32.totalorder %s27, 1
      %p192 = scmp.ne.s32.totalorder %s187, %s189
      %p193 = scmp.eq.s32.totalorder %s27, 0
      %p194 = por %p192, %p193
      %p195 = scmp.ne.s32.totalorder %s187, %s189
      %p196 = scmp.eq.s32.totalorder %s32, 1
      %p197 = por %p195, %p196
      %p198 = scmp.ne.s32.totalorder %s189, %s190
      %p199 = scmp.eq.s32.totalorder %s32, 0
      %p200 = por %p198, %p199
      %p201 = scmp.ne.s32.totalorder %s189, %s190
      %p202 = scmp.eq.s32.totalorder %s33, 1
      %p203 = por %p201, %p202
      %p205 = scmp.ne.s32.totalorder %s190, %s204
      %p206 = scmp.eq.s32.totalorder %s33, 0
      %p207 = por %p205, %p206
      %s209 = sadd.s32 %s208, 1
      %p212 = scmp.eq.s32.totalorder %s27, 1
      %p213 = scmp.ne.s32.totalorder %s208, %s210
      %p214 = scmp.eq.s32.totalorder %s27, 0
      %p215 = por %p213, %p214
      %p216 = scmp.ne.s32.totalorder %s208, %s210
      %p217 = scmp.eq.s32.totalorder %s32, 1
      %p218 = por %p216, %p217
      %p219 = scmp.ne.s32.totalorder %s210, %s211
      %p220 = scmp.eq.s32.totalorder %s32, 0
      %p221 = por %p219, %p220
      %p222 = scmp.ne.s32.totalorder %s210, %s211
      %p223 = scmp.eq.s32.totalorder %s33, 1
      %p224 = por %p222, %p223
      %p226 = scmp.ne.s32.totalorder %s211, %s225
      %p227 = scmp.eq.s32.totalorder %s33, 0
      %p228 = por %p226, %p227
      %s230 = sadd.s32 %s229, 1
      %p233 = scmp.eq.s32.totalorder %s27, 1
      %p234 = scmp.ne.s32.totalorder %s229, %s231
      %p235 = scmp.eq.s32.totalorder %s27, 0
      %p236 = por %p234, %p235
      %p237 = scmp.ne.s32.totalorder %s229, %s231
      %p238 = scmp.eq.s32.totalorder %s32, 1
      %p239 = por %p237, %p238
      %p240 = scmp.ne.s32.totalorder %s231, %s232
      %p241 = scmp.eq.s32.totalorder %s32, 0
      %p242 = por %p240, %p241
      %p243 = scmp.ne.s32.totalorder %s231, %s232
      %p244 = scmp.eq.s32.totalorder %s33, 1
      %p245 = por %p243, %p244
      %p247 = scmp.ne.s32.totalorder %s232, %s246
      %p248 = scmp.eq.s32.totalorder %s33, 0
      %p249 = por %p247, %p248
      %s251 = sadd.s32 %s250, 1
      %p254 = scmp.eq.s32.totalorder %s27, 1
      %p255 = scmp.ne.s32.totalorder %s250, %s252
      %p256 = scmp.eq.s32.totalorder %s27, 0
      %p257 = por %p255, %p256
      %p258 = scmp.ne.s32.totalorder %s250, %s252
      %p259 = scmp.eq.s32.totalorder %s32, 1
      %p260 = por %p258, %p259
      %p261 = scmp.ne.s32.totalorder %s252, %s253
      %p262 = scmp.eq.s32.totalorder %s32, 0
      %p263 = por %p261, %p262
      %p264 = scmp.ne.s32.totalorder %s252, %s253
      %p265 = scmp.eq.s32.totalorder %s33, 1
      %p266 = por %p264, %p265
      %p268 = scmp.ne.s32.totalorder %s253, %s267
      %p269 = scmp.eq.s32.totalorder %s33, 0
      %p270 = por %p268, %p269
      %s272 = sadd.s32 %s271, 1
      %p275 = scmp.eq.s32.totalorder %s27, 1
      %p276 = scmp.ne.s32.totalorder %s271, %s273
      %p277 = scmp.eq.s32.totalorder %s27, 0
      %p278 = por %p276, %p277
      %p279 = scmp.ne.s32.totalorder %s271, %s273
      %p280 = scmp.eq.s32.totalorder %s32, 1
      %p281 = por %p279, %p280
      %p282 = scmp.ne.s32.totalorder %s273, %s274
      %p283 = scmp.eq.s32.totalorder %s32, 0
      %p284 = por %p282, %p283
      %p285 = scmp.ne.s32.totalorder %s273, %s274
      %p286 = scmp.eq.s32.totalorder %s33, 1
      %p287 = por %p285, %p286
      %p289 = scmp.ne.s32.totalorder %s274, %s288
      %p290 = scmp.eq.s32.totalorder %s33, 0
      %p291 = por %p289, %p290
      %s293 = sadd.s32 %s292, 1
      %p296 = scmp.eq.s32.totalorder %s27, 1
      %p297 = scmp.ne.s32.totalorder %s292, %s294
      %p298 = scmp.eq.s32.totalorder %s27, 0
      %p299 = por %p297, %p298
      %p300 = scmp.ne.s32.totalorder %s292, %s294
      %p301 = scmp.eq.s32.totalorder %s32, 1
      %p302 = por %p300, %p301
      %p303 = scmp.ne.s32.totalorder %s294, %s295
      %p304 = scmp.eq.s32.totalorder %s32, 0
      %p305 = por %p303, %p304
      %p306 = scmp.ne.s32.totalorder %s294, %s295
      %p307 = scmp.eq.s32.totalorder %s33, 1
      %p308 = por %p306, %p307
      %p310 = scmp.ne.s32.totalorder %s295, %s309
      %p311 = scmp.eq.s32.totalorder %s33, 0
      %p312 = por %p310, %p311
      %s314 = sadd.s32 %s313, 1
      %p317 = scmp.eq.s32.totalorder %s27, 1
      %p318 = scmp.ne.s32.totalorder %s313, %s315
      %p319 = scmp.eq.s32.totalorder %s27, 0
      %p320 = por %p318, %p319
      %p321 = scmp.ne.s32.totalorder %s313, %s315
      %p322 = scmp.eq.s32.totalorder %s32, 1
      %p323 = por %p321, %p322
      %p324 = scmp.ne.s32.totalorder %s315, %s316
      %p325 = scmp.eq.s32.totalorder %s32, 0
      %p326 = por %p324, %p325
      %p327 = scmp.ne.s32.totalorder %s315, %s316
      %p328 = scmp.eq.s32.totalorder %s33, 1
      %p329 = por %p327, %p328
      %p331 = scmp.ne.s32.totalorder %s316, %s330
      %p332 = scmp.eq.s32.totalorder %s33, 0
      %p333 = por %p331, %p332
      %s335 = sadd.s32 %s334, 1
      %p338 = scmp.eq.s32.totalorder %s27, 1
      %p339 = scmp.ne.s32.totalorder %s334, %s336
      %p340 = scmp.eq.s32.totalorder %s27, 0
      %p341 = por %p339, %p340
      %p342 = scmp.ne.s32.totalorder %s334, %s336
      %p343 = scmp.eq.s32.totalorder %s32, 1
      %p344 = por %p342, %p343
      %p345 = scmp.ne.s32.totalorder %s336, %s337
      %p346 = scmp.eq.s32.totalorder %s32, 0
      %p347 = por %p345, %p346
      %p348 = scmp.ne.s32.totalorder %s336, %s337
      %p349 = scmp.eq.s32.totalorder %s33, 1
      %p350 = por %p348, %p349
      %p352 = scmp.ne.s32.totalorder %s337, %s351
      %p353 = scmp.eq.s32.totalorder %s33, 0
      %p354 = por %p352, %p353
      %s356 = sadd.s32 %s355, 1
      %p359 = scmp.eq.s32.totalorder %s27, 1
      %p360 = scmp.ne.s32.totalorder %s355, %s357
      %p361 = scmp.eq.s32.totalorder %s27, 0
      %p362 = por %p360, %p361
      %p363 = scmp.ne.s32.totalorder %s355, %s357
      %p364 = scmp.eq.s32.totalorder %s32, 1
      %p365 = por %p363, %p364
      %p366 = scmp.ne.s32.totalorder %s357, %s358
      %p367 = scmp.eq.s32.totalorder %s32, 0
      %p368 = por %p366, %p367
      %p369 = scmp.ne.s32.totalorder %s357, %s358
      %p370 = scmp.eq.s32.totalorder %s33, 1
      %p371 = por %p369, %p370
      %p373 = scmp.ne.s32.totalorder %s358, %s372
      %p374 = scmp.eq.s32.totalorder %s33, 0
      %p375 = por %p373, %p374
      %s377 = sadd.s32 %s376, 1
      %p380 = scmp.eq.s32.totalorder %s27, 1
      %p381 = scmp.ne.s32.totalorder %s376, %s378
      %p382 = scmp.eq.s32.totalorder %s27, 0
      %p383 = por %p381, %p382
      %p384 = scmp.ne.s32.totalorder %s376, %s378
      %p385 = scmp.eq.s32.totalorder %s32, 1
      %p386 = por %p384, %p385
      %p387 = scmp.ne.s32.totalorder %s378, %s379
      %p388 = scmp.eq.s32.totalorder %s32, 0
      %p389 = por %p387, %p388
      %p390 = scmp.ne.s32.totalorder %s378, %s379
      %p391 = scmp.eq.s32.totalorder %s33, 1
      %p392 = por %p390, %p391
      %p394 = scmp.ne.s32.totalorder %s379, %s393
      %p395 = scmp.eq.s32.totalorder %s33, 0
      %p396 = por %p394, %p395
      %s397 = ssub.s32 %s27, %s34
      %p398 = scmp.eq.s32.totalorder %s397, 0
      %s400 = sadd.s32 %s399, 1
      %s401 = scalar_select %p398, %s399, %s400
      %p404 = pneg %p398
      %p405 = scmp.eq.s32.totalorder %s27, 1
      %p406 = por %p404, %p405
      %p407 = scmp.ne.s32.totalorder %s399, %s402
      %p408 = scmp.eq.s32.totalorder %s27, 0
      %p409 = por %p407, %p408
      %p410 = scmp.ne.s32.totalorder %s399, %s402
      %p411 = scmp.eq.s32.totalorder %s32, 1
      %p412 = por %p410, %p411
      %p413 = scmp.ne.s32.totalorder %s402, %s403
      %p414 = scmp.eq.s32.totalorder %s32, 0
      %p415 = por %p413, %p414
      %p416 = scmp.ne.s32.totalorder %s402, %s403
      %p417 = scmp.eq.s32.totalorder %s33, 1
      %p418 = por %p416, %p417
      %p420 = scmp.ne.s32.totalorder %s403, %s419
      %p421 = scmp.eq.s32.totalorder %s33, 0
      %p422 = por %p420, %p421
      %p423 = scmp.le.s32.totalorder 1, %s27
      %p424 = scmp.lt.s32.totalorder %s27, 3
      %p425 = pnand %p423, %p424
      %p426 = pneg %p425
      // Predicated region
      $region9: #{tpu_custom_call.1} parent=5 // pred_check
        _
      $region10: #{tpu_custom_call.1} parent=5 // pred_check_branch
        %428 = sbr.rel (%p425) target = $region12
      $region11: #{tpu_custom_call.1} parent=5 // pred_region
        %s429 = ssub.s32 %s27, 1
        // Predicated region
        $region13: #{tpu_custom_call.1} parent=11 // pred_check
          %p430 = pneg %p74
        $region14: #{tpu_custom_call.1} parent=11 // pred_check_branch
          %432 = sbr.rel (%p430) target = $region16
        $region15: #{tpu_custom_call.1} parent=11 // pred_region
          _
        $region16: #{tpu_custom_call.1} parent=11 // pred_fallthru
          _
        // Predicated region
        $region17: #{tpu_custom_call.1} parent=11 // pred_check
          %p433 = pneg %p95
        $region18: #{tpu_custom_call.1} parent=11 // pred_check_branch
          %435 = sbr.rel (%p433) target = $region20
        $region19: #{tpu_custom_call.1} parent=11 // pred_region
          _
        $region20: #{tpu_custom_call.1} parent=11 // pred_fallthru
          _
        // Predicated region
        $region21: #{tpu_custom_call.1} parent=11 // pred_check
          %p436 = pneg %p116
        $region22: #{tpu_custom_call.1} parent=11 // pred_check_branch
          %438 = sbr.rel (%p436) target = $region24
        $region23: #{tpu_custom_call.1} parent=11 // pred_region
          _
        $region24: #{tpu_custom_call.1} parent=11 // pred_fallthru
          _
        // Predicated region
        $region25: #{tpu_custom_call.1} parent=11 // pred_check
          %p439 = pneg %p137
        $region26: #{tpu_custom_call.1} parent=11 // pred_check_branch
          %441 = sbr.rel (%p439) target = $region28
        $region27: #{tpu_custom_call.1} parent=11 // pred_region
          _
        $region28: #{tpu_custom_call.1} parent=11 // pred_fallthru
          _
        // Predicated region
        $region29: #{tpu_custom_call.1} parent=11 // pred_check
          %p442 = pneg %p158
        $region30: #{tpu_custom_call.1} parent=11 // pred_check_branch
          %444 = sbr.rel (%p442) target = $region32
        $region31: #{tpu_custom_call.1} parent=11 // pred_region
          _
        $region32: #{tpu_custom_call.1} parent=11 // pred_fallthru
          _
        // Predicated region
        $region33: #{tpu_custom_call.1} parent=11 // pred_check
          %p445 = pneg %p179
        $region34: #{tpu_custom_call.1} parent=11 // pred_check_branch
          %447 = sbr.rel (%p445) target = $region36
        $region35: #{tpu_custom_call.1} parent=11 // pred_region
          _
        $region36: #{tpu_custom_call.1} parent=11 // pred_fallthru
          _
        // Predicated region
        $region37: #{tpu_custom_call.1} parent=11 // pred_check
          %p448 = pneg %p200
        $region38: #{tpu_custom_call.1} parent=11 // pred_check_branch
          %450 = sbr.rel (%p448) target = $region40
        $region39: #{tpu_custom_call.1} parent=11 // pred_region
          _
        $region40: #{tpu_custom_call.1} parent=11 // pred_fallthru
          _
        // Predicated region
        $region41: #{tpu_custom_call.1} parent=11 // pred_check
          %p451 = pneg %p221
        $region42: #{tpu_custom_call.1} parent=11 // pred_check_branch
          %453 = sbr.rel (%p451) target = $region44
        $region43: #{tpu_custom_call.1} parent=11 // pred_region
          _
        $region44: #{tpu_custom_call.1} parent=11 // pred_fallthru
          _
        // Predicated region
        $region45: #{tpu_custom_call.1} parent=11 // pred_check
          %p454 = pneg %p242
        $region46: #{tpu_custom_call.1} parent=11 // pred_check_branch
          %456 = sbr.rel (%p454) target = $region48
        $region47: #{tpu_custom_call.1} parent=11 // pred_region
          _
        $region48: #{tpu_custom_call.1} parent=11 // pred_fallthru
          _
        // Predicated region
        $region49: #{tpu_custom_call.1} parent=11 // pred_check
          %p457 = pneg %p263
        $region50: #{tpu_custom_call.1} parent=11 // pred_check_branch
          %459 = sbr.rel (%p457) target = $region52
        $region51: #{tpu_custom_call.1} parent=11 // pred_region
          _
        $region52: #{tpu_custom_call.1} parent=11 // pred_fallthru
          _
        // Predicated region
        $region53: #{tpu_custom_call.1} parent=11 // pred_check
          %p460 = pneg %p284
        $region54: #{tpu_custom_call.1} parent=11 // pred_check_branch
          %462 = sbr.rel (%p460) target = $region56
        $region55: #{tpu_custom_call.1} parent=11 // pred_region
          _
        $region56: #{tpu_custom_call.1} parent=11 // pred_fallthru
          _
        // Predicated region
        $region57: #{tpu_custom_call.1} parent=11 // pred_check
          %p463 = pneg %p305
        $region58: #{tpu_custom_call.1} parent=11 // pred_check_branch
          %465 = sbr.rel (%p463) target = $region60
        $region59: #{tpu_custom_call.1} parent=11 // pred_region
          _
        $region60: #{tpu_custom_call.1} parent=11 // pred_fallthru
          _
        // Predicated region
        $region61: #{tpu_custom_call.1} parent=11 // pred_check
          %p466 = pneg %p326
        $region62: #{tpu_custom_call.1} parent=11 // pred_check_branch
          %468 = sbr.rel (%p466) target = $region64
        $region63: #{tpu_custom_call.1} parent=11 // pred_region
          %s470 = ssub.s32 256, 256
          %471 = vsyncadd [#allocation3], %s470
          %s472 = sshll.u32 [#allocation2], 4
          %s473 = int_to_ptr.vmem [resolvable:$true] %s472
          %478 = dma.hbm_to_vmem [thread:$0]  %s13, 256, %s473, [#allocation3], 64, 64, 4
        $region64: #{tpu_custom_call.1} parent=11 // pred_fallthru
          _
        // Predicated region
        $region65: #{tpu_custom_call.1} parent=11 // pred_check
          %p479 = pneg %p347
        $region66: #{tpu_custom_call.1} parent=11 // pred_check_branch
          %481 = sbr.rel (%p479) target = $region68
        $region67: #{tpu_custom_call.1} parent=11 // pred_region
          _
        $region68: #{tpu_custom_call.1} parent=11 // pred_fallthru
          _
        // Predicated region
        $region69: #{tpu_custom_call.1} parent=11 // pred_check
          %p482 = pneg %p368
        $region70: #{tpu_custom_call.1} parent=11 // pred_check_branch
          %484 = sbr.rel (%p482) target = $region72
        $region71: #{tpu_custom_call.1} parent=11 // pred_region
          _
        $region72: #{tpu_custom_call.1} parent=11 // pred_fallthru
          _
        // Predicated region
        $region73: #{tpu_custom_call.1} parent=11 // pred_check
          %p485 = pneg %p389
        $region74: #{tpu_custom_call.1} parent=11 // pred_check_branch
          %487 = sbr.rel (%p485) target = $region76
        $region75: #{tpu_custom_call.1} parent=11 // pred_region
          _
        $region76: #{tpu_custom_call.1} parent=11 // pred_fallthru
          _
      $region12: #{tpu_custom_call.1} parent=5 // pred_fallthru
        _
      %p488 = scmp.lt.s32.totalorder %s27, 2
      // Predicated region
      $region77: #{tpu_custom_call.1} parent=5 // pred_check
        %p489 = pneg %p488
      $region78: #{tpu_custom_call.1} parent=5 // pred_check_branch
        %491 = sbr.rel (%p489) target = $region80
      $region79: #{tpu_custom_call.1} parent=5 // pred_region
        // Predicated region
        $region81: #{tpu_custom_call.1} parent=79 // pred_check
          %p492 = pneg %p47
        $region82: #{tpu_custom_call.1} parent=79 // pred_check_branch
          %494 = sbr.rel (%p492) target = $region84
        $region83: #{tpu_custom_call.1} parent=79 // pred_region
          %p495 = scmp.lt.s32.totalorder %s27, 1
          %s496 = scalar_select %p495, %s27, 1
          %s497 = smul.addr %s496, 8
          %s498 = scalar_lea.vmem %s0, %s497
        $region84: #{tpu_custom_call.1} parent=79 // pred_fallthru
          _
      $region80: #{tpu_custom_call.1} parent=5 // pred_fallthru
        _
      %p499 = scmp.le.s32.totalorder 1, %s27
      %p500 = scmp.lt.s32.totalorder %s27, 3
      %p501 = pnand %p499, %p500
      %p502 = pneg %p501
      // Predicated region
      $region85: #{tpu_custom_call.1} parent=5 // pred_check
        _
      $region86: #{tpu_custom_call.1} parent=5 // pred_check_branch
        %504 = sbr.rel (%p501) target = $region88
      $region87: #{tpu_custom_call.1} parent=5 // pred_region
        %s505 = ssub.s32 %s27, 1
        // Predicated region
        $region89: #{tpu_custom_call.1} parent=87 // pred_check
          %p506 = pneg %p326
        $region90: #{tpu_custom_call.1} parent=87 // pred_check_branch
          %508 = sbr.rel (%p506) target = $region92
        $region91: #{tpu_custom_call.1} parent=87 // pred_region
          %509 = dma.done [#allocation3], 256
        $region92: #{tpu_custom_call.1} parent=87 // pred_fallthru
          _
        %p510 = scmp.lt.s32.totalorder %s32, 1
        %s511 = scalar_select %p510, %s32, 1
        %s512 = smul.addr %s511, 8
        %s513 = scalar_lea.vmem %s0, %s512
        %p514 = pneg %p53
        %p515 = pneg %p50
        %p516 = pneg %p74
        %p517 = pneg %p71
        %p518 = pneg %p95
        %p519 = pneg %p92
        %p520 = pneg %p116
        %p521 = pneg %p113
        %p522 = pneg %p137
        %p523 = pneg %p134
        %p524 = pneg %p158
        %p525 = pneg %p155
        %p526 = pneg %p179
        %p527 = pneg %p176
        %p528 = pneg %p200
        %p529 = pneg %p197
        %p530 = pneg %p221
        %p531 = pneg %p218
        %p532 = pneg %p242
        %p533 = pneg %p239
        %p534 = pneg %p263
        %p535 = pneg %p260
        %p536 = pneg %p284
        %p537 = pneg %p281
        %p538 = pneg %p305
        %p539 = pneg %p302
        %p540 = pneg %p326
        %p541 = pneg %p323
        %p542 = pneg %p347
        %p543 = pneg %p344
        %p544 = pneg %p368
        %p545 = pneg %p365
        %p546 = pneg %p389
        %p547 = pneg %p386
        %p548 = pneg %p415
        %p549 = pneg %p412
        %s550 = sand.u32 %s402, 1
        %s551 = scalar_lea.sflag [#allocation4], %s550
        %s552 = sand.u32 %s402, 1
        %s553 = smul.addr %s552, 8
        %s554 = scalar_lea.vmem [#allocation5], %s553
        %p555 = scmp.lt.s32.totalorder %s32, 1
        %s556 = scalar_select %p555, %s32, 1
        %s557 = smul.addr %s556, 8
        %s558 = scalar_lea.vmem %s0, %s557
        %v560 = vld [vmem:[%s558] sm:$0xff]
        %v561 = vlaneseq
        %v562 = vshrl.u32 %v561, 7
        %v563 = vlaneseq
        %v564 = vand.u32 %v563, 127
        %vm565 = vcmp.le.s32.totalorder %v564, %v562
        %v566 = vsel %vm565, 0.0, -inf
        %v567 = vld [vmem:[%s1] sm:$0x1]
        %v568 = vld [vmem:[%s2] sm:$0x1]
        %vm569 = vcmask 261120
        %v570 = vsel %vm569, %v560, 0.0
        %571 = vadd.xlane.f32.xlu0 %v570
        %v572 = vpop.xlane.xlu0 %571
        %v573 = vrcp.pop 32.0
        %v574 = vmul.f32 %v572, %v573
        %v575 = vsub.f32 %v560, %v574
        %v576 = vmul.f32 %v575, %v575
        %v577 = vsel %vm569, %v576, 0.0
        %578 = vadd.xlane.f32.xlu0 %v577
        %v579 = vpop.xlane.xlu0 %578
        %v580 = vmul.f32 %v579, %v573
        %v581 = vadd.f32 %v580, 1e-05
        %v582 = vrsqrt.pop %v581
        %v583 = vmul.f32 %v575, %v582
        %v585 = vlaneseq
        %v586 = vshrl.u32 %v585, 7
        %v587 = vsub.s32 0, %v586
        %v588 = vrot.slane %v567, %v587
        %v590 = vmul.f32 %v583, %v588
        %v592 = vlaneseq
        %v593 = vshrl.u32 %v592, 7
        %v594 = vsub.s32 0, %v593
        %v595 = vrot.slane %v568, %v594
        %v597 = vadd.f32 %v590, %v595
        %v598 = vpack.c.bf16 %v597, %v597
        %v599 = vld [vmem:[%s3] sm:$0xf]
        %v600 = vld [vmem:[%s3 + $0x4] sm:$0xf]
        %v601 = vld [vmem:[%s3 + $0x8] sm:$0xf]
        %v602 = vld [vmem:[%s3 + $0xc] sm:$0xf]
        %v603 = vld [vmem:[%s4] sm:$0x1]
        %v605 = vlaneseq
        %v606 = vshrl.u32 %v605, 7
        %v607 = vsub.s32 0, %v606
        %v608 = vrot.slane %v603, %v607
        %v614 = vunpack.c.l.b16 %v599
        %v615 = vunpack.c.l.b16 %v600
        %v616 = vunpack.c.l.b16 %v601
        %v617 = vunpack.c.l.b16 %v602
        %v618 = vpack.c.b16 %v615, %v614
        %v619 = vpack.c.b16 %v617, %v616
        %v623 = vsel %vm569, %v598, 0
        %625 = vmatprep.subr.bf16.mxu0 0
        %626 = vmatpush1.bf16.msra.mxu0 0
        %627 = vmatprep.subr.bf16.mxu0 0
        %628 = vmatpush1.bf16.msra.mxu0 0
        %629 = vmatprep.subr.bf16.mxu0 0
        %630 = vmatpush1.bf16.msra.mxu0 0
        %631 = vmatprep.subr.bf16.mxu0 0
        %632 = vmatpush1.bf16.msra.mxu0 0
        %633 = vmatprep.subr.bf16.mxu0 0
        %634 = vmatpush1.bf16.msra.mxu0 0
        %635 = vmatprep.subr.bf16.mxu0 0
        %636 = vmatpush1.bf16.msra.mxu0 0
        %637 = vmatprep.subr.bf16.mxu0 0
        %638 = vmatpush1.bf16.msra.mxu0 %v619
        %639 = vmatprep.subr.bf16.mxu0 0
        %640 = vmatpush1.bf16.msra.mxu0 %v618
        %641 = vmatprep.subr.bf16.mxu0 0
        %642 = vmatpush2.bf16.msra.mxu0 0
        %643 = vmatprep.subr.bf16.mxu0 0
        %644 = vmatpush2.bf16.msra.mxu0 0
        %645 = vmatprep.subr.bf16.mxu0 0
        %646 = vmatpush2.bf16.msra.mxu0 0
        %647 = vmatprep.subr.bf16.mxu0 0
        %648 = vmatpush2.bf16.msra.mxu0 0
        %649 = vmatprep.subr.bf16.mxu0 0
        %650 = vmatpush2.bf16.msra.mxu0 0
        %651 = vmatprep.subr.bf16.mxu0 0
        %652 = vmatpush2.bf16.msra.mxu0 0
        %653 = vmatprep.subr.bf16.mxu0 0
        %654 = vmatpush2.bf16.msra.mxu0 0
        %655 = vmatprep.subr.bf16.mxu0 0
        %656 = vmatpush2.bf16.msra.mxu0 0
        %657 = vmatprep.mubr.bf16.mxu0 0
        %658 = vmatmul.mubr.bf16.gmra.mxu0 %v623
        %v659 = vpop.f32.mrf.mxu0
        %v660 = vadd.f32 %v608, %v659
        %v661 = vpop.f32.mrf.mxu0
        %v662 = vpop.f32.mrf.mxu0
        %v663 = vpop.f32.mrf.mxu0
        %664 = vdwg.mxu0
        %v665 = vld [vmem:[%s5] sm:$0xf]
        %v666 = vld [vmem:[%s5 + $0x4] sm:$0xf]
        %v667 = vld [vmem:[%s5 + $0x8] sm:$0xf]
        %v668 = vld [vmem:[%s5 + $0xc] sm:$0xf]
        %v669 = vld [vmem:[%s6] sm:$0x1]
        %v671 = vlaneseq
        %v672 = vshrl.u32 %v671, 7
        %v673 = vsub.s32 0, %v672
        %v674 = vrot.slane %v669, %v673
        %v680 = vunpack.c.l.b16 %v665
        %v681 = vunpack.c.l.b16 %v666
        %v682 = vunpack.c.l.b16 %v667
        %v683 = vunpack.c.l.b16 %v668
        %v684 = vpack.c.b16 %v681, %v680
        %v685 = vpack.c.b16 %v683, %v682
        %688 = vmatprep.subr.bf16.mxu0 0
        %689 = vmatpush1.bf16.msra.mxu0 0
        %690 = vmatprep.subr.bf16.mxu0 0
        %691 = vmatpush1.bf16.msra.mxu0 0
        %692 = vmatprep.subr.bf16.mxu0 0
        %693 = vmatpush1.bf16.msra.mxu0 0
        %694 = vmatprep.subr.bf16.mxu0 0
        %695 = vmatpush1.bf16.msra.mxu0 0
        %696 = vmatprep.subr.bf16.mxu0 0
        %697 = vmatpush1.bf16.msra.mxu0 0
        %698 = vmatprep.subr.bf16.mxu0 0
        %699 = vmatpush1.bf16.msra.mxu0 0
        %700 = vmatprep.subr.bf16.mxu0 0
        %701 = vmatpush1.bf16.msra.mxu0 %v685
        %702 = vmatprep.subr.bf16.mxu0 0
        %703 = vmatpush1.bf16.msra.mxu0 %v684
        %704 = vmatprep.subr.bf16.mxu0 0
        %705 = vmatpush2.bf16.msra.mxu0 0
        %706 = vmatprep.subr.bf16.mxu0 0
        %707 = vmatpush2.bf16.msra.mxu0 0
        %708 = vmatprep.subr.bf16.mxu0 0
        %709 = vmatpush2.bf16.msra.mxu0 0
        %710 = vmatprep.subr.bf16.mxu0 0
        %711 = vmatpush2.bf16.msra.mxu0 0
        %712 = vmatprep.subr.bf16.mxu0 0
        %713 = vmatpush2.bf16.msra.mxu0 0
        %714 = vmatprep.subr.bf16.mxu0 0
        %715 = vmatpush2.bf16.msra.mxu0 0
        %716 = vmatprep.subr.bf16.mxu0 0
        %717 = vmatpush2.bf16.msra.mxu0 0
        %718 = vmatprep.subr.bf16.mxu0 0
        %719 = vmatpush2.bf16.msra.mxu0 0
        %720 = vmatprep.mubr.bf16.mxu0 0
        %721 = vmatmul.mubr.bf16.gmra.mxu0 %v623
        %v722 = vpop.f32.mrf.mxu0
        %v723 = vadd.f32 %v674, %v722
        %v724 = vpop.f32.mrf.mxu0
        %v725 = vpop.f32.mrf.mxu0
        %v726 = vpop.f32.mrf.mxu0
        %727 = vdwg.mxu0
        %v728 = vld [vmem:[%s7] sm:$0xf]
        %v729 = vld [vmem:[%s7 + $0x4] sm:$0xf]
        %v730 = vld [vmem:[%s7 + $0x8] sm:$0xf]
        %v731 = vld [vmem:[%s7 + $0xc] sm:$0xf]
        %v732 = vld [vmem:[%s8] sm:$0x1]
        %v734 = vlaneseq
        %v735 = vshrl.u32 %v734, 7
        %v736 = vsub.s32 0, %v735
        %v737 = vrot.slane %v732, %v736
        %v743 = vunpack.c.l.b16 %v728
        %v744 = vunpack.c.l.b16 %v729
        %v745 = vunpack.c.l.b16 %v730
        %v746 = vunpack.c.l.b16 %v731
        %v747 = vpack.c.b16 %v744, %v743
        %v748 = vpack.c.b16 %v746, %v745
        %751 = vmatprep.subr.bf16.mxu0 0
        %752 = vmatpush1.bf16.msra.mxu0 0
        %753 = vmatprep.subr.bf16.mxu0 0
        %754 = vmatpush1.bf16.msra.mxu0 0
        %755 = vmatprep.subr.bf16.mxu0 0
        %756 = vmatpush1.bf16.msra.mxu0 0
        %757 = vmatprep.subr.bf16.mxu0 0
        %758 = vmatpush1.bf16.msra.mxu0 0
        %759 = vmatprep.subr.bf16.mxu0 0
        %760 = vmatpush1.bf16.msra.mxu0 0
        %761 = vmatprep.subr.bf16.mxu0 0
        %762 = vmatpush1.bf16.msra.mxu0 0
        %763 = vmatprep.subr.bf16.mxu0 0
        %764 = vmatpush1.bf16.msra.mxu0 %v748
        %765 = vmatprep.subr.bf16.mxu0 0
        %766 = vmatpush1.bf16.msra.mxu0 %v747
        %767 = vmatprep.subr.bf16.mxu0 0
        %768 = vmatpush2.bf16.msra.mxu0 0
        %769 = vmatprep.subr.bf16.mxu0 0
        %770 = vmatpush2.bf16.msra.mxu0 0
        %771 = vmatprep.subr.bf16.mxu0 0
        %772 = vmatpush2.bf16.msra.mxu0 0
        %773 = vmatprep.subr.bf16.mxu0 0
        %774 = vmatpush2.bf16.msra.mxu0 0
        %775 = vmatprep.subr.bf16.mxu0 0
        %776 = vmatpush2.bf16.msra.mxu0 0
        %777 = vmatprep.subr.bf16.mxu0 0
        %778 = vmatpush2.bf16.msra.mxu0 0
        %779 = vmatprep.subr.bf16.mxu0 0
        %780 = vmatpush2.bf16.msra.mxu0 0
        %781 = vmatprep.subr.bf16.mxu0 0
        %782 = vmatpush2.bf16.msra.mxu0 0
        %783 = vmatprep.mubr.bf16.mxu0 0
        %784 = vmatmul.mubr.bf16.gmra.mxu0 %v623
        %v785 = vpop.f32.mrf.mxu0
        %v786 = vadd.f32 %v737, %v785
        %v787 = vpop.f32.mrf.mxu0
        %v788 = vpop.f32.mrf.mxu0
        %v789 = vpop.f32.mrf.mxu0
        %790 = vdwg.mxu0
        %v791 = vpack.c.bf16 %v660, %v660
        %v792 = vpack.c.bf16 %v723, %v723
        %v793 = vpack.c.bf16 %v786, %v786
        %vm794 = vcmask 64512
        %v796 = vsel %vm794, %v791, 0
        %v799 = vsel %vm794, %v792, 0
        %801 = vmatprep.subr.bf16.mxu0 0
        %802 = vmatpush1.bf16.xpose.msra.mxu0 0
        %803 = vmatprep.subr.bf16.mxu0 0
        %804 = vmatpush1.bf16.xpose.msra.mxu0 0
        %805 = vmatprep.subr.bf16.mxu0 0
        %806 = vmatpush1.bf16.xpose.msra.mxu0 0
        %807 = vmatprep.subr.bf16.mxu0 0
        %808 = vmatpush1.bf16.xpose.msra.mxu0 0
        %809 = vmatprep.subr.bf16.mxu0 0
        %810 = vmatpush1.bf16.xpose.msra.mxu0 0
        %811 = vmatprep.subr.bf16.mxu0 0
        %812 = vmatpush1.bf16.xpose.msra.mxu0 0
        %813 = vmatprep.subr.bf16.mxu0 0
        %814 = vmatpush1.bf16.xpose.msra.mxu0 0
        %815 = vmatprep.subr.bf16.mxu0 0
        %816 = vmatpush1.bf16.xpose.msra.mxu0 %v799
        %817 = vmatprep.subr.bf16.mxu0 0
        %818 = vmatpush2.bf16.xpose.msra.mxu0 0
        %819 = vmatprep.subr.bf16.mxu0 0
        %820 = vmatpush2.bf16.xpose.msra.mxu0 0
        %821 = vmatprep.subr.bf16.mxu0 0
        %822 = vmatpush2.bf16.xpose.msra.mxu0 0
        %823 = vmatprep.subr.bf16.mxu0 0
        %824 = vmatpush2.bf16.xpose.msra.mxu0 0
        %825 = vmatprep.subr.bf16.mxu0 0
        %826 = vmatpush2.bf16.xpose.msra.mxu0 0
        %827 = vmatprep.subr.bf16.mxu0 0
        %828 = vmatpush2.bf16.xpose.msra.mxu0 0
        %829 = vmatprep.subr.bf16.mxu0 0
        %830 = vmatpush2.bf16.xpose.msra.mxu0 0
        %831 = vmatprep.subr.bf16.mxu0 0
        %832 = vmatpush2.bf16.xpose.msra.mxu0 0
        %833 = vmatprep.mubr.bf16.mxu0 0
        %834 = vmatmul.mubr.bf16.gmra.mxu0 %v796
        %v835 = vpop.f32.mrf.mxu0
        %v836 = vadd.f32 %v566, %v835
        %v837 = vpop.f32.mrf.mxu0
        %v838 = vpop.f32.mrf.mxu0
        %v839 = vpop.f32.mrf.mxu0
        %840 = vdwg.mxu0
        %v841 = vsel %vm794, %v836, -inf
        %842 = vmax.xlane.f32.xlu0 %v841
        %v843 = vpop.xlane.xlu0 %842
        %v844 = vsub.f32 %v836, %v843
        %v845 = vmul.f32 %v844, 1.442695
        %v846 = vpow.pop %v845
        %v847 = vsel %vm794, %v846, 0.0
        %848 = vadd.xlane.f32.xlu0 %v847
        %v849 = vpop.xlane.xlu0 %848
        %v850 = vpack.c.bf16 %v846, %v846
        %v852 = vsel %vm794, %v850, 0
        %vm854 = vcmask 1043456
        %v856 = vsel %vm854, %v793, 0
        %858 = vmatprep.subr.bf16.mxu0 0
        %859 = vmatpush1.bf16.msra.mxu0 0
        %860 = vmatprep.subr.bf16.mxu0 0
        %861 = vmatpush1.bf16.msra.mxu0 0
        %862 = vmatprep.subr.bf16.mxu0 0
        %863 = vmatpush1.bf16.msra.mxu0 0
        %864 = vmatprep.subr.bf16.mxu0 0
        %865 = vmatpush1.bf16.msra.mxu0 0
        %866 = vmatprep.subr.bf16.mxu0 0
        %867 = vmatpush1.bf16.msra.mxu0 0
        %868 = vmatprep.subr.bf16.mxu0 0
        %869 = vmatpush1.bf16.msra.mxu0 0
        %870 = vmatprep.subr.bf16.mxu0 0
        %871 = vmatpush1.bf16.msra.mxu0 0
        %872 = vmatprep.subr.bf16.mxu0 0
        %873 = vmatpush1.bf16.msra.mxu0 %v856
        %874 = vmatprep.subr.bf16.mxu0 0
        %875 = vmatpush2.bf16.msra.mxu0 0
        %876 = vmatprep.subr.bf16.mxu0 0
        %877 = vmatpush2.bf16.msra.mxu0 0
        %878 = vmatprep.subr.bf16.mxu0 0
        %879 = vmatpush2.bf16.msra.mxu0 0
        %880 = vmatprep.subr.bf16.mxu0 0
        %881 = vmatpush2.bf16.msra.mxu0 0
        %882 = vmatprep.subr.bf16.mxu0 0
        %883 = vmatpush2.bf16.msra.mxu0 0
        %884 = vmatprep.subr.bf16.mxu0 0
        %885 = vmatpush2.bf16.msra.mxu0 0
        %886 = vmatprep.subr.bf16.mxu0 0
        %887 = vmatpush2.bf16.msra.mxu0 0
        %888 = vmatprep.subr.bf16.mxu0 0
        %889 = vmatpush2.bf16.msra.mxu0 0
        %890 = vmatprep.mubr.bf16.mxu0 0
        %891 = vmatmul.mubr.bf16.gmra.mxu0 %v852
        %v892 = vpop.f32.mrf.mxu0
        %v893 = vadd.f32 0.0, %v892
        %v894 = vpop.f32.mrf.mxu0
        %v895 = vpop.f32.mrf.mxu0
        %v896 = vpop.f32.mrf.mxu0
        %897 = vdwg.mxu0
        %v898 = vrcp.pop %v849
        %v899 = vmul.f32 %v849, %v898
        %v900 = vsub.f32 2.0, %v899
        %v901 = vmul.f32 %v898, %v900
        %v902 = vmul.f32 %v893, %v901
        %904 = vrot.lane.b32.xlu0 %v791, 120
        %v905 = vpop.permute.xlu0 %904
        %907 = vrot.lane.b32.xlu0 %v792, 120
        %v908 = vpop.permute.xlu0 %907
        %v910 = vsel %vm794, %v905, 0
        %v913 = vsel %vm794, %v908, 0
        %915 = vmatprep.subr.bf16.mxu0 0
        %916 = vmatpush1.bf16.xpose.msra.mxu0 0
        %917 = vmatprep.subr.bf16.mxu0 0
        %918 = vmatpush1.bf16.xpose.msra.mxu0 0
        %919 = vmatprep.subr.bf16.mxu0 0
        %920 = vmatpush1.bf16.xpose.msra.mxu0 0
        %921 = vmatprep.subr.bf16.mxu0 0
        %922 = vmatpush1.bf16.xpose.msra.mxu0 0
        %923 = vmatprep.subr.bf16.mxu0 0
        %924 = vmatpush1.bf16.xpose.msra.mxu0 0
        %925 = vmatprep.subr.bf16.mxu0 0
        %926 = vmatpush1.bf16.xpose.msra.mxu0 0
        %927 = vmatprep.subr.bf16.mxu0 0
        %928 = vmatpush1.bf16.xpose.msra.mxu0 0
        %929 = vmatprep.subr.bf16.mxu0 0
        %930 = vmatpush1.bf16.xpose.msra.mxu0 %v913
        %931 = vmatprep.subr.bf16.mxu0 0
        %932 = vmatpush2.bf16.xpose.msra.mxu0 0
        %933 = vmatprep.subr.bf16.mxu0 0
        %934 = vmatpush2.bf16.xpose.msra.mxu0 0
        %935 = vmatprep.subr.bf16.mxu0 0
        %936 = vmatpush2.bf16.xpose.msra.mxu0 0
        %937 = vmatprep.subr.bf16.mxu0 0
        %938 = vmatpush2.bf16.xpose.msra.mxu0 0
        %939 = vmatprep.subr.bf16.mxu0 0
        %940 = vmatpush2.bf16.xpose.msra.mxu0 0
        %941 = vmatprep.subr.bf16.mxu0 0
        %942 = vmatpush2.bf16.xpose.msra.mxu0 0
        %943 = vmatprep.subr.bf16.mxu0 0
        %944 = vmatpush2.bf16.xpose.msra.mxu0 0
        %945 = vmatprep.subr.bf16.mxu0 0
        %946 = vmatpush2.bf16.xpose.msra.mxu0 0
        %947 = vmatprep.mubr.bf16.mxu0 0
        %948 = vmatmul.mubr.bf16.gmra.mxu0 %v910
        %v949 = vpop.f32.mrf.mxu0
        %v950 = vadd.f32 %v566, %v949
        %v951 = vpop.f32.mrf.mxu0
        %v952 = vpop.f32.mrf.mxu0
        %v953 = vpop.f32.mrf.mxu0
        %954 = vdwg.mxu0
        %v955 = vsel %vm794, %v950, -inf
        %956 = vmax.xlane.f32.xlu0 %v955
        %v957 = vpop.xlane.xlu0 %956
        %v958 = vsub.f32 %v950, %v957
        %v959 = vmul.f32 %v958, 1.442695
        %v960 = vpow.pop %v959
        %v961 = vsel %vm794, %v960, 0.0
        %962 = vadd.xlane.f32.xlu0 %v961
        %v963 = vpop.xlane.xlu0 %962
        %v964 = vpack.c.bf16 %v960, %v960
        %966 = vrot.lane.b32.xlu0 %v793, 120
        %v967 = vpop.permute.xlu0 %966
        %v969 = vsel %vm794, %v964, 0
        %v972 = vsel %vm854, %v967, 0
        %974 = vmatprep.subr.bf16.mxu0 0
        %975 = vmatpush1.bf16.msra.mxu0 0
        %976 = vmatprep.subr.bf16.mxu0 0
        %977 = vmatpush1.bf16.msra.mxu0 0
        %978 = vmatprep.subr.bf16.mxu0 0
        %979 = vmatpush1.bf16.msra.mxu0 0
        %980 = vmatprep.subr.bf16.mxu0 0
        %981 = vmatpush1.bf16.msra.mxu0 0
        %982 = vmatprep.subr.bf16.mxu0 0
        %983 = vmatpush1.bf16.msra.mxu0 0
        %984 = vmatprep.subr.bf16.mxu0 0
        %985 = vmatpush1.bf16.msra.mxu0 0
        %986 = vmatprep.subr.bf16.mxu0 0
        %987 = vmatpush1.bf16.msra.mxu0 0
        %988 = vmatprep.subr.bf16.mxu0 0
        %989 = vmatpush1.bf16.msra.mxu0 %v972
        %990 = vmatprep.subr.bf16.mxu0 0
        %991 = vmatpush2.bf16.msra.mxu0 0
        %992 = vmatprep.subr.bf16.mxu0 0
        %993 = vmatpush2.bf16.msra.mxu0 0
        %994 = vmatprep.subr.bf16.mxu0 0
        %995 = vmatpush2.bf16.msra.mxu0 0
        %996 = vmatprep.subr.bf16.mxu0 0
        %997 = vmatpush2.bf16.msra.mxu0 0
        %998 = vmatprep.subr.bf16.mxu0 0
        %999 = vmatpush2.bf16.msra.mxu0 0
        %1000 = vmatprep.subr.bf16.mxu0 0
        %1001 = vmatpush2.bf16.msra.mxu0 0
        %1002 = vmatprep.subr.bf16.mxu0 0
        %1003 = vmatpush2.bf16.msra.mxu0 0
        %1004 = vmatprep.subr.bf16.mxu0 0
        %1005 = vmatpush2.bf16.msra.mxu0 0
        %1006 = vmatprep.mubr.bf16.mxu0 0
        %1007 = vmatmul.mubr.bf16.gmra.mxu0 %v969
        %v1008 = vpop.f32.mrf.mxu0
        %v1009 = vadd.f32 0.0, %v1008
        %v1010 = vpop.f32.mrf.mxu0
        %v1011 = vpop.f32.mrf.mxu0
        %v1012 = vpop.f32.mrf.mxu0
        %1013 = vdwg.mxu0
        %v1014 = vrcp.pop %v963
        %v1015 = vmul.f32 %v963, %v1014
        %v1016 = vsub.f32 2.0, %v1015
        %v1017 = vmul.f32 %v1014, %v1016
        %v1018 = vmul.f32 %v1009, %v1017
        %1019 = vrot.lane.b32.xlu0 %v791, 112
        %v1020 = vpop.permute.xlu0 %1019
        %1021 = vrot.lane.b32.xlu0 %v792, 112
        %v1022 = vpop.permute.xlu0 %1021
        %v1024 = vsel %vm794, %v1020, 0
        %v1027 = vsel %vm794, %v1022, 0
        %1029 = vmatprep.subr.bf16.mxu0 0
        %1030 = vmatpush1.bf16.xpose.msra.mxu0 0
        %1031 = vmatprep.subr.bf16.mxu0 0
        %1032 = vmatpush1.bf16.xpose.msra.mxu0 0
        %1033 = vmatprep.subr.bf16.mxu0 0
        %1034 = vmatpush1.bf16.xpose.msra.mxu0 0
        %1035 = vmatprep.subr.bf16.mxu0 0
        %1036 = vmatpush1.bf16.xpose.msra.mxu0 0
        %1037 = vmatprep.subr.bf16.mxu0 0
        %1038 = vmatpush1.bf16.xpose.msra.mxu0 0
        %1039 = vmatprep.subr.bf16.mxu0 0
        %1040 = vmatpush1.bf16.xpose.msra.mxu0 0
        %1041 = vmatprep.subr.bf16.mxu0 0
        %1042 = vmatpush1.bf16.xpose.msra.mxu0 0
        %1043 = vmatprep.subr.bf16.mxu0 0
        %1044 = vmatpush1.bf16.xpose.msra.mxu0 %v1027
        %1045 = vmatprep.subr.bf16.mxu0 0
        %1046 = vmatpush2.bf16.xpose.msra.mxu0 0
        %1047 = vmatprep.subr.bf16.mxu0 0
        %1048 = vmatpush2.bf16.xpose.msra.mxu0 0
        %1049 = vmatprep.subr.bf16.mxu0 0
        %1050 = vmatpush2.bf16.xpose.msra.mxu0 0
        %1051 = vmatprep.subr.bf16.mxu0 0
        %1052 = vmatpush2.bf16.xpose.msra.mxu0 0
        %1053 = vmatprep.subr.bf16.mxu0 0
        %1054 = vmatpush2.bf16.xpose.msra.mxu0 0
        %1055 = vmatprep.subr.bf16.mxu0 0
        %1056 = vmatpush2.bf16.xpose.msra.mxu0 0
        %1057 = vmatprep.subr.bf16.mxu0 0
        %1058 = vmatpush2.bf16.xpose.msra.mxu0 0
        %1059 = vmatprep.subr.bf16.mxu0 0
        %1060 = vmatpush2.bf16.xpose.msra.mxu0 0
        %1061 = vmatprep.mubr.bf16.mxu0 0
        %1062 = vmatmul.mubr.bf16.gmra.mxu0 %v1024
        %v1063 = vpop.f32.mrf.mxu0
        %v1064 = vadd.f32 %v566, %v1063
        %v1065 = vpop.f32.mrf.mxu0
        %v1066 = vpop.f32.mrf.mxu0
        %v1067 = vpop.f32.mrf.mxu0
        %1068 = vdwg.mxu0
        %v1069 = vsel %vm794, %v1064, -inf
        %1070 = vmax.xlane.f32.xlu0 %v1069
        %v1071 = vpop.xlane.xlu0 %1070
        %v1072 = vsub.f32 %v1064, %v1071
        %v1073 = vmul.f32 %v1072, 1.442695
        %v1074 = vpow.pop %v1073
        %v1075 = vsel %vm794, %v1074, 0.0
        %1076 = vadd.xlane.f32.xlu0 %v1075
        %v1077 = vpop.xlane.xlu0 %1076
        %v1078 = vpack.c.bf16 %v1074, %v1074
        %1079 = vrot.lane.b32.xlu0 %v793, 112
        %v1080 = vpop.permute.xlu0 %1079
        %v1082 = vsel %vm794, %v1078, 0
        %v1085 = vsel %vm854, %v1080, 0
        %1087 = vmatprep.subr.bf16.mxu0 0
        %1088 = vmatpush1.bf16.msra.mxu0 0
        %1089 = vmatprep.subr.bf16.mxu0 0
        %1090 = vmatpush1.bf16.msra.mxu0 0
        %1091 = vmatprep.subr.bf16.mxu0 0
        %1092 = vmatpush1.bf16.msra.mxu0 0
        %1093 = vmatprep.subr.bf16.mxu0 0
        %1094 = vmatpush1.bf16.msra.mxu0 0
        %1095 = vmatprep.subr.bf16.mxu0 0
        %1096 = vmatpush1.bf16.msra.mxu0 0
        %1097 = vmatprep.subr.bf16.mxu0 0
        %1098 = vmatpush1.bf16.msra.mxu0 0
        %1099 = vmatprep.subr.bf16.mxu0 0
        %1100 = vmatpush1.bf16.msra.mxu0 0
        %1101 = vmatprep.subr.bf16.mxu0 0
        %1102 = vmatpush1.bf16.msra.mxu0 %v1085
        %1103 = vmatprep.subr.bf16.mxu0 0
        %1104 = vmatpush2.bf16.msra.mxu0 0
        %1105 = vmatprep.subr.bf16.mxu0 0
        %1106 = vmatpush2.bf16.msra.mxu0 0
        %1107 = vmatprep.subr.bf16.mxu0 0
        %1108 = vmatpush2.bf16.msra.mxu0 0
        %1109 = vmatprep.subr.bf16.mxu0 0
        %1110 = vmatpush2.bf16.msra.mxu0 0
        %1111 = vmatprep.subr.bf16.mxu0 0
        %1112 = vmatpush2.bf16.msra.mxu0 0
        %1113 = vmatprep.subr.bf16.mxu0 0
        %1114 = vmatpush2.bf16.msra.mxu0 0
        %1115 = vmatprep.subr.bf16.mxu0 0
        %1116 = vmatpush2.bf16.msra.mxu0 0
        %1117 = vmatprep.subr.bf16.mxu0 0
        %1118 = vmatpush2.bf16.msra.mxu0 0
        %1119 = vmatprep.mubr.bf16.mxu0 0
        %1120 = vmatmul.mubr.bf16.gmra.mxu0 %v1082
        %v1121 = vpop.f32.mrf.mxu0
        %v1122 = vadd.f32 0.0, %v1121
        %v1123 = vpop.f32.mrf.mxu0
        %v1124 = vpop.f32.mrf.mxu0
        %v1125 = vpop.f32.mrf.mxu0
        %1126 = vdwg.mxu0
        %v1127 = vrcp.pop %v1077
        %v1128 = vmul.f32 %v1077, %v1127
        %v1129 = vsub.f32 2.0, %v1128
        %v1130 = vmul.f32 %v1127, %v1129
        %v1131 = vmul.f32 %v1122, %v1130
        %1132 = vrot.lane.b32.xlu0 %v791, 104
        %v1133 = vpop.permute.xlu0 %1132
        %1134 = vrot.lane.b32.xlu0 %v792, 104
        %v1135 = vpop.permute.xlu0 %1134
        %v1137 = vsel %vm794, %v1133, 0
        %v1140 = vsel %vm794, %v1135, 0
        %1142 = vmatprep.subr.bf16.mxu0 0
        %1143 = vmatpush1.bf16.xpose.msra.mxu0 0
        %1144 = vmatprep.subr.bf16.mxu0 0
        %1145 = vmatpush1.bf16.xpose.msra.mxu0 0
        %1146 = vmatprep.subr.bf16.mxu0 0
        %1147 = vmatpush1.bf16.xpose.msra.mxu0 0
        %1148 = vmatprep.subr.bf16.mxu0 0
        %1149 = vmatpush1.bf16.xpose.msra.mxu0 0
        %1150 = vmatprep.subr.bf16.mxu0 0
        %1151 = vmatpush1.bf16.xpose.msra.mxu0 0
        %1152 = vmatprep.subr.bf16.mxu0 0
        %1153 = vmatpush1.bf16.xpose.msra.mxu0 0
        %1154 = vmatprep.subr.bf16.mxu0 0
        %1155 = vmatpush1.bf16.xpose.msra.mxu0 0
        %1156 = vmatprep.subr.bf16.mxu0 0
        %1157 = vmatpush1.bf16.xpose.msra.mxu0 %v1140
        %1158 = vmatprep.subr.bf16.mxu0 0
        %1159 = vmatpush2.bf16.xpose.msra.mxu0 0
        %1160 = vmatprep.subr.bf16.mxu0 0
        %1161 = vmatpush2.bf16.xpose.msra.mxu0 0
        %1162 = vmatprep.subr.bf16.mxu0 0
        %1163 = vmatpush2.bf16.xpose.msra.mxu0 0
        %1164 = vmatprep.subr.bf16.mxu0 0
        %1165 = vmatpush2.bf16.xpose.msra.mxu0 0
        %1166 = vmatprep.subr.bf16.mxu0 0
        %1167 = vmatpush2.bf16.xpose.msra.mxu0 0
        %1168 = vmatprep.subr.bf16.mxu0 0
        %1169 = vmatpush2.bf16.xpose.msra.mxu0 0
        %1170 = vmatprep.subr.bf16.mxu0 0
        %1171 = vmatpush2.bf16.xpose.msra.mxu0 0
        %1172 = vmatprep.subr.bf16.mxu0 0
        %1173 = vmatpush2.bf16.xpose.msra.mxu0 0
        %1174 = vmatprep.mubr.bf16.mxu0 0
        %1175 = vmatmul.mubr.bf16.gmra.mxu0 %v1137
        %v1176 = vpop.f32.mrf.mxu0
        %v1177 = vadd.f32 %v566, %v1176
        %v1178 = vpop.f32.mrf.mxu0
        %v1179 = vpop.f32.mrf.mxu0
        %v1180 = vpop.f32.mrf.mxu0
        %1181 = vdwg.mxu0
        %v1182 = vsel %vm794, %v1177, -inf
        %1183 = vmax.xlane.f32.xlu0 %v1182
        %v1184 = vpop.xlane.xlu0 %1183
        %v1185 = vsub.f32 %v1177, %v1184
        %v1186 = vmul.f32 %v1185, 1.442695
        %v1187 = vpow.pop %v1186
        %v1188 = vsel %vm794, %v1187, 0.0
        %1189 = vadd.xlane.f32.xlu0 %v1188
        %v1190 = vpop.xlane.xlu0 %1189
        %v1191 = vpack.c.bf16 %v1187, %v1187
        %1192 = vrot.lane.b32.xlu0 %v793, 104
        %v1193 = vpop.permute.xlu0 %1192
        %v1195 = vsel %vm794, %v1191, 0
        %v1198 = vsel %vm854, %v1193, 0
        %1200 = vmatprep.subr.bf16.mxu0 0
        %1201 = vmatpush1.bf16.msra.mxu0 0
        %1202 = vmatprep.subr.bf16.mxu0 0
        %1203 = vmatpush1.bf16.msra.mxu0 0
        %1204 = vmatprep.subr.bf16.mxu0 0
        %1205 = vmatpush1.bf16.msra.mxu0 0
        %1206 = vmatprep.subr.bf16.mxu0 0
        %1207 = vmatpush1.bf16.msra.mxu0 0
        %1208 = vmatprep.subr.bf16.mxu0 0
        %1209 = vmatpush1.bf16.msra.mxu0 0
        %1210 = vmatprep.subr.bf16.mxu0 0
        %1211 = vmatpush1.bf16.msra.mxu0 0
        %1212 = vmatprep.subr.bf16.mxu0 0
        %1213 = vmatpush1.bf16.msra.mxu0 0
        %1214 = vmatprep.subr.bf16.mxu0 0
        %1215 = vmatpush1.bf16.msra.mxu0 %v1198
        %1216 = vmatprep.subr.bf16.mxu0 0
        %1217 = vmatpush2.bf16.msra.mxu0 0
        %1218 = vmatprep.subr.bf16.mxu0 0
        %1219 = vmatpush2.bf16.msra.mxu0 0
        %1220 = vmatprep.subr.bf16.mxu0 0
        %1221 = vmatpush2.bf16.msra.mxu0 0
        %1222 = vmatprep.subr.bf16.mxu0 0
        %1223 = vmatpush2.bf16.msra.mxu0 0
        %1224 = vmatprep.subr.bf16.mxu0 0
        %1225 = vmatpush2.bf16.msra.mxu0 0
        %1226 = vmatprep.subr.bf16.mxu0 0
        %1227 = vmatpush2.bf16.msra.mxu0 0
        %1228 = vmatprep.subr.bf16.mxu0 0
        %1229 = vmatpush2.bf16.msra.mxu0 0
        %1230 = vmatprep.subr.bf16.mxu0 0
        %1231 = vmatpush2.bf16.msra.mxu0 0
        %1232 = vmatprep.mubr.bf16.mxu0 0
        %1233 = vmatmul.mubr.bf16.gmra.mxu0 %v1195
        %v1234 = vpop.f32.mrf.mxu0
        %v1235 = vadd.f32 0.0, %v1234
        %v1236 = vpop.f32.mrf.mxu0
        %v1237 = vpop.f32.mrf.mxu0
        %v1238 = vpop.f32.mrf.mxu0
        %1239 = vdwg.mxu0
        %v1240 = vrcp.pop %v1190
        %v1241 = vmul.f32 %v1190, %v1240
        %v1242 = vsub.f32 2.0, %v1241
        %v1243 = vmul.f32 %v1240, %v1242
        %v1244 = vmul.f32 %v1235, %v1243
        %1246 = vrot.lane.b32.xlu0 %v1018, 8
        %v1247 = vpop.permute.xlu0 %1246
        %1250 = vrot.lane.b32.xlu0 %v1131, 16
        %v1251 = vpop.permute.xlu0 %1250
        %1254 = vrot.lane.b32.xlu0 %v1244, 24
        %v1255 = vpop.permute.xlu0 %1254
        %v1257 = vsel %vm794, %v902, %v1247
        %vm1258 = vcmask 130048
        %v1259 = vsel %vm1258, %v1257, %v1251
        %vm1260 = vcmask 195584
        %v1261 = vsel %vm1260, %v1259, %v1255
        %v1262 = vpack.c.bf16 %v1261, %v1261
        %v1263 = vld [vmem:[%s9] sm:$0xf]
        %v1264 = vld [vmem:[%s9 + $0x4] sm:$0xf]
        %v1265 = vld [vmem:[%s9 + $0x8] sm:$0xf]
        %v1266 = vld [vmem:[%s9 + $0xc] sm:$0xf]
        %v1267 = vld [vmem:[%s10] sm:$0x1]
        %v1269 = vlaneseq
        %v1270 = vshrl.u32 %v1269, 7
        %v1271 = vsub.s32 0, %v1270
        %v1272 = vrot.slane %v1267, %v1271
        %v1278 = vunpack.c.l.b16 %v1263
        %v1279 = vunpack.c.l.b16 %v1264
        %v1280 = vunpack.c.l.b16 %v1265
        %v1281 = vunpack.c.l.b16 %v1266
        %v1282 = vpack.c.b16 %v1279, %v1278
        %v1283 = vpack.c.b16 %v1281, %v1280
        %v1287 = vsel %vm569, %v1262, 0
        %1289 = vmatprep.subr.bf16.mxu0 0
        %1290 = vmatpush1.bf16.msra.mxu0 0
        %1291 = vmatprep.subr.bf16.mxu0 0
        %1292 = vmatpush1.bf16.msra.mxu0 0
        %1293 = vmatprep.subr.bf16.mxu0 0
        %1294 = vmatpush1.bf16.msra.mxu0 0
        %1295 = vmatprep.subr.bf16.mxu0 0
        %1296 = vmatpush1.bf16.msra.mxu0 0
        %1297 = vmatprep.subr.bf16.mxu0 0
        %1298 = vmatpush1.bf16.msra.mxu0 0
        %1299 = vmatprep.subr.bf16.mxu0 0
        %1300 = vmatpush1.bf16.msra.mxu0 0
        %1301 = vmatprep.subr.bf16.mxu0 0
        %1302 = vmatpush1.bf16.msra.mxu0 %v1283
        %1303 = vmatprep.subr.bf16.mxu0 0
        %1304 = vmatpush1.bf16.msra.mxu0 %v1282
        %1305 = vmatprep.subr.bf16.mxu0 0
        %1306 = vmatpush2.bf16.msra.mxu0 0
        %1307 = vmatprep.subr.bf16.mxu0 0
        %1308 = vmatpush2.bf16.msra.mxu0 0
        %1309 = vmatprep.subr.bf16.mxu0 0
        %1310 = vmatpush2.bf16.msra.mxu0 0
        %1311 = vmatprep.subr.bf16.mxu0 0
        %1312 = vmatpush2.bf16.msra.mxu0 0
        %1313 = vmatprep.subr.bf16.mxu0 0
        %1314 = vmatpush2.bf16.msra.mxu0 0
        %1315 = vmatprep.subr.bf16.mxu0 0
        %1316 = vmatpush2.bf16.msra.mxu0 0
        %1317 = vmatprep.subr.bf16.mxu0 0
        %1318 = vmatpush2.bf16.msra.mxu0 0
        %1319 = vmatprep.subr.bf16.mxu0 0
        %1320 = vmatpush2.bf16.msra.mxu0 0
        %1321 = vmatprep.mubr.bf16.mxu0 0
        %1322 = vmatmul.mubr.bf16.gmra.mxu0 %v1287
        %v1323 = vpop.f32.mrf.mxu0
        %v1324 = vadd.f32 %v1272, %v1323
        %v1325 = vpop.f32.mrf.mxu0
        %v1326 = vpop.f32.mrf.mxu0
        %v1327 = vpop.f32.mrf.mxu0
        %1328 = vdwg.mxu0
        %v1329 = vadd.f32 %v560, %v1324
        %v1330 = vld [vmem:[%s11] sm:$0x1]
        %v1331 = vld [vmem:[%s12] sm:$0x1]
        %v1332 = vsel %vm569, %v1329, 0.0
        %1333 = vadd.xlane.f32.xlu0 %v1332
        %v1334 = vpop.xlane.xlu0 %1333
        %v1335 = vmul.f32 %v1334, %v573
        %v1336 = vsub.f32 %v1329, %v1335
        %v1337 = vmul.f32 %v1336, %v1336
        %v1338 = vsel %vm569, %v1337, 0.0
        %1339 = vadd.xlane.f32.xlu0 %v1338
        %v1340 = vpop.xlane.xlu0 %1339
        %v1341 = vmul.f32 %v1340, %v573
        %v1342 = vadd.f32 %v1341, 1e-05
        %v1343 = vrsqrt.pop %v1342
        %v1344 = vmul.f32 %v1336, %v1343
        %v1346 = vlaneseq
        %v1347 = vshrl.u32 %v1346, 7
        %v1348 = vsub.s32 0, %v1347
        %v1349 = vrot.slane %v1330, %v1348
        %v1351 = vmul.f32 %v1344, %v1349
        %v1353 = vlaneseq
        %v1354 = vshrl.u32 %v1353, 7
        %v1355 = vsub.s32 0, %v1354
        %v1356 = vrot.slane %v1331, %v1355
        %v1358 = vadd.f32 %v1351, %v1356
        %v1359 = vpack.c.bf16 %v1358, %v1358
        %v1360 = vld [vmem:[#allocation2] sm:$0xf]
        %v1361 = vld [vmem:[#allocation2 + $0x4] sm:$0xf]
        %v1362 = vld [vmem:[#allocation2 + $0x8] sm:$0xf]
        %v1363 = vld [vmem:[#allocation2 + $0xc] sm:$0xf]
        %v1364 = vld [vmem:[%s14] sm:$0x1]
        %v1366 = vlaneseq
        %v1367 = vshrl.u32 %v1366, 7
        %v1368 = vsub.s32 0, %v1367
        %v1369 = vrot.slane %v1364, %v1368
        %v1375 = vunpack.c.l.b16 %v1360
        %v1376 = vunpack.c.l.b16 %v1361
        %v1377 = vunpack.c.l.b16 %v1362
        %v1378 = vunpack.c.l.b16 %v1363
        %v1379 = vpack.c.b16 %v1376, %v1375
        %v1380 = vpack.c.b16 %v1378, %v1377
        %v1384 = vsel %vm569, %v1359, 0
        %1386 = vmatprep.subr.bf16.mxu0 0
        %1387 = vmatpush1.bf16.msra.mxu0 0
        %1388 = vmatprep.subr.bf16.mxu0 0
        %1389 = vmatpush1.bf16.msra.mxu0 0
        %1390 = vmatprep.subr.bf16.mxu0 0
        %1391 = vmatpush1.bf16.msra.mxu0 0
        %1392 = vmatprep.subr.bf16.mxu0 0
        %1393 = vmatpush1.bf16.msra.mxu0 0
        %1394 = vmatprep.subr.bf16.mxu0 0
        %1395 = vmatpush1.bf16.msra.mxu0 0
        %1396 = vmatprep.subr.bf16.mxu0 0
        %1397 = vmatpush1.bf16.msra.mxu0 0
        %1398 = vmatprep.subr.bf16.mxu0 0
        %1399 = vmatpush1.bf16.msra.mxu0 %v1380
        %1400 = vmatprep.subr.bf16.mxu0 0
        %1401 = vmatpush1.bf16.msra.mxu0 %v1379
        %1402 = vmatprep.subr.bf16.mxu0 0
        %1403 = vmatpush2.bf16.msra.mxu0 0
        %1404 = vmatprep.subr.bf16.mxu0 0
        %1405 = vmatpush2.bf16.msra.mxu0 0
        %1406 = vmatprep.subr.bf16.mxu0 0
        %1407 = vmatpush2.bf16.msra.mxu0 0
        %1408 = vmatprep.subr.bf16.mxu0 0
        %1409 = vmatpush2.bf16.msra.mxu0 0
        %1410 = vmatprep.subr.bf16.mxu0 0
        %1411 = vmatpush2.bf16.msra.mxu0 0
        %1412 = vmatprep.subr.bf16.mxu0 0
        %1413 = vmatpush2.bf16.msra.mxu0 0
        %1414 = vmatprep.subr.bf16.mxu0 0
        %1415 = vmatpush2.bf16.msra.mxu0 0
        %1416 = vmatprep.subr.bf16.mxu0 0
        %1417 = vmatpush2.bf16.msra.mxu0 0
        %1418 = vmatprep.mubr.bf16.mxu0 0
        %1419 = vmatmul.mubr.bf16.gmra.mxu0 %v1384
        %v1420 = vpop.f32.mrf.mxu0
        %v1421 = vadd.f32 %v1369, %v1420
        %v1422 = vpop.f32.mrf.mxu0
        %v1423 = vpop.f32.mrf.mxu0
        %v1424 = vpop.f32.mrf.mxu0
        %1425 = vdwg.mxu0
        %v1426 = vmul.f32 %v1421, 0.5
        %v1427 = vmul.f32 %v1421, 0.70710677
        %vm1428 = vcmp.ge.f32.partialorder %v1427, 0.0
        %v1429 = vsel %vm1428, 1.0, -1.0
        %v1430 = vand.u32 2147483647, %v1427
        %v1431 = vmul.f32 %v1430, 0.3275911
        %v1432 = vadd.f32 %v1431, 1.0
        %v1433 = vrcp.pop %v1432
        %v1434 = vmul.f32 %v1432, %v1433
        %v1435 = vsub.f32 2.0, %v1434
        %v1436 = vmul.f32 %v1433, %v1435
        %v1437 = vmul.f32 %v1436, 1.0614054
        %v1438 = vadd.f32 %v1437, -1.4531521
        %v1439 = vmul.f32 %v1438, %v1436
        %v1440 = vadd.f32 %v1439, 1.4214138
        %v1441 = vmul.f32 %v1440, %v1436
        %v1442 = vadd.f32 %v1441, -0.28449672
        %v1443 = vmul.f32 %v1442, %v1436
        %v1444 = vadd.f32 %v1443, 0.2548296
        %v1445 = vmul.f32 %v1444, %v1436
        %v1446 = vsub.f32 0.0, %v1430
        %v1447 = vmul.f32 %v1446, %v1430
        %v1448 = vmul.f32 %v1447, 1.442695
        %v1449 = vpow.pop %v1448
        %v1450 = vmul.f32 %v1445, %v1449
        %v1451 = vsub.f32 1.0, %v1450
        %v1452 = vmul.f32 %v1429, %v1451
        %v1453 = vadd.f32 %v1452, 1.0
        %v1454 = vmul.f32 %v1426, %v1453
        %v1455 = vpack.c.bf16 %v1454, %v1454
        %v1456 = vld [vmem:[%s15] sm:$0xf]
        %v1457 = vld [vmem:[%s15 + $0x4] sm:$0xf]
        %v1458 = vld [vmem:[%s15 + $0x8] sm:$0xf]
        %v1459 = vld [vmem:[%s15 + $0xc] sm:$0xf]
        %v1460 = vld [vmem:[%s15 + $0x10] sm:$0xf]
        %v1461 = vld [vmem:[%s15 + $0x14] sm:$0xf]
        %v1462 = vld [vmem:[%s15 + $0x18] sm:$0xf]
        %v1463 = vld [vmem:[%s15 + $0x1c] sm:$0xf]
        %v1464 = vld [vmem:[%s15 + $0x20] sm:$0xf]
        %v1465 = vld [vmem:[%s15 + $0x24] sm:$0xf]
        %v1466 = vld [vmem:[%s15 + $0x28] sm:$0xf]
        %v1467 = vld [vmem:[%s15 + $0x2c] sm:$0xf]
        %v1468 = vld [vmem:[%s15 + $0x30] sm:$0xf]
        %v1469 = vld [vmem:[%s15 + $0x34] sm:$0xf]
        %v1470 = vld [vmem:[%s15 + $0x38] sm:$0xf]
        %v1471 = vld [vmem:[%s15 + $0x3c] sm:$0xf]
        %v1472 = vld [vmem:[%s16] sm:$0x1]
        %v1474 = vlaneseq
        %v1475 = vshrl.u32 %v1474, 7
        %v1476 = vsub.s32 0, %v1475
        %v1477 = vrot.slane %v1472, %v1476
        %v1495 = vunpack.c.l.b16 %v1456
        %v1496 = vunpack.c.l.b16 %v1457
        %v1497 = vunpack.c.l.b16 %v1458
        %v1498 = vunpack.c.l.b16 %v1459
        %v1499 = vunpack.c.l.b16 %v1460
        %v1500 = vunpack.c.l.b16 %v1461
        %v1501 = vunpack.c.l.b16 %v1462
        %v1502 = vunpack.c.l.b16 %v1463
        %v1503 = vunpack.c.l.b16 %v1464
        %v1504 = vunpack.c.l.b16 %v1465
        %v1505 = vunpack.c.l.b16 %v1466
        %v1506 = vunpack.c.l.b16 %v1467
        %v1507 = vunpack.c.l.b16 %v1468
        %v1508 = vunpack.c.l.b16 %v1469
        %v1509 = vunpack.c.l.b16 %v1470
        %v1510 = vunpack.c.l.b16 %v1471
        %v1511 = vpack.c.b16 %v1496, %v1495
        %v1512 = vpack.c.b16 %v1498, %v1497
        %v1513 = vpack.c.b16 %v1500, %v1499
        %v1514 = vpack.c.b16 %v1502, %v1501
        %v1515 = vpack.c.b16 %v1504, %v1503
        %v1516 = vpack.c.b16 %v1506, %v1505
        %v1517 = vpack.c.b16 %v1508, %v1507
        %v1518 = vpack.c.b16 %v1510, %v1509
        %1527 = vmatprep.subr.bf16.mxu0 0
        %1528 = vmatpush1.bf16.msra.mxu0 %v1518
        %1529 = vmatprep.subr.bf16.mxu0 0
        %1530 = vmatpush1.bf16.msra.mxu0 %v1517
        %1531 = vmatprep.subr.bf16.mxu0 0
        %1532 = vmatpush1.bf16.msra.mxu0 %v1516
        %1533 = vmatprep.subr.bf16.mxu0 0
        %1534 = vmatpush1.bf16.msra.mxu0 %v1515
        %1535 = vmatprep.subr.bf16.mxu0 0
        %1536 = vmatpush1.bf16.msra.mxu0 %v1514
        %1537 = vmatprep.subr.bf16.mxu0 0
        %1538 = vmatpush1.bf16.msra.mxu0 %v1513
        %1539 = vmatprep.subr.bf16.mxu0 0
        %1540 = vmatpush1.bf16.msra.mxu0 %v1512
        %1541 = vmatprep.subr.bf16.mxu0 0
        %1542 = vmatpush1.bf16.msra.mxu0 %v1511
        %1543 = vmatprep.subr.bf16.mxu0 0
        %1544 = vmatpush2.bf16.msra.mxu0 0
        %1545 = vmatprep.subr.bf16.mxu0 0
        %1546 = vmatpush2.bf16.msra.mxu0 0
        %1547 = vmatprep.subr.bf16.mxu0 0
        %1548 = vmatpush2.bf16.msra.mxu0 0
        %1549 = vmatprep.subr.bf16.mxu0 0
        %1550 = vmatpush2.bf16.msra.mxu0 0
        %1551 = vmatprep.subr.bf16.mxu0 0
        %1552 = vmatpush2.bf16.msra.mxu0 0
        %1553 = vmatprep.subr.bf16.mxu0 0
        %1554 = vmatpush2.bf16.msra.mxu0 0
        %1555 = vmatprep.subr.bf16.mxu0 0
        %1556 = vmatpush2.bf16.msra.mxu0 0
        %1557 = vmatprep.subr.bf16.mxu0 0
        %1558 = vmatpush2.bf16.msra.mxu0 0
        %1559 = vmatprep.mubr.bf16.mxu0 0
        %1560 = vmatmul.mubr.bf16.gmra.mxu0 %v1455
        %v1561 = vpop.f32.mrf.mxu0
        %v1562 = vadd.f32 %v1477, %v1561
        %v1563 = vpop.f32.mrf.mxu0
        %v1564 = vpop.f32.mrf.mxu0
        %v1565 = vpop.f32.mrf.mxu0
        %1566 = vdwg.mxu0
        %v1567 = vadd.f32 %v1329, %v1562
        %1568 = vst.msk [vmem:[%s554] sm:$0xff] %vm569, %v1567
        %s1569 = sand.u32 %s402, 1
        %s1570 = scalar_lea.sflag [#allocation4], %s1569
        %s1571 = sand.u32 %s402, 1
        %s1572 = smul.addr %s1571, 8
        %s1573 = scalar_lea.vmem [#allocation5], %s1572
        // Predicated region
        $region93: #{tpu_custom_call.1} parent=87 // pred_check
          %p1574 = pneg %p412
        $region94: #{tpu_custom_call.1} parent=87 // pred_check_branch
          %1576 = sbr.rel (%p1574) target = $region96
        $region95: #{tpu_custom_call.1} parent=87 // pred_region
          %s1578 = ssub.s32 128, 128
          %1579 = vsyncadd %s1570, %s1578
          %s1580 = smul.addr %s32, 128
          %s1581 = scalar_lea.hbm %s17, %s1580
          %s1583 = sshll.u32 %s1573, 4
          %s1584 = int_to_ptr.vmem [resolvable:$true] %s1583
          %1586 = dma.vmem_to_hbm [thread:$0]  %s1584, 128, %s1581, %s1570
        $region96: #{tpu_custom_call.1} parent=87 // pred_fallthru
          _
      $region88: #{tpu_custom_call.1} parent=5 // pred_fallthru
        _
      %p1587 = scmp.le.s32.totalorder 2, %s27
      // Predicated region
      $region97: #{tpu_custom_call.1} parent=5 // pred_check
        %p1588 = pneg %p1587
      $region98: #{tpu_custom_call.1} parent=5 // pred_check_branch
        %1590 = sbr.rel (%p1588) target = $region100
      $region99: #{tpu_custom_call.1} parent=5 // pred_region
        %s1591 = ssub.s32 %s27, 2
        // Predicated region
        $region101: #{tpu_custom_call.1} parent=99 // pred_check
          %p1592 = pneg %p418
        $region102: #{tpu_custom_call.1} parent=99 // pred_check_branch
          %1594 = sbr.rel (%p1592) target = $region104
        $region103: #{tpu_custom_call.1} parent=99 // pred_region
          %s1595 = sand.u32 %s403, 1
          %s1596 = scalar_lea.sflag [#allocation4], %s1595
          %s1597 = sand.u32 %s403, 1
          %s1598 = smul.addr %s1597, 8
          %s1599 = scalar_lea.vmem [#allocation5], %s1598
          %1600 = dma.done %s1596, 128
        $region104: #{tpu_custom_call.1} parent=99 // pred_fallthru
          _
      $region100: #{tpu_custom_call.1} parent=5 // pred_fallthru
        _
    $region6: #{tpu_custom_call.1} parent=1 // loop_footer
      %s31 = sadd.s32 1, %s27
    $region7: #{tpu_custom_call.1} parent=1 // loop_footer_branch
      %26 = sbr.rel target = $region3
    $region8: #{tpu_custom_call.1} parent=1 // loop_exit
      _
    %1601 = vsyncpa [#allocation3], 1
    %s1602 = scalar_lea.sflag [#allocation3], 1
    %1603 = vsyncpa %s1602, 1
    %1604 = vsyncpa [#allocation4], 1
    %s1605 = scalar_lea.sflag [#allocation4], 1
    %1606 = vsyncpa %s1605, 1

// kernel: tpu_custom_call.1
$region0: #{tpu_custom_call.1}
  #allocation0 [shape = 'u32[]', space=smem, size = 0x4, offset = 0x4, fixed_abs, tag = 'smem constant byte address 0x4 - core index']
  #allocation1 [shape = 'u32[144,128]{1,0:T(1,128)}', space=vmem, size = 0x12000, scoped, tag = 'internal scratch']
  %s0 = inlined_call_operand.vmem [shape: f32[2,8,32], index: 0, kind: input, shape index: {}]
  %s1 = inlined_call_operand.vmem [shape: f32[1,32], index: 1, kind: input, shape index: {}]
  %s2 = inlined_call_operand.vmem [shape: f32[1,32], index: 2, kind: input, shape index: {}]
  %s3 = inlined_call_operand.vmem [shape: bf16[32,32], index: 3, kind: input, shape index: {}]
  %s4 = inlined_call_operand.vmem [shape: f32[1,32], index: 4, kind: input, shape index: {}]
  %s5 = inlined_call_operand.vmem [shape: bf16[32,32], index: 5, kind: input, shape index: {}]
  %s6 = inlined_call_operand.vmem [shape: f32[1,32], index: 6, kind: input, shape index: {}]
  %s7 = inlined_call_operand.vmem [shape: bf16[32,32], index: 7, kind: input, shape index: {}]
  %s8 = inlined_call_operand.vmem [shape: f32[1,32], index: 8, kind: input, shape index: {}]
  %s9 = inlined_call_operand.vmem [shape: bf16[32,32], index: 9, kind: input, shape index: {}]
  %s10 = inlined_call_operand.vmem [shape: f32[1,32], index: 10, kind: input, shape index: {}]
  %s11 = inlined_call_operand.vmem [shape: f32[1,32], index: 11, kind: input, shape index: {}]
  %s12 = inlined_call_operand.vmem [shape: f32[1,32], index: 12, kind: input, shape index: {}]
  %s13 = inlined_call_operand.hbm [shape: bf16[32,128], index: 13, kind: input, shape index: {}]
  %s14 = inlined_call_operand.vmem [shape: f32[1,128], index: 14, kind: input, shape index: {}]
  %s15 = inlined_call_operand.vmem [shape: bf16[128,32], index: 15, kind: input, shape index: {}]
  %s16 = inlined_call_operand.vmem [shape: f32[1,32], index: 16, kind: input, shape index: {}]
  %s17 = inlined_call_operand.hbm [shape: f32[2,8,32], index: 17, kind: output, shape index: {}]
  %s18 = sld [smem:[#allocation0]]
  $region105: #{tpu_custom_call.1} parent=0
    _
  %s20 = ssub.s32 1, %s18
  %s21 = scalar_select 0, %s20, %s18
  $region1: #{tpu_custom_call.1} parent=0
    #allocation2 [shape = 'u8[8192]{0}', space=vmem, size = 0x2000, scoped, tag = 'input window, operand 13, single buffered']
    #allocation3 [shape = 's32[2]{0}', space=sflag, size = 0x8, scoped, tag = 'scoped memory for tpu_custom_call.1']
    #allocation4 [shape = 's32[2]{0}', space=sflag, size = 0x8, scoped, tag = 'scoped memory for tpu_custom_call.1']
    #allocation5 [shape = 'u8[8192]{0}', space=vmem, size = 0x2000, scoped, tag = 'output window, operand 0']
    %22 = vsyncpa [#allocation3], 0
    %23 = vsyncpa [#allocation4], 0
    %s24 = scalar_lea.sflag [#allocation4], 1
    %25 = vsyncpa %s24, 0
    loop: start=0, step=1, limit=4
    $region2: #{tpu_custom_call.1} parent=1 // loop_pre_header
      _
    $region3: #{tpu_custom_call.1} parent=1 // loop_header
      %s27 = sphi 0, %s31
      %p28 = scmp.ge.s32.totalorder %s27, 4
      %s37 = sphi 0, %s39
      %s40 = sphi 0, %s37
      %s41 = sphi 0, %s40
      %s57 = sphi 0, %s41
      %s61 = sphi 0, %s61
      %s63 = sphi 0, %s61
      %s64 = sphi 0, %s63
      %s78 = sphi 0, %s64
      %s82 = sphi 0, %s82
      %s84 = sphi 0, %s82
      %s85 = sphi 0, %s84
      %s99 = sphi 0, %s85
      %s103 = sphi 0, %s103
      %s105 = sphi 0, %s103
      %s106 = sphi 0, %s105
      %s120 = sphi 0, %s106
      %s124 = sphi 0, %s124
      %s126 = sphi 0, %s124
      %s127 = sphi 0, %s126
      %s141 = sphi 0, %s127
      %s145 = sphi 0, %s145
      %s147 = sphi 0, %s145
      %s148 = sphi 0, %s147
      %s162 = sphi 0, %s148
      %s166 = sphi 0, %s166
      %s168 = sphi 0, %s166
      %s169 = sphi 0, %s168
      %s183 = sphi 0, %s169
      %s187 = sphi 0, %s187
      %s189 = sphi 0, %s187
      %s190 = sphi 0, %s189
      %s204 = sphi 0, %s190
      %s208 = sphi 0, %s208
      %s210 = sphi 0, %s208
      %s211 = sphi 0, %s210
      %s225 = sphi 0, %s211
      %s229 = sphi 0, %s229
      %s231 = sphi 0, %s229
      %s232 = sphi 0, %s231
      %s246 = sphi 0, %s232
      %s250 = sphi 0, %s250
      %s252 = sphi 0, %s250
      %s253 = sphi 0, %s252
      %s267 = sphi 0, %s253
      %s271 = sphi 0, %s271
      %s273 = sphi 0, %s271
      %s274 = sphi 0, %s273
      %s288 = sphi 0, %s274
      %s292 = sphi 0, %s292
      %s294 = sphi 0, %s292
      %s295 = sphi 0, %s294
      %s309 = sphi 0, %s295
      %s313 = sphi 0, %s313
      %s315 = sphi 0, %s313
      %s316 = sphi 0, %s315
      %s330 = sphi 0, %s316
      %s334 = sphi 0, %s334
      %s336 = sphi 0, %s334
      %s337 = sphi 0, %s336
      %s351 = sphi 0, %s337
      %s355 = sphi 0, %s355
      %s357 = sphi 0, %s355
      %s358 = sphi 0, %s357
      %s372 = sphi 0, %s358
      %s376 = sphi 0, %s376
      %s378 = sphi 0, %s376
      %s379 = sphi 0, %s378
      %s393 = sphi 0, %s379
      %s399 = sphi 0, %s401
      %s402 = sphi 0, %s399
      %s403 = sphi 0, %s402
      %s419 = sphi 0, %s403
    $region4: #{tpu_custom_call.1} parent=1 // loop_header_branch
      %30 = sbr.rel (%p28) target = $region8
    $region5: #{tpu_custom_call.1} parent=1 // loop_body
      %s32 = ssub.s32 %s27, 1
      %s33 = ssub.s32 %s27, 2
      %s34 = sadd.s32 %s27, 1
      %s35 = ssub.s32 %s27, %s34
      %p36 = scmp.eq.s32.totalorder %s35, 0
      %s38 = sadd.s32 %s37, 1
      %s39 = scalar_select %p36, %s37, %s38
      %p42 = pneg %p36
      %p43 = scmp.eq.s32.totalorder %s27, 1
      %p44 = por %p42, %p43
      %p45 = scmp.ne.s32.totalorder %s37, %s40
      %p46 = scmp.eq.s32.totalorder %s27, 0
      %p47 = por %p45, %p46
      %p48 = scmp.ne.s32.totalorder %s37, %s40
      %p49 = scmp.eq.s32.totalorder %s32, 1
      %p50 = por %p48, %p49
      %p51 = scmp.ne.s32.totalorder %s40, %s41
      %p52 = scmp.eq.s32.totalorder %s32, 0
      %p53 = por %p51, %p52
      %p54 = scmp.ne.s32.totalorder %s40, %s41
      %p55 = scmp.eq.s32.totalorder %s33, 1
      %p56 = por %p54, %p55
      %p58 = scmp.ne.s32.totalorder %s41, %s57
      %p59 = scmp.eq.s32.totalorder %s33, 0
      %p60 = por %p58, %p59
      %s62 = sadd.s32 %s61, 1
      %p65 = scmp.eq.s32.totalorder %s27, 1
      %p66 = scmp.ne.s32.totalorder %s61, %s63
      %p67 = scmp.eq.s32.totalorder %s27, 0
      %p68 = por %p66, %p67
      %p69 = scmp.ne.s32.totalorder %s61, %s63
      %p70 = scmp.eq.s32.totalorder %s32, 1
      %p71 = por %p69, %p70
      %p72 = scmp.ne.s32.totalorder %s63, %s64
      %p73 = scmp.eq.s32.totalorder %s32, 0
      %p74 = por %p72, %p73
      %p75 = scmp.ne.s32.totalorder %s63, %s64
      %p76 = scmp.eq.s32.totalorder %s33, 1
      %p77 = por %p75, %p76
      %p79 = scmp.ne.s32.totalorder %s64, %s78
      %p80 = scmp.eq.s32.totalorder %s33, 0
      %p81 = por %p79, %p80
      %s83 = sadd.s32 %s82, 1
      %p86 = scmp.eq.s32.totalorder %s27, 1
      %p87 = scmp.ne.s32.totalorder %s82, %s84
      %p88 = scmp.eq.s32.totalorder %s27, 0
      %p89 = por %p87, %p88
      %p90 = scmp.ne.s32.totalorder %s82, %s84
      %p91 = scmp.eq.s32.totalorder %s32, 1
      %p92 = por %p90, %p91
      %p93 = scmp.ne.s32.totalorder %s84, %s85
      %p94 = scmp.eq.s32.totalorder %s32, 0
      %p95 = por %p93, %p94
      %p96 = scmp.ne.s32.totalorder %s84, %s85
      %p97 = scmp.eq.s32.totalorder %s33, 1
      %p98 = por %p96, %p97
      %p100 = scmp.ne.s32.totalorder %s85, %s99
      %p101 = scmp.eq.s32.totalorder %s33, 0
      %p102 = por %p100, %p101
      %s104 = sadd.s32 %s103, 1
      %p107 = scmp.eq.s32.totalorder %s27, 1
      %p108 = scmp.ne.s32.totalorder %s103, %s105
      %p109 = scmp.eq.s32.totalorder %s27, 0
      %p110 = por %p108, %p109
      %p111 = scmp.ne.s32.totalorder %s103, %s105
      %p112 = scmp.eq.s32.totalorder %s32, 1
      %p113 = por %p111, %p112
      %p114 = scmp.ne.s32.totalorder %s105, %s106
      %p115 = scmp.eq.s32.totalorder %s32, 0
      %p116 = por %p114, %p115
      %p117 = scmp.ne.s32.totalorder %s105, %s106
      %p118 = scmp.eq.s32.totalorder %s33, 1
      %p119 = por %p117, %p118
      %p121 = scmp.ne.s32.totalorder %s106, %s120
      %p122 = scmp.eq.s32.totalorder %s33, 0
      %p123 = por %p121, %p122
      %s125 = sadd.s32 %s124, 1
      %p128 = scmp.eq.s32.totalorder %s27, 1
      %p129 = scmp.ne.s32.totalorder %s124, %s126
      %p130 = scmp.eq.s32.totalorder %s27, 0
      %p131 = por %p129, %p130
      %p132 = scmp.ne.s32.totalorder %s124, %s126
      %p133 = scmp.eq.s32.totalorder %s32, 1
      %p134 = por %p132, %p133
      %p135 = scmp.ne.s32.totalorder %s126, %s127
      %p136 = scmp.eq.s32.totalorder %s32, 0
      %p137 = por %p135, %p136
      %p138 = scmp.ne.s32.totalorder %s126, %s127
      %p139 = scmp.eq.s32.totalorder %s33, 1
      %p140 = por %p138, %p139
      %p142 = scmp.ne.s32.totalorder %s127, %s141
      %p143 = scmp.eq.s32.totalorder %s33, 0
      %p144 = por %p142, %p143
      %s146 = sadd.s32 %s145, 1
      %p149 = scmp.eq.s32.totalorder %s27, 1
      %p150 = scmp.ne.s32.totalorder %s145, %s147
      %p151 = scmp.eq.s32.totalorder %s27, 0
      %p152 = por %p150, %p151
      %p153 = scmp.ne.s32.totalorder %s145, %s147
      %p154 = scmp.eq.s32.totalorder %s32, 1
      %p155 = por %p153, %p154
      %p156 = scmp.ne.s32.totalorder %s147, %s148
      %p157 = scmp.eq.s32.totalorder %s32, 0
      %p158 = por %p156, %p157
      %p159 = scmp.ne.s32.totalorder %s147, %s148
      %p160 = scmp.eq.s32.totalorder %s33, 1
      %p161 = por %p159, %p160
      %p163 = scmp.ne.s32.totalorder %s148, %s162
      %p164 = scmp.eq.s32.totalorder %s33, 0
      %p165 = por %p163, %p164
      %s167 = sadd.s32 %s166, 1
      %p170 = scmp.eq.s32.totalorder %s27, 1
      %p171 = scmp.ne.s32.totalorder %s166, %s168
      %p172 = scmp.eq.s32.totalorder %s27, 0
      %p173 = por %p171, %p172
      %p174 = scmp.ne.s32.totalorder %s166, %s168
      %p175 = scmp.eq.s32.totalorder %s32, 1
      %p176 = por %p174, %p175
      %p177 = scmp.ne.s32.totalorder %s168, %s169
      %p178 = scmp.eq.s32.totalorder %s32, 0
      %p179 = por %p177, %p178
      %p180 = scmp.ne.s32.totalorder %s168, %s169
      %p181 = scmp.eq.s32.totalorder %s33, 1
      %p182 = por %p180, %p181
      %p184 = scmp.ne.s32.totalorder %s169, %s183
      %p185 = scmp.eq.s32.totalorder %s33, 0
      %p186 = por %p184, %p185
      %s188 = sadd.s32 %s187, 1
      %p191 = scmp.eq.s32.totalorder %s27, 1
      %p192 = scmp.ne.s32.totalorder %s187, %s189
      %p193 = scmp.eq.s32.totalorder %s27, 0
      %p194 = por %p192, %p193
      %p195 = scmp.ne.s32.totalorder %s187, %s189
      %p196 = scmp.eq.s32.totalorder %s32, 1
      %p197 = por %p195, %p196
      %p198 = scmp.ne.s32.totalorder %s189, %s190
      %p199 = scmp.eq.s32.totalorder %s32, 0
      %p200 = por %p198, %p199
      %p201 = scmp.ne.s32.totalorder %s189, %s190
      %p202 = scmp.eq.s32.totalorder %s33, 1
      %p203 = por %p201, %p202
      %p205 = scmp.ne.s32.totalorder %s190, %s204
      %p206 = scmp.eq.s32.totalorder %s33, 0
      %p207 = por %p205, %p206
      %s209 = sadd.s32 %s208, 1
      %p212 = scmp.eq.s32.totalorder %s27, 1
      %p213 = scmp.ne.s32.totalorder %s208, %s210
      %p214 = scmp.eq.s32.totalorder %s27, 0
      %p215 = por %p213, %p214
      %p216 = scmp.ne.s32.totalorder %s208, %s210
      %p217 = scmp.eq.s32.totalorder %s32, 1
      %p218 = por %p216, %p217
      %p219 = scmp.ne.s32.totalorder %s210, %s211
      %p220 = scmp.eq.s32.totalorder %s32, 0
      %p221 = por %p219, %p220
      %p222 = scmp.ne.s32.totalorder %s210, %s211
      %p223 = scmp.eq.s32.totalorder %s33, 1
      %p224 = por %p222, %p223
      %p226 = scmp.ne.s32.totalorder %s211, %s225
      %p227 = scmp.eq.s32.totalorder %s33, 0
      %p228 = por %p226, %p227
      %s230 = sadd.s32 %s229, 1
      %p233 = scmp.eq.s32.totalorder %s27, 1
      %p234 = scmp.ne.s32.totalorder %s229, %s231
      %p235 = scmp.eq.s32.totalorder %s27, 0
      %p236 = por %p234, %p235
      %p237 = scmp.ne.s32.totalorder %s229, %s231
      %p238 = scmp.eq.s32.totalorder %s32, 1
      %p239 = por %p237, %p238
      %p240 = scmp.ne.s32.totalorder %s231, %s232
      %p241 = scmp.eq.s32.totalorder %s32, 0
      %p242 = por %p240, %p241
      %p243 = scmp.ne.s32.totalorder %s231, %s232
      %p244 = scmp.eq.s32.totalorder %s33, 1
      %p245 = por %p243, %p244
      %p247 = scmp.ne.s32.totalorder %s232, %s246
      %p248 = scmp.eq.s32.totalorder %s33, 0
      %p249 = por %p247, %p248
      %s251 = sadd.s32 %s250, 1
      %p254 = scmp.eq.s32.totalorder %s27, 1
      %p255 = scmp.ne.s32.totalorder %s250, %s252
      %p256 = scmp.eq.s32.totalorder %s27, 0
      %p257 = por %p255, %p256
      %p258 = scmp.ne.s32.totalorder %s250, %s252
      %p259 = scmp.eq.s32.totalorder %s32, 1
      %p260 = por %p258, %p259
      %p261 = scmp.ne.s32.totalorder %s252, %s253
      %p262 = scmp.eq.s32.totalorder %s32, 0
      %p263 = por %p261, %p262
      %p264 = scmp.ne.s32.totalorder %s252, %s253
      %p265 = scmp.eq.s32.totalorder %s33, 1
      %p266 = por %p264, %p265
      %p268 = scmp.ne.s32.totalorder %s253, %s267
      %p269 = scmp.eq.s32.totalorder %s33, 0
      %p270 = por %p268, %p269
      %s272 = sadd.s32 %s271, 1
      %p275 = scmp.eq.s32.totalorder %s27, 1
      %p276 = scmp.ne.s32.totalorder %s271, %s273
      %p277 = scmp.eq.s32.totalorder %s27, 0
      %p278 = por %p276, %p277
      %p279 = scmp.ne.s32.totalorder %s271, %s273
      %p280 = scmp.eq.s32.totalorder %s32, 1
      %p281 = por %p279, %p280
      %p282 = scmp.ne.s32.totalorder %s273, %s274
      %p283 = scmp.eq.s32.totalorder %s32, 0
      %p284 = por %p282, %p283
      %p285 = scmp.ne.s32.totalorder %s273, %s274
      %p286 = scmp.eq.s32.totalorder %s33, 1
      %p287 = por %p285, %p286
      %p289 = scmp.ne.s32.totalorder %s274, %s288
      %p290 = scmp.eq.s32.totalorder %s33, 0
      %p291 = por %p289, %p290
      %s293 = sadd.s32 %s292, 1
      %p296 = scmp.eq.s32.totalorder %s27, 1
      %p297 = scmp.ne.s32.totalorder %s292, %s294
      %p298 = scmp.eq.s32.totalorder %s27, 0
      %p299 = por %p297, %p298
      %p300 = scmp.ne.s32.totalorder %s292, %s294
      %p301 = scmp.eq.s32.totalorder %s32, 1
      %p302 = por %p300, %p301
      %p303 = scmp.ne.s32.totalorder %s294, %s295
      %p304 = scmp.eq.s32.totalorder %s32, 0
      %p305 = por %p303, %p304
      %p306 = scmp.ne.s32.totalorder %s294, %s295
      %p307 = scmp.eq.s32.totalorder %s33, 1
      %p308 = por %p306, %p307
      %p310 = scmp.ne.s32.totalorder %s295, %s309
      %p311 = scmp.eq.s32.totalorder %s33, 0
      %p312 = por %p310, %p311
      %s314 = sadd.s32 %s313, 1
      %p317 = scmp.eq.s32.totalorder %s27, 1
      %p318 = scmp.ne.s32.totalorder %s313, %s315
      %p319 = scmp.eq.s32.totalorder %s27, 0
      %p320 = por %p318, %p319
      %p321 = scmp.ne.s32.totalorder %s313, %s315
      %p322 = scmp.eq.s32.totalorder %s32, 1
      %p323 = por %p321, %p322
      %p324 = scmp.ne.s32.totalorder %s315, %s316
      %p325 = scmp.eq.s32.totalorder %s32, 0
      %p326 = por %p324, %p325
      %p327 = scmp.ne.s32.totalorder %s315, %s316
      %p328 = scmp.eq.s32.totalorder %s33, 1
      %p329 = por %p327, %p328
      %p331 = scmp.ne.s32.totalorder %s316, %s330
      %p332 = scmp.eq.s32.totalorder %s33, 0
      %p333 = por %p331, %p332
      %s335 = sadd.s32 %s334, 1
      %p338 = scmp.eq.s32.totalorder %s27, 1
      %p339 = scmp.ne.s32.totalorder %s334, %s336
      %p340 = scmp.eq.s32.totalorder %s27, 0
      %p341 = por %p339, %p340
      %p342 = scmp.ne.s32.totalorder %s334, %s336
      %p343 = scmp.eq.s32.totalorder %s32, 1
      %p344 = por %p342, %p343
      %p345 = scmp.ne.s32.totalorder %s336, %s337
      %p346 = scmp.eq.s32.totalorder %s32, 0
      %p347 = por %p345, %p346
      %p348 = scmp.ne.s32.totalorder %s336, %s337
      %p349 = scmp.eq.s32.totalorder %s33, 1
      %p350 = por %p348, %p349
      %p352 = scmp.ne.s32.totalorder %s337, %s351
      %p353 = scmp.eq.s32.totalorder %s33, 0
      %p354 = por %p352, %p353
      %s356 = sadd.s32 %s355, 1
      %p359 = scmp.eq.s32.totalorder %s27, 1
      %p360 = scmp.ne.s32.totalorder %s355, %s357
      %p361 = scmp.eq.s32.totalorder %s27, 0
      %p362 = por %p360, %p361
      %p363 = scmp.ne.s32.totalorder %s355, %s357
      %p364 = scmp.eq.s32.totalorder %s32, 1
      %p365 = por %p363, %p364
      %p366 = scmp.ne.s32.totalorder %s357, %s358
      %p367 = scmp.eq.s32.totalorder %s32, 0
      %p368 = por %p366, %p367
      %p369 = scmp.ne.s32.totalorder %s357, %s358
      %p370 = scmp.eq.s32.totalorder %s33, 1
      %p371 = por %p369, %p370
      %p373 = scmp.ne.s32.totalorder %s358, %s372
      %p374 = scmp.eq.s32.totalorder %s33, 0
      %p375 = por %p373, %p374
      %s377 = sadd.s32 %s376, 1
      %p380 = scmp.eq.s32.totalorder %s27, 1
      %p381 = scmp.ne.s32.totalorder %s376, %s378
      %p382 = scmp.eq.s32.totalorder %s27, 0
      %p383 = por %p381, %p382
      %p384 = scmp.ne.s32.totalorder %s376, %s378
      %p385 = scmp.eq.s32.totalorder %s32, 1
      %p386 = por %p384, %p385
      %p387 = scmp.ne.s32.totalorder %s378, %s379
      %p388 = scmp.eq.s32.totalorder %s32, 0
      %p389 = por %p387, %p388
      %p390 = scmp.ne.s32.totalorder %s378, %s379
      %p391 = scmp.eq.s32.totalorder %s33, 1
      %p392 = por %p390, %p391
      %p394 = scmp.ne.s32.totalorder %s379, %s393
      %p395 = scmp.eq.s32.totalorder %s33, 0
      %p396 = por %p394, %p395
      %s397 = ssub.s32 %s27, %s34
      %p398 = scmp.eq.s32.totalorder %s397, 0
      %s400 = sadd.s32 %s399, 1
      %s401 = scalar_select %p398, %s399, %s400
      %p404 = pneg %p398
      %p405 = scmp.eq.s32.totalorder %s27, 1
      %p406 = por %p404, %p405
      %p407 = scmp.ne.s32.totalorder %s399, %s402
      %p408 = scmp.eq.s32.totalorder %s27, 0
      %p409 = por %p407, %p408
      %p410 = scmp.ne.s32.totalorder %s399, %s402
      %p411 = scmp.eq.s32.totalorder %s32, 1
      %p412 = por %p410, %p411
      %p413 = scmp.ne.s32.totalorder %s402, %s403
      %p414 = scmp.eq.s32.totalorder %s32, 0
      %p415 = por %p413, %p414
      %p416 = scmp.ne.s32.totalorder %s402, %s403
      %p417 = scmp.eq.s32.totalorder %s33, 1
      %p418 = por %p416, %p417
      %p420 = scmp.ne.s32.totalorder %s403, %s419
      %p421 = scmp.eq.s32.totalorder %s33, 0
      %p422 = por %p420, %p421
      %p423 = scmp.le.s32.totalorder 1, %s27
      %p424 = scmp.lt.s32.totalorder %s27, 3
      %p425 = pnand %p423, %p424
      %p426 = pneg %p425
      // Predicated region
      $region9: #{tpu_custom_call.1} parent=5 // pred_check
        _
      $region10: #{tpu_custom_call.1} parent=5 // pred_check_branch
        %428 = sbr.rel (%p425) target = $region12
      $region11: #{tpu_custom_call.1} parent=5 // pred_region
        %s429 = ssub.s32 %s27, 1
        // Predicated region
        $region13: #{tpu_custom_call.1} parent=11 // pred_check
          %p430 = pneg %p74
        $region14: #{tpu_custom_call.1} parent=11 // pred_check_branch
          %432 = sbr.rel (%p430) target = $region16
        $region15: #{tpu_custom_call.1} parent=11 // pred_region
          _
        $region16: #{tpu_custom_call.1} parent=11 // pred_fallthru
          _
        // Predicated region
        $region17: #{tpu_custom_call.1} parent=11 // pred_check
          %p433 = pneg %p95
        $region18: #{tpu_custom_call.1} parent=11 // pred_check_branch
          %435 = sbr.rel (%p433) target = $region20
        $region19: #{tpu_custom_call.1} parent=11 // pred_region
          _
        $region20: #{tpu_custom_call.1} parent=11 // pred_fallthru
          _
        // Predicated region
        $region21: #{tpu_custom_call.1} parent=11 // pred_check
          %p436 = pneg %p116
        $region22: #{tpu_custom_call.1} parent=11 // pred_check_branch
          %438 = sbr.rel (%p436) target = $region24
        $region23: #{tpu_custom_call.1} parent=11 // pred_region
          _
        $region24: #{tpu_custom_call.1} parent=11 // pred_fallthru
          _
        // Predicated region
        $region25: #{tpu_custom_call.1} parent=11 // pred_check
          %p439 = pneg %p137
        $region26: #{tpu_custom_call.1} parent=11 // pred_check_branch
          %441 = sbr.rel (%p439) target = $region28
        $region27: #{tpu_custom_call.1} parent=11 // pred_region
          _
        $region28: #{tpu_custom_call.1} parent=11 // pred_fallthru
          _
        // Predicated region
        $region29: #{tpu_custom_call.1} parent=11 // pred_check
          %p442 = pneg %p158
        $region30: #{tpu_custom_call.1} parent=11 // pred_check_branch
          %444 = sbr.rel (%p442) target = $region32
        $region31: #{tpu_custom_call.1} parent=11 // pred_region
          _
        $region32: #{tpu_custom_call.1} parent=11 // pred_fallthru
          _
        // Predicated region
        $region33: #{tpu_custom_call.1} parent=11 // pred_check
          %p445 = pneg %p179
        $region34: #{tpu_custom_call.1} parent=11 // pred_check_branch
          %447 = sbr.rel (%p445) target = $region36
        $region35: #{tpu_custom_call.1} parent=11 // pred_region
          _
        $region36: #{tpu_custom_call.1} parent=11 // pred_fallthru
          _
        // Predicated region
        $region37: #{tpu_custom_call.1} parent=11 // pred_check
          %p448 = pneg %p200
        $region38: #{tpu_custom_call.1} parent=11 // pred_check_branch
          %450 = sbr.rel (%p448) target = $region40
        $region39: #{tpu_custom_call.1} parent=11 // pred_region
          _
        $region40: #{tpu_custom_call.1} parent=11 // pred_fallthru
          _
        // Predicated region
        $region41: #{tpu_custom_call.1} parent=11 // pred_check
          %p451 = pneg %p221
        $region42: #{tpu_custom_call.1} parent=11 // pred_check_branch
          %453 = sbr.rel (%p451) target = $region44
        $region43: #{tpu_custom_call.1} parent=11 // pred_region
          _
        $region44: #{tpu_custom_call.1} parent=11 // pred_fallthru
          _
        // Predicated region
        $region45: #{tpu_custom_call.1} parent=11 // pred_check
          %p454 = pneg %p242
        $region46: #{tpu_custom_call.1} parent=11 // pred_check_branch
          %456 = sbr.rel (%p454) target = $region48
        $region47: #{tpu_custom_call.1} parent=11 // pred_region
          _
        $region48: #{tpu_custom_call.1} parent=11 // pred_fallthru
          _
        // Predicated region
        $region49: #{tpu_custom_call.1} parent=11 // pred_check
          %p457 = pneg %p263
        $region50: #{tpu_custom_call.1} parent=11 // pred_check_branch
          %459 = sbr.rel (%p457) target = $region52
        $region51: #{tpu_custom_call.1} parent=11 // pred_region
          _
        $region52: #{tpu_custom_call.1} parent=11 // pred_fallthru
          _
        // Predicated region
        $region53: #{tpu_custom_call.1} parent=11 // pred_check
          %p460 = pneg %p284
        $region54: #{tpu_custom_call.1} parent=11 // pred_check_branch
          %462 = sbr.rel (%p460) target = $region56
        $region55: #{tpu_custom_call.1} parent=11 // pred_region
          _
        $region56: #{tpu_custom_call.1} parent=11 // pred_fallthru
          _
        // Predicated region
        $region57: #{tpu_custom_call.1} parent=11 // pred_check
          %p463 = pneg %p305
        $region58: #{tpu_custom_call.1} parent=11 // pred_check_branch
          %465 = sbr.rel (%p463) target = $region60
        $region59: #{tpu_custom_call.1} parent=11 // pred_region
          _
        $region60: #{tpu_custom_call.1} parent=11 // pred_fallthru
          _
        // Predicated region
        $region61: #{tpu_custom_call.1} parent=11 // pred_check
          %p466 = pneg %p326
        $region62: #{tpu_custom_call.1} parent=11 // pred_check_branch
          %468 = sbr.rel (%p466) target = $region64
        $region63: #{tpu_custom_call.1} parent=11 // pred_region
          %s470 = ssub.s32 256, 256
          %471 = vsyncadd [#allocation3], %s470
          %s472 = sshll.u32 [#allocation2], 4
          %s473 = int_to_ptr.vmem [resolvable:$true] %s472
          %478 = dma.hbm_to_vmem [thread:$0]  %s13, 256, %s473, [#allocation3], 64, 64, 4
        $region64: #{tpu_custom_call.1} parent=11 // pred_fallthru
          _
        // Predicated region
        $region65: #{tpu_custom_call.1} parent=11 // pred_check
          %p479 = pneg %p347
        $region66: #{tpu_custom_call.1} parent=11 // pred_check_branch
          %481 = sbr.rel (%p479) target = $region68
        $region67: #{tpu_custom_call.1} parent=11 // pred_region
          _
        $region68: #{tpu_custom_call.1} parent=11 // pred_fallthru
          _
        // Predicated region
        $region69: #{tpu_custom_call.1} parent=11 // pred_check
          %p482 = pneg %p368
        $region70: #{tpu_custom_call.1} parent=11 // pred_check_branch
          %484 = sbr.rel (%p482) target = $region72
        $region71: #{tpu_custom_call.1} parent=11 // pred_region
          _
        $region72: #{tpu_custom_call.1} parent=11 // pred_fallthru
          _
        // Predicated region
        $region73: #{tpu_custom_call.1} parent=11 // pred_check
          %p485 = pneg %p389
        $region74: #{tpu_custom_call.1} parent=11 // pred_check_branch
          %487 = sbr.rel (%p485) target = $region76
        $region75: #{tpu_custom_call.1} parent=11 // pred_region
          _
        $region76: #{tpu_custom_call.1} parent=11 // pred_fallthru
          _
      $region12: #{tpu_custom_call.1} parent=5 // pred_fallthru
        _
      %p488 = scmp.lt.s32.totalorder %s27, 2
      // Predicated region
      $region77: #{tpu_custom_call.1} parent=5 // pred_check
        %p489 = pneg %p488
      $region78: #{tpu_custom_call.1} parent=5 // pred_check_branch
        %491 = sbr.rel (%p489) target = $region80
      $region79: #{tpu_custom_call.1} parent=5 // pred_region
        // Predicated region
        $region81: #{tpu_custom_call.1} parent=79 // pred_check
          %p492 = pneg %p47
        $region82: #{tpu_custom_call.1} parent=79 // pred_check_branch
          %494 = sbr.rel (%p492) target = $region84
        $region83: #{tpu_custom_call.1} parent=79 // pred_region
          %p495 = scmp.lt.s32.totalorder %s27, 1
          %s496 = scalar_select %p495, %s27, 1
          %s497 = smul.addr %s496, 8
          %s498 = scalar_lea.vmem %s0, %s497
        $region84: #{tpu_custom_call.1} parent=79 // pred_fallthru
          _
      $region80: #{tpu_custom_call.1} parent=5 // pred_fallthru
        _
      %p499 = scmp.le.s32.totalorder 1, %s27
      %p500 = scmp.lt.s32.totalorder %s27, 3
      %p501 = pnand %p499, %p500
      %p502 = pneg %p501
      // Predicated region
      $region85: #{tpu_custom_call.1} parent=5 // pred_check
        _
      $region86: #{tpu_custom_call.1} parent=5 // pred_check_branch
        %504 = sbr.rel (%p501) target = $region88
      $region87: #{tpu_custom_call.1} parent=5 // pred_region
        %s505 = ssub.s32 %s27, 1
        // Predicated region
        $region89: #{tpu_custom_call.1} parent=87 // pred_check
          %p506 = pneg %p326
        $region90: #{tpu_custom_call.1} parent=87 // pred_check_branch
          %508 = sbr.rel (%p506) target = $region92
        $region91: #{tpu_custom_call.1} parent=87 // pred_region
          %509 = dma.done [#allocation3], 256
        $region92: #{tpu_custom_call.1} parent=87 // pred_fallthru
          _
        %p510 = scmp.lt.s32.totalorder %s32, 1
        %s511 = scalar_select %p510, %s32, 1
        %s512 = smul.addr %s511, 8
        %s513 = scalar_lea.vmem %s0, %s512
        %p514 = pneg %p53
        %p515 = pneg %p50
        %p516 = pneg %p74
        %p517 = pneg %p71
        %p518 = pneg %p95
        %p519 = pneg %p92
        %p520 = pneg %p116
        %p521 = pneg %p113
        %p522 = pneg %p137
        %p523 = pneg %p134
        %p524 = pneg %p158
        %p525 = pneg %p155
        %p526 = pneg %p179
        %p527 = pneg %p176
        %p528 = pneg %p200
        %p529 = pneg %p197
        %p530 = pneg %p221
        %p531 = pneg %p218
        %p532 = pneg %p242
        %p533 = pneg %p239
        %p534 = pneg %p263
        %p535 = pneg %p260
        %p536 = pneg %p284
        %p537 = pneg %p281
        %p538 = pneg %p305
        %p539 = pneg %p302
        %p540 = pneg %p326
        %p541 = pneg %p323
        %p542 = pneg %p347
        %p543 = pneg %p344
        %p544 = pneg %p368
        %p545 = pneg %p365
        %p546 = pneg %p389
        %p547 = pneg %p386
        %p548 = pneg %p415
        %p549 = pneg %p412
        %s550 = sand.u32 %s402, 1
        %s551 = scalar_lea.sflag [#allocation4], %s550
        %s552 = sand.u32 %s402, 1
        %s553 = smul.addr %s552, 8
        %s554 = scalar_lea.vmem [#allocation5], %s553
        %p555 = scmp.lt.s32.totalorder %s32, 1
        %s556 = scalar_select %p555, %s32, 1
        %s557 = smul.addr %s556, 8
        %s558 = scalar_lea.vmem %s0, %s557
        %v560 = vld [vmem:[%s558] sm:$0xff]
        %v561 = vlaneseq
        %v562 = vshrl.u32 %v561, 7
        %v563 = vlaneseq
        %v564 = vand.u32 %v563, 127
        %vm565 = vcmp.le.s32.totalorder %v564, %v562
        %v566 = vsel %vm565, 0.0, -inf
        %v567 = vld [vmem:[%s1] sm:$0x1]
        %v568 = vld [vmem:[%s2] sm:$0x1]
        %vm569 = vcmask 261120
        %v570 = vsel %vm569, %v560, 0.0
        %571 = vadd.xlane.f32.xlu0 %v570
        %v572 = vpop.xlane.xlu0 %571
        %v573 = vrcp.pop 32.0
        %v574 = vmul.f32 %v572, %v573
        %v575 = vsub.f32 %v560, %v574
        %v576 = vmul.f32 %v575, %v575
        %v577 = vsel %vm569, %v576, 0.0
        %578 = vadd.xlane.f32.xlu0 %v577
        %v579 = vpop.xlane.xlu0 %578
        %v580 = vmul.f32 %v579, %v573
        %v581 = vadd.f32 %v580, 1e-05
        %v582 = vrsqrt.pop %v581
        %v583 = vmul.f32 %v575, %v582
        %v585 = vlaneseq
        %v586 = vshrl.u32 %v585, 7
        %v587 = vsub.s32 0, %v586
        %v588 = vrot.slane %v567, %v587
        %v590 = vmul.f32 %v583, %v588
        %v592 = vlaneseq
        %v593 = vshrl.u32 %v592, 7
        %v594 = vsub.s32 0, %v593
        %v595 = vrot.slane %v568, %v594
        %v597 = vadd.f32 %v590, %v595
        %v598 = vpack.c.bf16 %v597, %v597
        %v599 = vld [vmem:[%s3] sm:$0xf]
        %v600 = vld [vmem:[%s3 + $0x4] sm:$0xf]
        %v601 = vld [vmem:[%s3 + $0x8] sm:$0xf]
        %v602 = vld [vmem:[%s3 + $0xc] sm:$0xf]
        %v603 = vld [vmem:[%s4] sm:$0x1]
        %v605 = vlaneseq
        %v606 = vshrl.u32 %v605, 7
        %v607 = vsub.s32 0, %v606
        %v608 = vrot.slane %v603, %v607
        %v614 = vunpack.c.l.b16 %v599
        %v615 = vunpack.c.l.b16 %v600
        %v616 = vunpack.c.l.b16 %v601
        %v617 = vunpack.c.l.b16 %v602
        %v618 = vpack.c.b16 %v615, %v614
        %v619 = vpack.c.b16 %v617, %v616
        %v623 = vsel %vm569, %v598, 0
        %625 = vmatprep.subr.bf16.mxu0 0
        %626 = vmatpush1.bf16.msra.mxu0 0
        %627 = vmatprep.subr.bf16.mxu0 0
        %628 = vmatpush1.bf16.msra.mxu0 0
        %629 = vmatprep.subr.bf16.mxu0 0
        %630 = vmatpush1.bf16.msra.mxu0 0
        %631 = vmatprep.subr.bf16.mxu0 0
        %632 = vmatpush1.bf16.msra.mxu0 0
        %633 = vmatprep.subr.bf16.mxu0 0
        %634 = vmatpush1.bf16.msra.mxu0 0
        %635 = vmatprep.subr.bf16.mxu0 0
        %636 = vmatpush1.bf16.msra.mxu0 0
        %637 = vmatprep.subr.bf16.mxu0 0
        %638 = vmatpush1.bf16.msra.mxu0 %v619
        %639 = vmatprep.subr.bf16.mxu0 0
        %640 = vmatpush1.bf16.msra.mxu0 %v618
        %641 = vmatprep.subr.bf16.mxu0 0
        %642 = vmatpush2.bf16.msra.mxu0 0
        %643 = vmatprep.subr.bf16.mxu0 0
        %644 = vmatpush2.bf16.msra.mxu0 0
        %645 = vmatprep.subr.bf16.mxu0 0
        %646 = vmatpush2.bf16.msra.mxu0 0
        %647 = vmatprep.subr.bf16.mxu0 0
        %648 = vmatpush2.bf16.msra.mxu0 0
        %649 = vmatprep.subr.bf16.mxu0 0
        %650 = vmatpush2.bf16.msra.mxu0 0
        %651 = vmatprep.subr.bf16.mxu0 0
        %652 = vmatpush2.bf16.msra.mxu0 0
        %653 = vmatprep.subr.bf16.mxu0 0
        %654 = vmatpush2.bf16.msra.mxu0 0
        %655 = vmatprep.subr.bf16.mxu0 0
        %656 = vmatpush2.bf16.msra.mxu0 0
        %657 = vmatprep.mubr.bf16.mxu0 0
        %658 = vmatmul.mubr.bf16.gmra.mxu0 %v623
        %v659 = vpop.f32.mrf.mxu0
        %v660 = vadd.f32 %v608, %v659
        %v661 = vpop.f32.mrf.mxu0
        %v662 = vpop.f32.mrf.mxu0
        %v663 = vpop.f32.mrf.mxu0
        %664 = vdwg.mxu0
        %v665 = vld [vmem:[%s5] sm:$0xf]
        %v666 = vld [vmem:[%s5 + $0x4] sm:$0xf]
        %v667 = vld [vmem:[%s5 + $0x8] sm:$0xf]
        %v668 = vld [vmem:[%s5 + $0xc] sm:$0xf]
        %v669 = vld [vmem:[%s6] sm:$0x1]
        %v671 = vlaneseq
        %v672 = vshrl.u32 %v671, 7
        %v673 = vsub.s32 0, %v672
        %v674 = vrot.slane %v669, %v673
        %v680 = vunpack.c.l.b16 %v665
        %v681 = vunpack.c.l.b16 %v666
        %v682 = vunpack.c.l.b16 %v667
        %v683 = vunpack.c.l.b16 %v668
        %v684 = vpack.c.b16 %v681, %v680
        %v685 = vpack.c.b16 %v683, %v682
        %688 = vmatprep.subr.bf16.mxu0 0
        %689 = vmatpush1.bf16.msra.mxu0 0
        %690 = vmatprep.subr.bf16.mxu0 0
        %691 = vmatpush1.bf16.msra.mxu0 0
        %692 = vmatprep.subr.bf16.mxu0 0
        %693 = vmatpush1.bf16.msra.mxu0 0
        %694 = vmatprep.subr.bf16.mxu0 0
        %695 = vmatpush1.bf16.msra.mxu0 0
        %696 = vmatprep.subr.bf16.mxu0 0
        %697 = vmatpush1.bf16.msra.mxu0 0
        %698 = vmatprep.subr.bf16.mxu0 0
        %699 = vmatpush1.bf16.msra.mxu0 0
        %700 = vmatprep.subr.bf16.mxu0 0
        %701 = vmatpush1.bf16.msra.mxu0 %v685
        %702 = vmatprep.subr.bf16.mxu0 0
        %703 = vmatpush1.bf16.msra.mxu0 %v684
        %704 = vmatprep.subr.bf16.mxu0 0
        %705 = vmatpush2.bf16.msra.mxu0 0
        %706 = vmatprep.subr.bf16.mxu0 0
        %707 = vmatpush2.bf16.msra.mxu0 0
        %708 = vmatprep.subr.bf16.mxu0 0
        %709 = vmatpush2.bf16.msra.mxu0 0
        %710 = vmatprep.subr.bf16.mxu0 0
        %711 = vmatpush2.bf16.msra.mxu0 0
        %712 = vmatprep.subr.bf16.mxu0 0
        %713 = vmatpush2.bf16.msra.mxu0 0
        %714 = vmatprep.subr.bf16.mxu0 0
        %715 = vmatpush2.bf16.msra.mxu0 0
        %716 = vmatprep.subr.bf16.mxu0 0
        %717 = vmatpush2.bf16.msra.mxu0 0
        %718 = vmatprep.subr.bf16.mxu0 0
        %719 = vmatpush2.bf16.msra.mxu0 0
        %720 = vmatprep.mubr.bf16.mxu0 0
        %721 = vmatmul.mubr.bf16.gmra.mxu0 %v623
        %v722 = vpop.f32.mrf.mxu0
        %v723 = vadd.f32 %v674, %v722
        %v724 = vpop.f32.mrf.mxu0
        %v725 = vpop.f32.mrf.mxu0
        %v726 = vpop.f32.mrf.mxu0
        %727 = vdwg.mxu0
        %v728 = vld [vmem:[%s7] sm:$0xf]
        %v729 = vld [vmem:[%s7 + $0x4] sm:$0xf]
        %v730 = vld [vmem:[%s7 + $0x8] sm:$0xf]
        %v731 = vld [vmem:[%s7 + $0xc] sm:$0xf]
        %v732 = vld [vmem:[%s8] sm:$0x1]
        %v734 = vlaneseq
        %v735 = vshrl.u32 %v734, 7
        %v736 = vsub.s32 0, %v735
        %v737 = vrot.slane %v732, %v736
        %v743 = vunpack.c.l.b16 %v728
        %v744 = vunpack.c.l.b16 %v729
        %v745 = vunpack.c.l.b16 %v730
        %v746 = vunpack.c.l.b16 %v731
        %v747 = vpack.c.b16 %v744, %v743
        %v748 = vpack.c.b16 %v746, %v745
        %751 = vmatprep.subr.bf16.mxu0 0
        %752 = vmatpush1.bf16.msra.mxu0 0
        %753 = vmatprep.subr.bf16.mxu0 0
        %754 = vmatpush1.bf16.msra.mxu0 0
        %755 = vmatprep.subr.bf16.mxu0 0
        %756 = vmatpush1.bf16.msra.mxu0 0
        %757 = vmatprep.subr.bf16.mxu0 0
        %758 = vmatpush1.bf16.msra.mxu0 0
        %759 = vmatprep.subr.bf16.mxu0 0
        %760 = vmatpush1.bf16.msra.mxu0 0
        %761 = vmatprep.subr.bf16.mxu0 0
        %762 = vmatpush1.bf16.msra.mxu0 0
        %763 = vmatprep.subr.bf16.mxu0 0
        %764 = vmatpush1.bf16.msra.mxu0 %v748
        %765 = vmatprep.subr.bf16.mxu0 0
        %766 = vmatpush1.bf16.msra.mxu0 %v747
        %767 = vmatprep.subr.bf16.mxu0 0
        %768 = vmatpush2.bf16.msra.mxu0 0
        %769 = vmatprep.subr.bf16.mxu0 0
        %770 = vmatpush2.bf16.msra.mxu0 0
        %771 = vmatprep.subr.bf16.mxu0 0
        %772 = vmatpush2.bf16.msra.mxu0 0
        %773 = vmatprep.subr.bf16.mxu0 0
        %774 = vmatpush2.bf16.msra.mxu0 0
        %775 = vmatprep.subr.bf16.mxu0 0
        %776 = vmatpush2.bf16.msra.mxu0 0
        %777 = vmatprep.subr.bf16.mxu0 0
        %778 = vmatpush2.bf16.msra.mxu0 0
        %779 = vmatprep.subr.bf16.mxu0 0
        %780 = vmatpush2.bf16.msra.mxu0 0
        %781 = vmatprep.subr.bf16.mxu0 0
        %782 = vmatpush2.bf16.msra.mxu0 0
        %783 = vmatprep.mubr.bf16.mxu0 0
        %784 = vmatmul.mubr.bf16.gmra.mxu0 %v623
        %v785 = vpop.f32.mrf.mxu0
        %v786 = vadd.f32 %v737, %v785
        %v787 = vpop.f32.mrf.mxu0
        %v788 = vpop.f32.mrf.mxu0
        %v789 = vpop.f32.mrf.mxu0
        %790 = vdwg.mxu0
        %v791 = vpack.c.bf16 %v660, %v660
        %v792 = vpack.c.bf16 %v723, %v723
        %v793 = vpack.c.bf16 %v786, %v786
        %vm794 = vcmask 64512
        %v796 = vsel %vm794, %v791, 0
        %v799 = vsel %vm794, %v792, 0
        %801 = vmatprep.subr.bf16.mxu0 0
        %802 = vmatpush1.bf16.xpose.msra.mxu0 0
        %803 = vmatprep.subr.bf16.mxu0 0
        %804 = vmatpush1.bf16.xpose.msra.mxu0 0
        %805 = vmatprep.subr.bf16.mxu0 0
        %806 = vmatpush1.bf16.xpose.msra.mxu0 0
        %807 = vmatprep.subr.bf16.mxu0 0
        %808 = vmatpush1.bf16.xpose.msra.mxu0 0
        %809 = vmatprep.subr.bf16.mxu0 0
        %810 = vmatpush1.bf16.xpose.msra.mxu0 0
        %811 = vmatprep.subr.bf16.mxu0 0
        %812 = vmatpush1.bf16.xpose.msra.mxu0 0
        %813 = vmatprep.subr.bf16.mxu0 0
        %814 = vmatpush1.bf16.xpose.msra.mxu0 0
        %815 = vmatprep.subr.bf16.mxu0 0
        %816 = vmatpush1.bf16.xpose.msra.mxu0 %v799
        %817 = vmatprep.subr.bf16.mxu0 0
        %818 = vmatpush2.bf16.xpose.msra.mxu0 0
        %819 = vmatprep.subr.bf16.mxu0 0
        %820 = vmatpush2.bf16.xpose.msra.mxu0 0
        %821 = vmatprep.subr.bf16.mxu0 0
        %822 = vmatpush2.bf16.xpose.msra.mxu0 0
        %823 = vmatprep.subr.bf16.mxu0 0
        %824 = vmatpush2.bf16.xpose.msra.mxu0 0
        %825 = vmatprep.subr.bf16.mxu0 0
        %826 = vmatpush2.bf16.xpose.msra.mxu0 0
        %827 = vmatprep.subr.bf16.mxu0 0
        %828 = vmatpush2.bf16.xpose.msra.mxu0 0
        %829 = vmatprep.subr.bf16.mxu0 0
        %830 = vmatpush2.bf16.xpose.msra.mxu0 0
        %831 = vmatprep.subr.bf16.mxu0 0
        %832 = vmatpush2.bf16.xpose.msra.mxu0 0
        %833 = vmatprep.mubr.bf16.mxu0 0
        %834 = vmatmul.mubr.bf16.gmra.mxu0 %v796
        %v835 = vpop.f32.mrf.mxu0
        %v836 = vadd.f32 %v566, %v835
        %v837 = vpop.f32.mrf.mxu0
        %v838 = vpop.f32.mrf.mxu0
        %v839 = vpop.f32.mrf.mxu0
        %840 = vdwg.mxu0
        %v841 = vsel %vm794, %v836, -inf
        %842 = vmax.xlane.f32.xlu0 %v841
        %v843 = vpop.xlane.xlu0 %842
        %v844 = vsub.f32 %v836, %v843
        %v845 = vmul.f32 %v844, 1.442695
        %v846 = vpow.pop %v845
        %v847 = vsel %vm794, %v846, 0.0
        %848 = vadd.xlane.f32.xlu0 %v847
        %v849 = vpop.xlane.xlu0 %848
        %v850 = vpack.c.bf16 %v846, %v846
        %v852 = vsel %vm794, %v850, 0
        %vm854 = vcmask 1043456
        %v856 = vsel %vm854, %v793, 0
        %858 = vmatprep.subr.bf16.mxu0 0
        %859 = vmatpush1.bf16.msra.mxu0 0
        %860 = vmatprep.subr.bf16.mxu0 0
        %861 = vmatpush1.bf16.msra.mxu0 0
        %862 = vmatprep.subr.bf16.mxu0 0
        %863 = vmatpush1.bf16.msra.mxu0 0
        %864 = vmatprep.subr.bf16.mxu0 0
        %865 = vmatpush1.bf16.msra.mxu0 0
        %866 = vmatprep.subr.bf16.mxu0 0
        %867 = vmatpush1.bf16.msra.mxu0 0
        %868 = vmatprep.subr.bf16.mxu0 0
        %869 = vmatpush1.bf16.msra.mxu0 0
        %870 = vmatprep.subr.bf16.mxu0 0
        %871 = vmatpush1.bf16.msra.mxu0 0
        %872 = vmatprep.subr.bf16.mxu0 0
        %873 = vmatpush1.bf16.msra.mxu0 %v856
        %874 = vmatprep.subr.bf16.mxu0 0
        %875 = vmatpush2.bf16.msra.mxu0 0
        %876 = vmatprep.subr.bf16.mxu0 0
        %877 = vmatpush2.bf16.msra.mxu0 0
        %878 = vmatprep.subr.bf16.mxu0 0
        %879 = vmatpush2.bf16.msra.mxu0 0
        %880 = vmatprep.subr.bf16.mxu0 0
        %881 = vmatpush2.bf16.msra.mxu0 0
        %882 = vmatprep.subr.bf16.mxu0 0
        %883 = vmatpush2.bf16.msra.mxu0 0
        %884 = vmatprep.subr.bf16.mxu0 0
        %885 = vmatpush2.bf16.msra.mxu0 0
        %886 = vmatprep.subr.bf16.mxu0 0
        %887 = vmatpush2.bf16.msra.mxu0 0
        %888 = vmatprep.subr.bf16.mxu0 0
        %889 = vmatpush2.bf16.msra.mxu0 0
        %890 = vmatprep.mubr.bf16.mxu0 0
        %891 = vmatmul.mubr.bf16.gmra.mxu0 %v852
        %v892 = vpop.f32.mrf.mxu0
        %v893 = vadd.f32 0.0, %v892
        %v894 = vpop.f32.mrf.mxu0
        %v895 = vpop.f32.mrf.mxu0
        %v896 = vpop.f32.mrf.mxu0
        %897 = vdwg.mxu0
        %v898 = vrcp.pop %v849
        %v899 = vmul.f32 %v849, %v898
        %v900 = vsub.f32 2.0, %v899
        %v901 = vmul.f32 %v898, %v900
        %v902 = vmul.f32 %v893, %v901
        %904 = vrot.lane.b32.xlu0 %v791, 120
        %v905 = vpop.permute.xlu0 %904
        %907 = vrot.lane.b32.xlu0 %v792, 120
        %v908 = vpop.permute.xlu0 %907
        %v910 = vsel %vm794, %v905, 0
        %v913 = vsel %vm794, %v908, 0
        %915 = vmatprep.subr.bf16.mxu0 0
        %916 = vmatpush1.bf16.xpose.msra.mxu0 0
        %917 = vmatprep.subr.bf16.mxu0 0
        %918 = vmatpush1.bf16.xpose.msra.mxu0 0
        %919 = vmatprep.subr.bf16.mxu0 0
        %920 = vmatpush1.bf16.xpose.msra.mxu0 0
        %921 = vmatprep.subr.bf16.mxu0 0
        %922 = vmatpush1.bf16.xpose.msra.mxu0 0
        %923 = vmatprep.subr.bf16.mxu0 0
        %924 = vmatpush1.bf16.xpose.msra.mxu0 0
        %925 = vmatprep.subr.bf16.mxu0 0
        %926 = vmatpush1.bf16.xpose.msra.mxu0 0
        %927 = vmatprep.subr.bf16.mxu0 0
        %928 = vmatpush1.bf16.xpose.msra.mxu0 0
        %929 = vmatprep.subr.bf16.mxu0 0
        %930 = vmatpush1.bf16.xpose.msra.mxu0 %v913
        %931 = vmatprep.subr.bf16.mxu0 0
        %932 = vmatpush2.bf16.xpose.msra.mxu0 0
        %933 = vmatprep.subr.bf16.mxu0 0
        %934 = vmatpush2.bf16.xpose.msra.mxu0 0
        %935 = vmatprep.subr.bf16.mxu0 0
        %936 = vmatpush2.bf16.xpose.msra.mxu0 0
        %937 = vmatprep.subr.bf16.mxu0 0
        %938 = vmatpush2.bf16.xpose.msra.mxu0 0
        %939 = vmatprep.subr.bf16.mxu0 0
        %940 = vmatpush2.bf16.xpose.msra.mxu0 0
        %941 = vmatprep.subr.bf16.mxu0 0
        %942 = vmatpush2.bf16.xpose.msra.mxu0 0
        %943 = vmatprep.subr.bf16.mxu0 0
        %944 = vmatpush2.bf16.xpose.msra.mxu0 0
        %945 = vmatprep.subr.bf16.mxu0 0
        %946 = vmatpush2.bf16.xpose.msra.mxu0 0
        %947 = vmatprep.mubr.bf16.mxu0 0
        %948 = vmatmul.mubr.bf16.gmra.mxu0 %v910
        %v949 = vpop.f32.mrf.mxu0
        %v950 = vadd.f32 %v566, %v949
        %v951 = vpop.f32.mrf.mxu0
        %v952 = vpop.f32.mrf.mxu0
        %v953 = vpop.f32.mrf.mxu0
        %954 = vdwg.mxu0
        %v955 = vsel %vm794, %v950, -inf
        %956 = vmax.xlane.f32.xlu0 %v955
        %v957 = vpop.xlane.xlu0 %956
        %v958 = vsub.f32 %v950, %v957
        %v959 = vmul.f32 %v958, 1.442695
        %v960 = vpow.pop %v959
        %v961 = vsel %vm794, %v960, 0.0
        %962 = vadd.xlane.f32.xlu0 %v961
        %v963 = vpop.xlane.xlu0 %962
        %v964 = vpack.c.bf16 %v960, %v960
        %966 = vrot.lane.b32.xlu0 %v793, 120
        %v967 = vpop.permute.xlu0 %966
        %v969 = vsel %vm794, %v964, 0
        %v972 = vsel %vm854, %v967, 0
        %974 = vmatprep.subr.bf16.mxu0 0
        %975 = vmatpush1.bf16.msra.mxu0 0
        %976 = vmatprep.subr.bf16.mxu0 0
        %977 = vmatpush1.bf16.msra.mxu0 0
        %978 = vmatprep.subr.bf16.mxu0 0
        %979 = vmatpush1.bf16.msra.mxu0 0
        %980 = vmatprep.subr.bf16.mxu0 0
        %981 = vmatpush1.bf16.msra.mxu0 0
        %982 = vmatprep.subr.bf16.mxu0 0
        %983 = vmatpush1.bf16.msra.mxu0 0
        %984 = vmatprep.subr.bf16.mxu0 0
        %985 = vmatpush1.bf16.msra.mxu0 0
        %986 = vmatprep.subr.bf16.mxu0 0
        %987 = vmatpush1.bf16.msra.mxu0 0
        %988 = vmatprep.subr.bf16.mxu0 0
        %989 = vmatpush1.bf16.msra.mxu0 %v972
        %990 = vmatprep.subr.bf16.mxu0 0
        %991 = vmatpush2.bf16.msra.mxu0 0
        %992 = vmatprep.subr.bf16.mxu0 0
        %993 = vmatpush2.bf16.msra.mxu0 0
        %994 = vmatprep.subr.bf16.mxu0 0
        %995 = vmatpush2.bf16.msra.mxu0 0
        %996 = vmatprep.subr.bf16.mxu0 0
        %997 = vmatpush2.bf16.msra.mxu0 0
        %998 = vmatprep.subr.bf16.mxu0 0
        %999 = vmatpush2.bf16.msra.mxu0 0
        %1000 = vmatprep.subr.bf16.mxu0 0
        %1001 = vmatpush2.bf16.msra.mxu0 0
        %1002 = vmatprep.subr.bf16.mxu0 0
        %1003 = vmatpush2.bf16.msra.mxu0 0
        %1004 = vmatprep.subr.bf16.mxu0 0
        %1005 = vmatpush2.bf16.msra.mxu0 0
        %1006 = vmatprep.mubr.bf16.mxu0 0
        %1007 = vmatmul.mubr.bf16.gmra.mxu0 %v969
        %v1008 = vpop.f32.mrf.mxu0
        %v1009 = vadd.f32 0.0, %v1008
        %v1010 = vpop.f32.mrf.mxu0
        %v1011 = vpop.f32.mrf.mxu0
        %v1012 = vpop.f32.mrf.mxu0
        %1013 = vdwg.mxu0
        %v1014 = vrcp.pop %v963
        %v1015 = vmul.f32 %v963, %v1014
        %v1016 = vsub.f32 2.0, %v1015
        %v1017 = vmul.f32 %v1014, %v1016
        %v1018 = vmul.f32 %v1009, %v1017
        %1019 = vrot.lane.b32.xlu0 %v791, 112
        %v1020 = vpop.permute.xlu0 %1019
        %1021 = vrot.lane.b32.xlu0 %v792, 112
        %v1022 = vpop.permute.xlu0 %1021
        %v1024 = vsel %vm794, %v1020, 0
        %v1027 = vsel %vm794, %v1022, 0
        %1029 = vmatprep.subr.bf16.mxu0 0
        %1030 = vmatpush1.bf16.xpose.msra.mxu0 0
        %1031 = vmatprep.subr.bf16.mxu0 0
        %1032 = vmatpush1.bf16.xpose.msra.mxu0 0
        %1033 = vmatprep.subr.bf16.mxu0 0
        %1034 = vmatpush1.bf16.xpose.msra.mxu0 0
        %1035 = vmatprep.subr.bf16.mxu0 0
        %1036 = vmatpush1.bf16.xpose.msra.mxu0 0
        %1037 = vmatprep.subr.bf16.mxu0 0
        %1038 = vmatpush1.bf16.xpose.msra.mxu0 0
        %1039 = vmatprep.subr.bf16.mxu0 0
        %1040 = vmatpush1.bf16.xpose.msra.mxu0 0
        %1041 = vmatprep.subr.bf16.mxu0 0
        %1042 = vmatpush1.bf16.xpose.msra.mxu0 0
        %1043 = vmatprep.subr.bf16.mxu0 0
        %1044 = vmatpush1.bf16.xpose.msra.mxu0 %v1027
        %1045 = vmatprep.subr.bf16.mxu0 0
        %1046 = vmatpush2.bf16.xpose.msra.mxu0 0
        %1047 = vmatprep.subr.bf16.mxu0 0
        %1048 = vmatpush2.bf16.xpose.msra.mxu0 0
        %1049 = vmatprep.subr.bf16.mxu0 0
        %1050 = vmatpush2.bf16.xpose.msra.mxu0 0
        %1051 = vmatprep.subr.bf16.mxu0 0
        %1052 = vmatpush2.bf16.xpose.msra.mxu0 0
        %1053 = vmatprep.subr.bf16.mxu0 0
        %1054 = vmatpush2.bf16.xpose.msra.mxu0 0
        %1055 = vmatprep.subr.bf16.mxu0 0
        %1056 = vmatpush2.bf16.xpose.msra.mxu0 0
        %1057 = vmatprep.subr.bf16.mxu0 0
        %1058 = vmatpush2.bf16.xpose.msra.mxu0 0
        %1059 = vmatprep.subr.bf16.mxu0 0
        %1060 = vmatpush2.bf16.xpose.msra.mxu0 0
        %1061 = vmatprep.mubr.bf16.mxu0 0
        %1062 = vmatmul.mubr.bf16.gmra.mxu0 %v1024
        %v1063 = vpop.f32.mrf.mxu0
        %v1064 = vadd.f32 %v566, %v1063
        %v1065 = vpop.f32.mrf.mxu0
        %v1066 = vpop.f32.mrf.mxu0
        %v1067 = vpop.f32.mrf.mxu0
        %1068 = vdwg.mxu0
        %v1069 = vsel %vm794, %v1064, -inf
        %1070 = vmax.xlane.f32.xlu0 %v1069
        %v1071 = vpop.xlane.xlu0 %1070
        %v1072 = vsub.f32 %v1064, %v1071
        %v1073 = vmul.f32 %v1072, 1.442695
        %v1074 = vpow.pop %v1073
        %v1075 = vsel %vm794, %v1074, 0.0
        %1076 = vadd.xlane.f32.xlu0 %v1075
        %v1077 = vpop.xlane.xlu0 %1076
        %v1078 = vpack.c.bf16 %v1074, %v1074
        %1079 = vrot.lane.b32.xlu0 %v793, 112
        %v1080 = vpop.permute.xlu0 %1079
        %v1082 = vsel %vm794, %v1078, 0
        %v1085 = vsel %vm854, %v1080, 0
        %1087 = vmatprep.subr.bf16.mxu0 0
        %1088 = vmatpush1.bf16.msra.mxu0 0
        %1089 = vmatprep.subr.bf16.mxu0 0
        %1090 = vmatpush1.bf16.msra.mxu0 0
        %1091 = vmatprep.subr.bf16.mxu0 0
        %1092 = vmatpush1.bf16.msra.mxu0 0
        %1093 = vmatprep.subr.bf16.mxu0 0
        %1094 = vmatpush1.bf16.msra.mxu0 0
        %1095 = vmatprep.subr.bf16.mxu0 0
        %1096 = vmatpush1.bf16.msra.mxu0 0
        %1097 = vmatprep.subr.bf16.mxu0 0
        %1098 = vmatpush1.bf16.msra.mxu0 0
        %1099 = vmatprep.subr.bf16.mxu0 0
        %1100 = vmatpush1.bf16.msra.mxu0 0
        %1101 = vmatprep.subr.bf16.mxu0 0
        %1102 = vmatpush1.bf16.msra.mxu0 %v1085
        %1103 = vmatprep.subr.bf16.mxu0 0
        %1104 = vmatpush2.bf16.msra.mxu0 0
        %1105 = vmatprep.subr.bf16.mxu0 0
        %1106 = vmatpush2.bf16.msra.mxu0 0
        %1107 = vmatprep.subr.bf16.mxu0 0
        %1108 = vmatpush2.bf16.msra.mxu0 0
        %1109 = vmatprep.subr.bf16.mxu0 0
        %1110 = vmatpush2.bf16.msra.mxu0 0
        %1111 = vmatprep.subr.bf16.mxu0 0
        %1112 = vmatpush2.bf16.msra.mxu0 0
        %1113 = vmatprep.subr.bf16.mxu0 0
        %1114 = vmatpush2.bf16.msra.mxu0 0
        %1115 = vmatprep.subr.bf16.mxu0 0
        %1116 = vmatpush2.bf16.msra.mxu0 0
        %1117 = vmatprep.subr.bf16.mxu0 0
        %1118 = vmatpush2.bf16.msra.mxu0 0
        %1119 = vmatprep.mubr.bf16.mxu0 0
        %1120 = vmatmul.mubr.bf16.gmra.mxu0 %v1082
        %v1121 = vpop.f32.mrf.mxu0
        %v1122 = vadd.f32 0.0, %v1121
        %v1123 = vpop.f32.mrf.mxu0
        %v1124 = vpop.f32.mrf.mxu0
        %v1125 = vpop.f32.mrf.mxu0
        %1126 = vdwg.mxu0
        %v1127 = vrcp.pop %v1077
        %v1128 = vmul.f32 %v1077, %v1127
        %v1129 = vsub.f32 2.0, %v1128
        %v1130 = vmul.f32 %v1127, %v1129
        %v1131 = vmul.f32 %v1122, %v1130
        %1132 = vrot.lane.b32.xlu0 %v791, 104
        %v1133 = vpop.permute.xlu0 %1132
        %1134 = vrot.lane.b32.xlu0 %v792, 104
        %v1135 = vpop.permute.xlu0 %1134
        %v1137 = vsel %vm794, %v1133, 0
        %v1140 = vsel %vm794, %v1135, 0
        %1142 = vmatprep.subr.bf16.mxu0 0
        %1143 = vmatpush1.bf16.xpose.msra.mxu0 0
        %1144 = vmatprep.subr.bf16.mxu0 0
        %1145 = vmatpush1.bf16.xpose.msra.mxu0 0
        %1146 = vmatprep.subr.bf16.mxu0 0
        %1147 = vmatpush1.bf16.xpose.msra.mxu0 0
        %1148 = vmatprep.subr.bf16.mxu0 0
        %1149 = vmatpush1.bf16.xpose.msra.mxu0 0
        %1150 = vmatprep.subr.bf16.mxu0 0
        %1151 = vmatpush1.bf16.xpose.msra.mxu0 0
        %1152 = vmatprep.subr.bf16.mxu0 0
        %1153 = vmatpush1.bf16.xpose.msra.mxu0 0
        %1154 = vmatprep.subr.bf16.mxu0 0
        %1155 = vmatpush1.bf16.xpose.msra.mxu0 0
        %1156 = vmatprep.subr.bf16.mxu0 0
        %1157 = vmatpush1.bf16.xpose.msra.mxu0 %v1140
        %1158 = vmatprep.subr.bf16.mxu0 0
        %1159 = vmatpush2.bf16.xpose.msra.mxu0 0
        %1160 = vmatprep.subr.bf16.mxu0 0
        %1161 = vmatpush2.bf16.xpose.msra.mxu0 0
        %1162 = vmatprep.subr.bf16.mxu0 0
        %1163 = vmatpush2.bf16.xpose.msra.mxu0 0
        %1164 = vmatprep.subr.bf16.mxu0 0
        %1165 = vmatpush2.bf16.xpose.msra.mxu0 0
        %1166 = vmatprep.subr.bf16.mxu0 0
        %1167 = vmatpush2.bf16.xpose.msra.mxu0 0
        %1168 = vmatprep.subr.bf16.mxu0 0
        %1169 = vmatpush2.bf16.xpose.msra.mxu0 0
        %1170 = vmatprep.subr.bf16.mxu0 0
        %1171 = vmatpush2.bf16.xpose.msra.mxu0 0
        %1172 = vmatprep.subr.bf16.mxu0 0
        %1173 = vmatpush2.bf16.xpose.msra.mxu0 0
        %1174 = vmatprep.mubr.bf16.mxu0 0
        %1175 = vmatmul.mubr.bf16.gmra.mxu0 %v1137
        %v1176 = vpop.f32.mrf.mxu0
        %v1177 = vadd.f32 %v566, %v1176
        %v1178 = vpop.f32.mrf.mxu0
        %v1179 = vpop.f32.mrf.mxu0
        %v1180 = vpop.f32.mrf.mxu0
        %1181 = vdwg.mxu0
        %v1182 = vsel %vm794, %v1177, -inf
        %1183 = vmax.xlane.f32.xlu0 %v1182
        %v1184 = vpop.xlane.xlu0 %1183
        %v1185 = vsub.f32 %v1177, %v1184
        %v1186 = vmul.f32 %v1185, 1.442695
        %v1187 = vpow.pop %v1186
        %v1188 = vsel %vm794, %v1187, 0.0
        %1189 = vadd.xlane.f32.xlu0 %v1188
        %v1190 = vpop.xlane.xlu0 %1189
        %v1191 = vpack.c.bf16 %v1187, %v1187
        %1192 = vrot.lane.b32.xlu0 %v793, 104
        %v1193 = vpop.permute.xlu0 %1192
        %v1195 = vsel %vm794, %v1191, 0
        %v1198 = vsel %vm854, %v1193, 0
        %1200 = vmatprep.subr.bf16.mxu0 0
        %1201 = vmatpush1.bf16.msra.mxu0 0
        %1202 = vmatprep.subr.bf16.mxu0 0
        %1203 = vmatpush1.bf16.msra.mxu0 0
        %1204 = vmatprep.subr.bf16.mxu0 0
        %1205 = vmatpush1.bf16.msra.mxu0 0
        %1206 = vmatprep.subr.bf16.mxu0 0
        %1207 = vmatpush1.bf16.msra.mxu0 0
        %1208 = vmatprep.subr.bf16.mxu0 0
        %1209 = vmatpush1.bf16.msra.mxu0 0
        %1210 = vmatprep.subr.bf16.mxu0 0
        %1211 = vmatpush1.bf16.msra.mxu0 0
        %1212 = vmatprep.subr.bf16.mxu0 0
        %1213 = vmatpush1.bf16.msra.mxu0 0
        %1214 = vmatprep.subr.bf16.mxu0 0
        %1215 = vmatpush1.bf16.msra.mxu0 %v1198
        %1216 = vmatprep.subr.bf16.mxu0 0
        %1217 = vmatpush2.bf16.msra.mxu0 0
        %1218 = vmatprep.subr.bf16.mxu0 0
        %1219 = vmatpush2.bf16.msra.mxu0 0
        %1220 = vmatprep.subr.bf16.mxu0 0
        %1221 = vmatpush2.bf16.msra.mxu0 0
        %1222 = vmatprep.subr.bf16.mxu0 0
        %1223 = vmatpush2.bf16.msra.mxu0 0
        %1224 = vmatprep.subr.bf16.mxu0 0
        %1225 = vmatpush2.bf16.msra.mxu0 0
        %1226 = vmatprep.subr.bf16.mxu0 0
        %1227 = vmatpush2.bf16.msra.mxu0 0
        %1228 = vmatprep.subr.bf16.mxu0 0
        %1229 = vmatpush2.bf16.msra.mxu0 0
        %1230 = vmatprep.subr.bf16.mxu0 0
        %1231 = vmatpush2.bf16.msra.mxu0 0
        %1232 = vmatprep.mubr.bf16.mxu0 0
        %1233 = vmatmul.mubr.bf16.gmra.mxu0 %v1195
        %v1234 = vpop.f32.mrf.mxu0
        %v1235 = vadd.f32 0.0, %v1234
        %v1236 = vpop.f32.mrf.mxu0
        %v1237 = vpop.f32.mrf.mxu0
        %v1238 = vpop.f32.mrf.mxu0
        %1239 = vdwg.mxu0
        %v1240 = vrcp.pop %v1190
        %v1241 = vmul.f32 %v1190, %v1240
        %v1242 = vsub.f32 2.0, %v1241
        %v1243 = vmul.f32 %v1240, %v1242
        %v1244 = vmul.f32 %v1235, %v1243
        %1246 = vrot.lane.b32.xlu0 %v1018, 8
        %v1247 = vpop.permute.xlu0 %1246
        %1250 = vrot.lane.b32.xlu0 %v1131, 16
        %v1251 = vpop.permute.xlu0 %1250
        %1254 = vrot.lane.b32.xlu0 %v1244, 24
        %v1255 = vpop.permute.xlu0 %1254
        %v1257 = vsel %vm794, %v902, %v1247
        %vm1258 = vcmask 130048
        %v1259 = vsel %vm1258, %v1257, %v1251
        %vm1260 = vcmask 195584
        %v1261 = vsel %vm1260, %v1259, %v1255
        %v1262 = vpack.c.bf16 %v1261, %v1261
        %v1263 = vld [vmem:[%s9] sm:$0xf]
        %v1264 = vld [vmem:[%s9 + $0x4] sm:$0xf]
        %v1265 = vld [vmem:[%s9 + $0x8] sm:$0xf]
        %v1266 = vld [vmem:[%s9 + $0xc] sm:$0xf]
        %v1267 = vld [vmem:[%s10] sm:$0x1]
        %v1269 = vlaneseq
        %v1270 = vshrl.u32 %v1269, 7
        %v1271 = vsub.s32 0, %v1270
        %v1272 = vrot.slane %v1267, %v1271
        %v1278 = vunpack.c.l.b16 %v1263
        %v1279 = vunpack.c.l.b16 %v1264
        %v1280 = vunpack.c.l.b16 %v1265
        %v1281 = vunpack.c.l.b16 %v1266
        %v1282 = vpack.c.b16 %v1279, %v1278
        %v1283 = vpack.c.b16 %v1281, %v1280
        %v1287 = vsel %vm569, %v1262, 0
        %1289 = vmatprep.subr.bf16.mxu0 0
        %1290 = vmatpush1.bf16.msra.mxu0 0
        %1291 = vmatprep.subr.bf16.mxu0 0
        %1292 = vmatpush1.bf16.msra.mxu0 0
        %1293 = vmatprep.subr.bf16.mxu0 0
        %1294 = vmatpush1.bf16.msra.mxu0 0
        %1295 = vmatprep.subr.bf16.mxu0 0
        %1296 = vmatpush1.bf16.msra.mxu0 0
        %1297 = vmatprep.subr.bf16.mxu0 0
        %1298 = vmatpush1.bf16.msra.mxu0 0
        %1299 = vmatprep.subr.bf16.mxu0 0
        %1300 = vmatpush1.bf16.msra.mxu0 0
        %1301 = vmatprep.subr.bf16.mxu0 0
        %1302 = vmatpush1.bf16.msra.mxu0 %v1283
        %1303 = vmatprep.subr.bf16.mxu0 0
        %1304 = vmatpush1.bf16.msra.mxu0 %v1282
        %1305 = vmatprep.subr.bf16.mxu0 0
        %1306 = vmatpush2.bf16.msra.mxu0 0
        %1307 = vmatprep.subr.bf16.mxu0 0
        %1308 = vmatpush2.bf16.msra.mxu0 0
        %1309 = vmatprep.subr.bf16.mxu0 0
        %1310 = vmatpush2.bf16.msra.mxu0 0
        %1311 = vmatprep.subr.bf16.mxu0 0
        %1312 = vmatpush2.bf16.msra.mxu0 0
        %1313 = vmatprep.subr.bf16.mxu0 0
        %1314 = vmatpush2.bf16.msra.mxu0 0
        %1315 = vmatprep.subr.bf16.mxu0 0
        %1316 = vmatpush2.bf16.msra.mxu0 0
        %1317 = vmatprep.subr.bf16.mxu0 0
        %1318 = vmatpush2.bf16.msra.mxu0 0
        %1319 = vmatprep.subr.bf16.mxu0 0
        %1320 = vmatpush2.bf16.msra.mxu0 0
        %1321 = vmatprep.mubr.bf16.mxu0 0
        %1322 = vmatmul.mubr.bf16.gmra.mxu0 %v1287
        %v1323 = vpop.f32.mrf.mxu0
        %v1324 = vadd.f32 %v1272, %v1323
        %v1325 = vpop.f32.mrf.mxu0
        %v1326 = vpop.f32.mrf.mxu0
        %v1327 = vpop.f32.mrf.mxu0
        %1328 = vdwg.mxu0
        %v1329 = vadd.f32 %v560, %v1324
        %v1330 = vld [vmem:[%s11] sm:$0x1]
        %v1331 = vld [vmem:[%s12] sm:$0x1]
        %v1332 = vsel %vm569, %v1329, 0.0
        %1333 = vadd.xlane.f32.xlu0 %v1332
        %v1334 = vpop.xlane.xlu0 %1333
        %v1335 = vmul.f32 %v1334, %v573
        %v1336 = vsub.f32 %v1329, %v1335
        %v1337 = vmul.f32 %v1336, %v1336
        %v1338 = vsel %vm569, %v1337, 0.0
        %1339 = vadd.xlane.f32.xlu0 %v1338
        %v1340 = vpop.xlane.xlu0 %1339
        %v1341 = vmul.f32 %v1340, %v573
        %v1342 = vadd.f32 %v1341, 1e-05
        %v1343 = vrsqrt.pop %v1342
        %v1344 = vmul.f32 %v1336, %v1343
        %v1346 = vlaneseq
        %v1347 = vshrl.u32 %v1346, 7
        %v1348 = vsub.s32 0, %v1347
        %v1349 = vrot.slane %v1330, %v1348
        %v1351 = vmul.f32 %v1344, %v1349
        %v1353 = vlaneseq
        %v1354 = vshrl.u32 %v1353, 7
        %v1355 = vsub.s32 0, %v1354
        %v1356 = vrot.slane %v1331, %v1355
        %v1358 = vadd.f32 %v1351, %v1356
        %v1359 = vpack.c.bf16 %v1358, %v1358
        %v1360 = vld [vmem:[#allocation2] sm:$0xf]
        %v1361 = vld [vmem:[#allocation2 + $0x4] sm:$0xf]
        %v1362 = vld [vmem:[#allocation2 + $0x8] sm:$0xf]
        %v1363 = vld [vmem:[#allocation2 + $0xc] sm:$0xf]
        %v1364 = vld [vmem:[%s14] sm:$0x1]
        %v1366 = vlaneseq
        %v1367 = vshrl.u32 %v1366, 7
        %v1368 = vsub.s32 0, %v1367
        %v1369 = vrot.slane %v1364, %v1368
        %v1375 = vunpack.c.l.b16 %v1360
        %v1376 = vunpack.c.l.b16 %v1361
        %v1377 = vunpack.c.l.b16 %v1362
        %v1378 = vunpack.c.l.b16 %v1363
        %v1379 = vpack.c.b16 %v1376, %v1375
        %v1380 = vpack.c.b16 %v1378, %v1377
        %v1384 = vsel %vm569, %v1359, 0
        %1386 = vmatprep.subr.bf16.mxu0 0
        %1387 = vmatpush1.bf16.msra.mxu0 0
        %1388 = vmatprep.subr.bf16.mxu0 0
        %1389 = vmatpush1.bf16.msra.mxu0 0
        %1390 = vmatprep.subr.bf16.mxu0 0
        %1391 = vmatpush1.bf16.msra.mxu0 0
        %1392 = vmatprep.subr.bf16.mxu0 0
        %1393 = vmatpush1.bf16.msra.mxu0 0
        %1394 = vmatprep.subr.bf16.mxu0 0
        %1395 = vmatpush1.bf16.msra.mxu0 0
        %1396 = vmatprep.subr.bf16.mxu0 0
        %1397 = vmatpush1.bf16.msra.mxu0 0
        %1398 = vmatprep.subr.bf16.mxu0 0
        %1399 = vmatpush1.bf16.msra.mxu0 %v1380
        %1400 = vmatprep.subr.bf16.mxu0 0
        %1401 = vmatpush1.bf16.msra.mxu0 %v1379
        %1402 = vmatprep.subr.bf16.mxu0 0
        %1403 = vmatpush2.bf16.msra.mxu0 0
        %1404 = vmatprep.subr.bf16.mxu0 0
        %1405 = vmatpush2.bf16.msra.mxu0 0
        %1406 = vmatprep.subr.bf16.mxu0 0
        %1407 = vmatpush2.bf16.msra.mxu0 0
        %1408 = vmatprep.subr.bf16.mxu0 0
        %1409 = vmatpush2.bf16.msra.mxu0 0
        %1410 = vmatprep.subr.bf16.mxu0 0
        %1411 = vmatpush2.bf16.msra.mxu0 0
        %1412 = vmatprep.subr.bf16.mxu0 0
        %1413 = vmatpush2.bf16.msra.mxu0 0
        %1414 = vmatprep.subr.bf16.mxu0 0
        %1415 = vmatpush2.bf16.msra.mxu0 0
        %1416 = vmatprep.subr.bf16.mxu0 0
        %1417 = vmatpush2.bf16.msra.mxu0 0
        %1418 = vmatprep.mubr.bf16.mxu0 0
        %1419 = vmatmul.mubr.bf16.gmra.mxu0 %v1384
        %v1420 = vpop.f32.mrf.mxu0
        %v1421 = vadd.f32 %v1369, %v1420
        %v1422 = vpop.f32.mrf.mxu0
        %v1423 = vpop.f32.mrf.mxu0
        %v1424 = vpop.f32.mrf.mxu0
        %1425 = vdwg.mxu0
        %v1426 = vmul.f32 %v1421, 0.5
        %v1427 = vmul.f32 %v1421, 0.70710677
        %vm1428 = vcmp.ge.f32.partialorder %v1427, 0.0
        %v1429 = vsel %vm1428, 1.0, -1.0
        %v1430 = vand.u32 2147483647, %v1427
        %v1431 = vmul.f32 %v1430, 0.3275911
        %v1432 = vadd.f32 %v1431, 1.0
        %v1433 = vrcp.pop %v1432
        %v1434 = vmul.f32 %v1432, %v1433
        %v1435 = vsub.f32 2.0, %v1434
        %v1436 = vmul.f32 %v1433, %v1435
        %v1437 = vmul.f32 %v1436, 1.0614054
        %v1438 = vadd.f32 %v1437, -1.4531521
        %v1439 = vmul.f32 %v1438, %v1436
        %v1440 = vadd.f32 %v1439, 1.4214138
        %v1441 = vmul.f32 %v1440, %v1436
        %v1442 = vadd.f32 %v1441, -0.28449672
        %v1443 = vmul.f32 %v1442, %v1436
        %v1444 = vadd.f32 %v1443, 0.2548296
        %v1445 = vmul.f32 %v1444, %v1436
        %v1446 = vsub.f32 0.0, %v1430
        %v1447 = vmul.f32 %v1446, %v1430
        %v1448 = vmul.f32 %v1447, 1.442695
        %v1449 = vpow.pop %v1448
        %v1450 = vmul.f32 %v1445, %v1449
        %v1451 = vsub.f32 1.0, %v1450
        %v1452 = vmul.f32 %v1429, %v1451
        %v1453 = vadd.f32 %v1452, 1.0
        %v1454 = vmul.f32 %v1426, %v1453
        %v1455 = vpack.c.bf16 %v1454, %v1454
        %v1456 = vld [vmem:[%s15] sm:$0xf]
        %v1457 = vld [vmem:[%s15 + $0x4] sm:$0xf]
        %v1458 = vld [vmem:[%s15 + $0x8] sm:$0xf]
        %v1459 = vld [vmem:[%s15 + $0xc] sm:$0xf]
        %v1460 = vld [vmem:[%s15 + $0x10] sm:$0xf]
        %v1461 = vld [vmem:[%s15 + $0x14] sm:$0xf]
        %v1462 = vld [vmem:[%s15 + $0x18] sm:$0xf]
        %v1463 = vld [vmem:[%s15 + $0x1c] sm:$0xf]
        %v1464 = vld [vmem:[%s15 + $0x20] sm:$0xf]
        %v1465 = vld [vmem:[%s15 + $0x24] sm:$0xf]
        %v1466 = vld [vmem:[%s15 + $0x28] sm:$0xf]
        %v1467 = vld [vmem:[%s15 + $0x2c] sm:$0xf]
        %v1468 = vld [vmem:[%s15 + $0x30] sm:$0xf]
        %v1469 = vld [vmem:[%s15 + $0x34] sm:$0xf]
        %v1470 = vld [vmem:[%s15 + $0x38] sm:$0xf]
        %v1471 = vld [vmem:[%s15 + $0x3c] sm:$0xf]
        %v1472 = vld [vmem:[%s16] sm:$0x1]
        %v1474 = vlaneseq
        %v1475 = vshrl.u32 %v1474, 7
        %v1476 = vsub.s32 0, %v1475
        %v1477 = vrot.slane %v1472, %v1476
        %v1495 = vunpack.c.l.b16 %v1456
        %v1496 = vunpack.c.l.b16 %v1457
        %v1497 = vunpack.c.l.b16 %v1458
        %v1498 = vunpack.c.l.b16 %v1459
        %v1499 = vunpack.c.l.b16 %v1460
        %v1500 = vunpack.c.l.b16 %v1461
        %v1501 = vunpack.c.l.b16 %v1462
        %v1502 = vunpack.c.l.b16 %v1463
        %v1503 = vunpack.c.l.b16 %v1464
        %v1504 = vunpack.c.l.b16 %v1465
        %v1505 = vunpack.c.l.b16 %v1466
        %v1506 = vunpack.c.l.b16 %v1467
        %v1507 = vunpack.c.l.b16 %v1468
        %v1508 = vunpack.c.l.b16 %v1469
        %v1509 = vunpack.c.l.b16 %v1470
        %v1510 = vunpack.c.l.b16 %v1471
        %v1511 = vpack.c.b16 %v1496, %v1495
        %v1512 = vpack.c.b16 %v1498, %v1497
        %v1513 = vpack.c.b16 %v1500, %v1499
        %v1514 = vpack.c.b16 %v1502, %v1501
        %v1515 = vpack.c.b16 %v1504, %v1503
        %v1516 = vpack.c.b16 %v1506, %v1505
        %v1517 = vpack.c.b16 %v1508, %v1507
        %v1518 = vpack.c.b16 %v1510, %v1509
        %1527 = vmatprep.subr.bf16.mxu0 0
        %1528 = vmatpush1.bf16.msra.mxu0 %v1518
        %1529 = vmatprep.subr.bf16.mxu0 0
        %1530 = vmatpush1.bf16.msra.mxu0 %v1517
        %1531 = vmatprep.subr.bf16.mxu0 0
        %1532 = vmatpush1.bf16.msra.mxu0 %v1516
        %1533 = vmatprep.subr.bf16.mxu0 0
        %1534 = vmatpush1.bf16.msra.mxu0 %v1515
        %1535 = vmatprep.subr.bf16.mxu0 0
        %1536 = vmatpush1.bf16.msra.mxu0 %v1514
        %1537 = vmatprep.subr.bf16.mxu0 0
        %1538 = vmatpush1.bf16.msra.mxu0 %v1513
        %1539 = vmatprep.subr.bf16.mxu0 0
        %1540 = vmatpush1.bf16.msra.mxu0 %v1512
        %1541 = vmatprep.subr.bf16.mxu0 0
        %1542 = vmatpush1.bf16.msra.mxu0 %v1511
        %1543 = vmatprep.subr.bf16.mxu0 0
        %1544 = vmatpush2.bf16.msra.mxu0 0
        %1545 = vmatprep.subr.bf16.mxu0 0
        %1546 = vmatpush2.bf16.msra.mxu0 0
        %1547 = vmatprep.subr.bf16.mxu0 0
        %1548 = vmatpush2.bf16.msra.mxu0 0
        %1549 = vmatprep.subr.bf16.mxu0 0
        %1550 = vmatpush2.bf16.msra.mxu0 0
        %1551 = vmatprep.subr.bf16.mxu0 0
        %1552 = vmatpush2.bf16.msra.mxu0 0
        %1553 = vmatprep.subr.bf16.mxu0 0
        %1554 = vmatpush2.bf16.msra.mxu0 0
        %1555 = vmatprep.subr.bf16.mxu0 0
        %1556 = vmatpush2.bf16.msra.mxu0 0
        %1557 = vmatprep.subr.bf16.mxu0 0
        %1558 = vmatpush2.bf16.msra.mxu0 0
        %1559 = vmatprep.mubr.bf16.mxu0 0
        %1560 = vmatmul.mubr.bf16.gmra.mxu0 %v1455
        %v1561 = vpop.f32.mrf.mxu0
        %v1562 = vadd.f32 %v1477, %v1561
        %v1563 = vpop.f32.mrf.mxu0
        %v1564 = vpop.f32.mrf.mxu0
        %v1565 = vpop.f32.mrf.mxu0
        %1566 = vdwg.mxu0
        %v1567 = vadd.f32 %v1329, %v1562
        %1568 = vst.msk [vmem:[%s554] sm:$0xff] %vm569, %v1567
        %s1569 = sand.u32 %s402, 1
        %s1570 = scalar_lea.sflag [#allocation4], %s1569
        %s1571 = sand.u32 %s402, 1
        %s1572 = smul.addr %s1571, 8
        %s1573 = scalar_lea.vmem [#allocation5], %s1572
        // Predicated region
        $region93: #{tpu_custom_call.1} parent=87 // pred_check
          %p1574 = pneg %p412
        $region94: #{tpu_custom_call.1} parent=87 // pred_check_branch
          %1576 = sbr.rel (%p1574) target = $region96
        $region95: #{tpu_custom_call.1} parent=87 // pred_region
          %s1578 = ssub.s32 128, 128
          %1579 = vsyncadd %s1570, %s1578
          %s1580 = smul.addr %s32, 128
          %s1581 = scalar_lea.hbm %s17, %s1580
          %s1583 = sshll.u32 %s1573, 4
          %s1584 = int_to_ptr.vmem [resolvable:$true] %s1583
          %1586 = dma.vmem_to_hbm [thread:$0]  %s1584, 128, %s1581, %s1570
        $region96: #{tpu_custom_call.1} parent=87 // pred_fallthru
          _
      $region88: #{tpu_custom_call.1} parent=5 // pred_fallthru
        _
      %p1587 = scmp.le.s32.totalorder 2, %s27
      // Predicated region
      $region97: #{tpu_custom_call.1} parent=5 // pred_check
        %p1588 = pneg %p1587
      $region98: #{tpu_custom_call.1} parent=5 // pred_check_branch
        %1590 = sbr.rel (%p1588) target = $region100
      $region99: #{tpu_custom_call.1} parent=5 // pred_region
        %s1591 = ssub.s32 %s27, 2
        // Predicated region
        $region101: #{tpu_custom_call.1} parent=99 // pred_check
          %p1592 = pneg %p418
        $region102: #{tpu_custom_call.1} parent=99 // pred_check_branch
          %1594 = sbr.rel (%p1592) target = $region104
        $region103: #{tpu_custom_call.1} parent=99 // pred_region
          %s1595 = sand.u32 %s403, 1
          %s1596 = scalar_lea.sflag [#allocation4], %s1595
          %s1597 = sand.u32 %s403, 1
          %s1598 = smul.addr %s1597, 8
          %s1599 = scalar_lea.vmem [#allocation5], %s1598
          %1600 = dma.done %s1596, 128
        $region104: #{tpu_custom_call.1} parent=99 // pred_fallthru
          _
      $region100: #{tpu_custom_call.1} parent=5 // pred_fallthru
        _
    $region6: #{tpu_custom_call.1} parent=1 // loop_footer
      %s31 = sadd.s32 1, %s27
    $region7: #{tpu_custom_call.1} parent=1 // loop_footer_branch
      %26 = sbr.rel target = $region3
    $region8: #{tpu_custom_call.1} parent=1 // loop_exit
      _
    %1601 = vsyncpa [#allocation3], 1
    %s1602 = scalar_lea.sflag [#allocation3], 1
    %1603 = vsyncpa %s1602, 1
    %1604 = vsyncpa [#allocation4], 1
    %s1605 = scalar_lea.sflag [#allocation4], 1
    %1606 = vsyncpa %s1605, 1

</llo_original>
